<compile_context>
chip_gen: v5e
topology: v5e:2x2
jax: 0.10.0
libtpu: 0.0.40
codegen_flags: <defaults>
</compile_context>

<pallas_src>
import functools

import jax
import jax.numpy as jnp
from jax.experimental import pallas as pl
from jax.experimental.pallas import tpu as pltpu


def _round_up(v, m):
    return (v + m - 1) // m * m


# -----------------------------------------------------------------------------
# Fused kernel: ConvTranspose2d(k=3, s=1, p=1) as 9 per-tap whole-plane MXU
# matmuls on a flattened spatial axis, + optional train-mode BatchNorm + ReLU.
# -----------------------------------------------------------------------------
def _convt3x3_bn_relu_kernel(x_ref, col_ref, w_ref, b_ref, g_ref, beta_ref,
                             o_ref, xf_ref, *, W, P0,
                             apply_bn, apply_relu, add_bias):
    # x_ref:   (N, HW, Cin)   f32   input, spatially flattened row-major (H, W)
    # col_ref: (HW, 1)        i32   flat-index % W  (output column id)
    # w_ref:   (3, 3, Cin, TC) bf16 flipped/transposed ConvT weight tile
    # b_ref, g_ref, beta_ref: (1, TC) f32   bias / BN gamma / BN beta
    # o_ref:   (N, HW, TC)    f32   output tile
    # xf_ref:  (N, L, Cin)    bf16  scratch: zero-padded flat copy of the input
    N, HW, Cin = x_ref.shape
    TC = o_ref.shape[-1]
    L = xf_ref.shape[1]

    # Stage a zero-padded bf16 copy of the input in VMEM (no HBM padding).
    # Rebuilt every grid step so it stays correct when the parallel Cout axis
    # is sharded across TensorCores; the copy is tiny next to the 9 matmuls.
    xf_ref[:, :P0, :] = jnp.zeros((N, P0, Cin), jnp.bfloat16)
    xf_ref[:, P0 + HW:, :] = jnp.zeros((N, L - P0 - HW, Cin), jnp.bfloat16)
    xf_ref[:, P0:P0 + HW, :] = x_ref[...].astype(jnp.bfloat16)

    col = col_ref[...]                       # (HW, 1) int32
    left_ok = col != 0                       # tap dw==0 wraps at output col 0
    right_ok = col != (W - 1)                # tap dw==2 wraps at output col W-1

    s = jnp.zeros((1, TC), jnp.float32)
    ss = jnp.zeros((1, TC), jnp.float32)
    for n in range(N):                       # small static batch
        acc = jnp.zeros((HW, TC), jnp.float32)
        for dh in range(3):                  # 9 taps -> 9 whole-plane matmuls
            for dw in range(3):
                m0 = P0 - W - 1 + dh * W + dw
                patch = xf_ref[n, m0:m0 + HW, :]            # (HW, Cin) bf16
                d = jnp.dot(patch, w_ref[dh, dw],
                            preferred_element_type=jnp.float32)
                if dw == 0:                  # mask row-wrap contributions
                    d = jnp.where(left_ok, d, 0.0)
                elif dw == 2:
                    d = jnp.where(right_ok, d, 0.0)
                acc = acc + d
        if add_bias:                         # only when no BN follows
            acc = acc + b_ref[...]
        o_ref[n] = acc                       # pre-BN value
        if apply_bn:
            s = s + jnp.sum(acc, axis=0, keepdims=True)
            ss = ss + jnp.sum(acc * acc, axis=0, keepdims=True)

    if apply_bn:
        # Train-mode BatchNorm: per-channel biased stats over N*H*W.
        cnt = jnp.float32(N * HW)
        mean = s / cnt
        var = jnp.maximum(ss / cnt - mean * mean, 0.0)   # clamp cancellation
        scale = g_ref[...] * jax.lax.rsqrt(var + 1e-5)
        shift = beta_ref[...] - mean * scale
        y = o_ref[...] * scale.reshape(1, 1, TC) + shift.reshape(1, 1, TC)
        if apply_relu:
            y = jnp.maximum(y, 0.0)
        o_ref[...] = y
    elif apply_relu:
        o_ref[...] = jnp.maximum(o_ref[...], 0.0)


def convt3x3_bn_relu(x_nhwc, w_hwio, bias, gamma, beta, *, apply_bn, apply_relu):
    """ConvTranspose2d(k=3, s=1, p=1) [+ BatchNorm2d(train) + ReLU], NHWC.

    w_hwio: prepared weight (3, 3, Cin, Cout) bf16 (flipped + transposed from
    the PyTorch ConvTranspose2d (Cin, Cout, 3, 3) layout at init time).
    """
    N, H, W, Cin = x_nhwc.shape
    Cout = w_hwio.shape[-1]
    HW = H * W
    TC = 128 if Cout % 128 == 0 else Cout          # Cout tile (parallel grid)
    P0 = _round_up(W + 1, 8)                       # aligned front pad
    L = P0 + HW + W + 1

    # Free HBM reshape: flatten spatial so the kernel sees M = H*W directly.
    xf = x_nhwc.reshape(N, HW, Cin)
    col = (jnp.arange(HW, dtype=jnp.int32) % W).reshape(HW, 1)

    # TODO(synk): whole-plane-in-VMEM strategy; add spatial (row) tiling with a
    # 2-row halo for large images on v7x's 64 MiB VMEM.
    kernel = functools.partial(_convt3x3_bn_relu_kernel, W=W, P0=P0,
                               apply_bn=apply_bn, apply_relu=apply_relu,
                               add_bias=not apply_bn)
    out = pl.pallas_call(
        kernel,
        out_shape=jax.ShapeDtypeStruct((N, HW, Cout), jnp.float32),
        grid=(Cout // TC,),
        in_specs=[
            pl.BlockSpec((N, HW, Cin), lambda c: (0, 0, 0)),
            pl.BlockSpec((HW, 1), lambda c: (0, 0)),
            pl.BlockSpec((3, 3, Cin, TC), lambda c: (0, 0, 0, c)),
            pl.BlockSpec((1, TC), lambda c: (0, c)),
            pl.BlockSpec((1, TC), lambda c: (0, c)),
            pl.BlockSpec((1, TC), lambda c: (0, c)),
        ],
        out_specs=pl.BlockSpec((N, HW, TC), lambda c: (0, 0, c)),
        scratch_shapes=[pltpu.VMEM((N, L, Cin), jnp.bfloat16)],
        compiler_params=pltpu.CompilerParams(
            dimension_semantics=("parallel",)),
    )(xf, col, w_hwio, bias.reshape(1, Cout), gamma.reshape(1, Cout),
      beta.reshape(1, Cout))
    return out.reshape(N, H, W, Cout)


# -----------------------------------------------------------------------------
# MaxUnpool2d(2, 2) as a Pallas kernel.  Output is produced as the lane-dense
# tensor (N, H, 2, W, 2*C), which is a free row-major reshape of (N, 2H, 2W, C).
# Exact for indices produced by MaxPool2d(2, 2) (each index inside its own 2x2
# window, as the Encoder always produces).
# TODO(synk): arbitrary out-of-window indices (general scatter) not supported.
# -----------------------------------------------------------------------------
def _max_unpool2x2_kernel(x_ref, i_ref, base_ref, o_ref, *, Wo):
    # x_ref, i_ref: (N, TH, W, C); base_ref: (1, TH, W, 1) = 2*(h*Wo + w)
    # o_ref: (N, TH, 2, W, 2*C)
    C = x_ref.shape[-1]
    x = x_ref[...]
    r = i_ref[...] - base_ref[...]           # in {0, 1, Wo, Wo+1} for valid idx
    is_bottom = r >= Wo
    is_right = jnp.bitwise_and(r, 1) == 1
    zero = jnp.zeros_like(x)
    for a in (0, 1):
        row_m = is_bottom if a == 1 else jnp.logical_not(is_bottom)
        for b in (0, 1):
            col_m = is_right if b == 1 else jnp.logical_not(is_right)
            o_ref[:, :, a, :, b * C:(b + 1) * C] = jnp.where(
                jnp.logical_and(row_m, col_m), x, zero)


def max_unpool2x2(x_nhwc, idx_nhwc):
    N, H, W, C = x_nhwc.shape
    Ho, Wo = 2 * H, 2 * W
    TH = 8 if H % 8 == 0 else H
    hh = jnp.arange(H, dtype=jnp.int32).reshape(1, H, 1, 1)
    ww = jnp.arange(W, dtype=jnp.int32).reshape(1, 1, W, 1)
    base = 2 * hh * Wo + 2 * ww                              # (1, H, W, 1)

    kernel = functools.partial(_max_unpool2x2_kernel, Wo=Wo)
    out = pl.pallas_call(
        kernel,
        out_shape=jax.ShapeDtypeStruct((N, H, 2, W, 2 * C), x_nhwc.dtype),
        grid=(H // TH,),
        in_specs=[
            pl.BlockSpec((N, TH, W, C), lambda h: (0, h, 0, 0)),
            pl.BlockSpec((N, TH, W, C), lambda h: (0, h, 0, 0)),
            pl.BlockSpec((1, TH, W, 1), lambda h: (0, h, 0, 0)),
        ],
        out_specs=pl.BlockSpec((N, TH, 2, W, 2 * C), lambda h: (0, h, 0, 0, 0)),
        compiler_params=pltpu.CompilerParams(
            dimension_semantics=("parallel",)),
    )(x_nhwc, idx_nhwc.astype(jnp.int32), base)
    return out.reshape(N, Ho, Wo, C)


# -----------------------------------------------------------------------------
# Decoder definition (inverse of the VGG16-bn encoder with features[43] removed)
# -----------------------------------------------------------------------------
_DECODER_PLAN = [
    # (Cin, Cout, has_bn_relu)  — None marks a MaxUnpool2d
    (512, 512, True), (512, 512, True), (512, 512, True),
    None,                                   # unpool (uses pool4 indices)
    (512, 512, True), (512, 512, True), (512, 256, True),
    None,                                   # unpool (pool3)
    (256, 256, True), (256, 256, True), (256, 128, True),
    None,                                   # unpool (pool2)
    (128, 128, True), (128, 64, True),
    None,                                   # unpool (pool1)
    (64, 64, True), (64, 3, False),         # final CT: BN/ReLU stripped ([:-2])
]


def init_decoder_params(key):
    """Random parameters in PyTorch ConvTranspose2d layout: w = (Cin, Cout, 3, 3)."""
    params = []
    for spec in _DECODER_PLAN:
        if spec is None:
            continue
        cin, cout, _ = spec
        key, kw, kb, kg, kbt = jax.random.split(key, 5)
        params.append(dict(
            w=jax.random.normal(kw, (cin, cout, 3, 3), jnp.float32) * 0.05,
            b=jax.random.normal(kb, (cout,), jnp.float32) * 0.05,
            gamma=1.0 + 0.1 * jax.random.normal(kg, (cout,), jnp.float32),
            beta=0.1 * jax.random.normal(kbt, (cout,), jnp.float32),
        ))
    return params


def prepare_decoder_params(params):
    """One-time transform: flip + transpose ConvT weights to (3,3,Cin,Cout) HWIO
    bf16, and pad the final layer's 3 output channels to a full 128-lane tile."""
    prepared = []
    n_layers = len(params)
    for li, p in enumerate(params):
        w = jnp.flip(jnp.transpose(p["w"], (2, 3, 0, 1)), axis=(0, 1))
        b, g, bt = p["b"], p["gamma"], p["beta"]
        cout = w.shape[-1]
        if li == n_layers - 1 and cout < 128:     # lane-pad final Cout=3 layer
            pad = 128 - cout
            w = jnp.pad(w, ((0, 0), (0, 0), (0, 0), (0, pad)))
            b = jnp.pad(b, (0, pad))
            g = jnp.pad(g, (0, pad), constant_values=1.0)
            bt = jnp.pad(bt, (0, pad))
        prepared.append(dict(w=w.astype(jnp.bfloat16),
                             b=b.astype(jnp.float32),
                             gamma=g.astype(jnp.float32),
                             beta=bt.astype(jnp.float32)))
    return prepared


def decoder_forward(x_nchw, pool_indices_nchw, prepared_params):
    """Pallas equivalent of Decoder.forward(x, pool_indices).

    x_nchw:            (N, 512, H, W) float32
    pool_indices_nchw: list of 4 NCHW int32 index tensors in ENCODER order
                       (pool1..pool4); reversed internally like the module.
    Returns NCHW output (N, 3, 16H, 16W).
    """
    x = jnp.transpose(x_nchw, (0, 2, 3, 1)).astype(jnp.float32)   # -> NHWC
    rev_idx = list(reversed(pool_indices_nchw))
    k_pool = 0
    p_i = 0
    for spec in _DECODER_PLAN:
        if spec is None:
            idx = jnp.transpose(rev_idx[k_pool], (0, 2, 3, 1))    # -> NHWC
            x = max_unpool2x2(x, idx)
            k_pool += 1
        else:
            _, cout, has_bn_relu = spec
            p = prepared_params[p_i]
            p_i += 1
            x = convt3x3_bn_relu(x, p["w"], p["b"], p["gamma"], p["beta"],
                                 apply_bn=has_bn_relu, apply_relu=has_bn_relu)
            if x.shape[-1] != cout:            # final layer was lane-padded
                x = x[..., :cout]
    return jnp.transpose(x, (0, 3, 1, 2))                          # -> NCHW


# -----------------------------------------------------------------------------
# Demo / smoke test
# -----------------------------------------------------------------------------
def _make_pool_indices(key, shape):
    # shape = (N, C, Hp, Wp); produce flat indices into the (2Hp x 2Wp) output
    # plane, restricted to each 2x2 window (as MaxPool2d(2,2) would produce).
    N, C, Hp, Wp = shape
    ka, kb = jax.random.split(key)
    a = jax.random.randint(ka, shape, 0, 2)
    b = jax.random.randint(kb, shape, 0, 2)
    i = jnp.arange(Hp)[None, None, :, None]
    j = jnp.arange(Wp)[None, None, None, :]
    return ((2 * i + a) * (2 * Wp) + (2 * j + b)).astype(jnp.int32)


if __name__ == "__main__":
    key = jax.random.PRNGKey(0)
    k_params, k_x, k_i1, k_i2, k_i3, k_i4 = jax.random.split(key, 6)

    N = 2
    S = 32                                  # encoder input size; code spatial = S/16
    x = jax.random.normal(k_x, (N, 512, S // 16, S // 16), jnp.float32)

    # pool_indices in encoder order: pool1 .. pool4 (NCHW flat-plane indices)
    pool_indices = [
        _make_pool_indices(k_i1, (N, 64, S // 2, S // 2)),
        _make_pool_indices(k_i2, (N, 128, S // 4, S // 4)),
        _make_pool_indices(k_i3, (N, 256, S // 8, S // 8)),
        _make_pool_indices(k_i4, (N, 512, S // 16, S // 16)),
    ]

    params = prepare_decoder_params(init_decoder_params(k_params))
    out = decoder_forward(x, pool_indices, params)
    out = jax.block_until_ready(out)

    assert out.shape == (N, 3, S, S), out.shape
    assert bool(jnp.all(jnp.isfinite(out)))
    print("KERNEL_OK")
</pallas_src>

<mosaic_0001>
module attributes {stable_mosaic.version = 11 : i64} {
  func.func @_convt3x3_bn_relu_kernel(%arg0: i32, %arg1: memref<2x4x512xf32, #tpu.memory_space<vmem>>, %arg2: memref<4x1xi32, #tpu.memory_space<vmem>>, %arg3: memref<3x3x512x128xbf16, #tpu.memory_space<vmem>>, %arg4: memref<1x128xf32, #tpu.memory_space<vmem>>, %arg5: memref<1x128xf32, #tpu.memory_space<vmem>>, %arg6: memref<1x128xf32, #tpu.memory_space<vmem>>, %arg7: memref<2x4x128xf32, #tpu.memory_space<vmem>>, %arg8: memref<2x15x512xbf16, #tpu.memory_space<vmem>>) attributes {dimension_semantics = [#tpu.dimension_semantics<parallel>], iteration_bounds = array<i64: 4>, scalar_prefetch = 0 : i64, scratch_operands = 1 : i64, tpu.core_type = #tpu.core_type<tc>, window_params = [{pipeline_mode = #tpu.pipeline_mode<synchronous>, transform_indices = @transform_0, window_bounds = array<i64: 2, 4, 512>}, {pipeline_mode = #tpu.pipeline_mode<synchronous>, transform_indices = @transform_1, window_bounds = array<i64: 4, 1>}, {transform_indices = @transform_2, window_bounds = array<i64: 3, 3, 512, 128>}, {transform_indices = @transform_3, window_bounds = array<i64: 1, 128>}, {transform_indices = @transform_4, window_bounds = array<i64: 1, 128>}, {transform_indices = @transform_5, window_bounds = array<i64: 1, 128>}, {transform_indices = @transform_6, window_bounds = array<i64: 2, 4, 128>}]} {
    %cst = arith.constant 0.000000e+00 : bf16
    %0 = vector.broadcast %cst : bf16 to vector<2x8x512xbf16>
    %c0 = arith.constant 0 : index
    %c0_0 = arith.constant 0 : index
    %c0_1 = arith.constant 0 : index
    %1 = vector.load %arg8[%c0, %c0_0, %c0_1] : memref<2x15x512xbf16, #tpu.memory_space<vmem>>, vector<2x8x512xbf16>
    tpu.vector_store %arg8[%c0, %c0_0, %c0_1], %0 {strides = array<i32>} : memref<2x15x512xbf16, #tpu.memory_space<vmem>>, vector<2x8x512xbf16>,
    %cst_2 = arith.constant 0.000000e+00 : bf16
    %2 = vector.broadcast %cst_2 : bf16 to vector<2x3x512xbf16>
    %c0_3 = arith.constant 0 : index
    %c12 = arith.constant 12 : index
    %c0_4 = arith.constant 0 : index
    %3 = vector.load %arg8[%c0_3, %c12, %c0_4] : memref<2x15x512xbf16, #tpu.memory_space<vmem>>, vector<2x3x512xbf16>
    tpu.vector_store %arg8[%c0_3, %c12, %c0_4], %2 {strides = array<i32>} : memref<2x15x512xbf16, #tpu.memory_space<vmem>>, vector<2x3x512xbf16>,
    %c0_5 = arith.constant 0 : index
    %c0_6 = arith.constant 0 : index
    %c0_7 = arith.constant 0 : index
    %4 = vector.load %arg1[%c0_5, %c0_6, %c0_7] : memref<2x4x512xf32, #tpu.memory_space<vmem>>, vector<2x4x512xf32>
    %5 = arith.truncf %4 : vector<2x4x512xf32> to vector<2x4x512xbf16>
    %c0_8 = arith.constant 0 : index
    %c8 = arith.constant 8 : index
    %c0_9 = arith.constant 0 : index
    %6 = vector.load %arg8[%c0_8, %c8, %c0_9] : memref<2x15x512xbf16, #tpu.memory_space<vmem>>, vector<2x4x512xbf16>
    tpu.vector_store %arg8[%c0_8, %c8, %c0_9], %5 {strides = array<i32>} : memref<2x15x512xbf16, #tpu.memory_space<vmem>>, vector<2x4x512xbf16>,
    %c0_10 = arith.constant 0 : index
    %c0_11 = arith.constant 0 : index
    %7 = vector.load %arg2[%c0_10, %c0_11] : memref<4x1xi32, #tpu.memory_space<vmem>>, vector<4x1xi32>
    %c0_i32 = arith.constant 0 : i32
    %8 = vector.broadcast %c0_i32 : i32 to vector<4x1xi32>
    %9 = arith.cmpi ne, %7, %8 : vector<4x1xi32>
    %c1_i32 = arith.constant 1 : i32
    %10 = vector.broadcast %c1_i32 : i32 to vector<4x1xi32>
    %11 = arith.cmpi ne, %7, %10 : vector<4x1xi32>
    %cst_12 = arith.constant 0.000000e+00 : f32
    %12 = vector.broadcast %cst_12 : f32 to vector<1x128xf32>
    %cst_13 = arith.constant 0.000000e+00 : f32
    %13 = vector.broadcast %cst_13 : f32 to vector<1x128xf32>
    %cst_14 = arith.constant 0.000000e+00 : f32
    %14 = vector.broadcast %cst_14 : f32 to vector<4x128xf32>
    %c0_15 = arith.constant 0 : index
    %c5 = arith.constant 5 : index
    %c0_16 = arith.constant 0 : index
    %15 = vector.load %arg8[%c0_15, %c5, %c0_16] : memref<2x15x512xbf16, #tpu.memory_space<vmem>>, vector<1x4x512xbf16>
    %16 = vector.shape_cast %15 : vector<1x4x512xbf16> to vector<4x512xbf16>
    %c0_17 = arith.constant 0 : index
    %c0_18 = arith.constant 0 : index
    %c0_19 = arith.constant 0 : index
    %c0_20 = arith.constant 0 : index
    %17 = vector.load %arg3[%c0_17, %c0_18, %c0_19, %c0_20] : memref<3x3x512x128xbf16, #tpu.memory_space<vmem>>, vector<1x1x512x128xbf16>
    %18 = vector.shape_cast %17 : vector<1x1x512x128xbf16> to vector<512x128xbf16>
    %cst_21 = arith.constant dense<0.000000e+00> : vector<4x128xf32>
    %19 = tpu.matmul %16, %18, %cst_21 {dimension_numbers = #tpu.dot_dimension_numbers<[1], [0], [0], [1], [0, 0, 1, 1], [], []>} : vector<4x512xbf16>, vector<512x128xbf16>, vector<4x128xf32> -> vector<4x128xf32>
    %cst_22 = arith.constant 0.000000e+00 : f32
    %20 = vector.shape_cast %9 : vector<4x1xi1> to vector<4x1xi1>
    %21 = vector.broadcast %20 : vector<4x1xi1> to vector<4x128xi1>
    %22 = vector.broadcast %cst_22 : f32 to vector<4x128xf32>
    %23 = arith.select %21, %19, %22 : vector<4x128xi1>, vector<4x128xf32>
    %24 = arith.addf %14, %23 : vector<4x128xf32>
    %c0_23 = arith.constant 0 : index
    %c6 = arith.constant 6 : index
    %c0_24 = arith.constant 0 : index
    %25 = vector.load %arg8[%c0_23, %c6, %c0_24] : memref<2x15x512xbf16, #tpu.memory_space<vmem>>, vector<1x4x512xbf16>
    %26 = vector.shape_cast %25 : vector<1x4x512xbf16> to vector<4x512xbf16>
    %c0_25 = arith.constant 0 : index
    %c1 = arith.constant 1 : index
    %c0_26 = arith.constant 0 : index
    %c0_27 = arith.constant 0 : index
    %27 = vector.load %arg3[%c0_25, %c1, %c0_26, %c0_27] : memref<3x3x512x128xbf16, #tpu.memory_space<vmem>>, vector<1x1x512x128xbf16>
    %28 = vector.shape_cast %27 : vector<1x1x512x128xbf16> to vector<512x128xbf16>
    %cst_28 = arith.constant dense<0.000000e+00> : vector<4x128xf32>
    %29 = tpu.matmul %26, %28, %cst_28 {dimension_numbers = #tpu.dot_dimension_numbers<[1], [0], [0], [1], [0, 0, 1, 1], [], []>} : vector<4x512xbf16>, vector<512x128xbf16>, vector<4x128xf32> -> vector<4x128xf32>
    %30 = arith.addf %24, %29 : vector<4x128xf32>
    %c0_29 = arith.constant 0 : index
    %c7 = arith.constant 7 : index
    %c0_30 = arith.constant 0 : index
    %31 = vector.load %arg8[%c0_29, %c7, %c0_30] : memref<2x15x512xbf16, #tpu.memory_space<vmem>>, vector<1x4x512xbf16>
    %32 = vector.shape_cast %31 : vector<1x4x512xbf16> to vector<4x512xbf16>
    %c0_31 = arith.constant 0 : index
    %c2 = arith.constant 2 : index
    %c0_32 = arith.constant 0 : index
    %c0_33 = arith.constant 0 : index
    %33 = vector.load %arg3[%c0_31, %c2, %c0_32, %c0_33] : memref<3x3x512x128xbf16, #tpu.memory_space<vmem>>, vector<1x1x512x128xbf16>
    %34 = vector.shape_cast %33 : vector<1x1x512x128xbf16> to vector<512x128xbf16>
    %cst_34 = arith.constant dense<0.000000e+00> : vector<4x128xf32>
    %35 = tpu.matmul %32, %34, %cst_34 {dimension_numbers = #tpu.dot_dimension_numbers<[1], [0], [0], [1], [0, 0, 1, 1], [], []>} : vector<4x512xbf16>, vector<512x128xbf16>, vector<4x128xf32> -> vector<4x128xf32>
    %cst_35 = arith.constant 0.000000e+00 : f32
    %36 = vector.shape_cast %11 : vector<4x1xi1> to vector<4x1xi1>
    %37 = vector.broadcast %36 : vector<4x1xi1> to vector<4x128xi1>
    %38 = vector.broadcast %cst_35 : f32 to vector<4x128xf32>
    %39 = arith.select %37, %35, %38 : vector<4x128xi1>, vector<4x128xf32>
    %40 = arith.addf %30, %39 : vector<4x128xf32>
    %c0_36 = arith.constant 0 : index
    %c7_37 = arith.constant 7 : index
    %c0_38 = arith.constant 0 : index
    %41 = vector.load %arg8[%c0_36, %c7_37, %c0_38] : memref<2x15x512xbf16, #tpu.memory_space<vmem>>, vector<1x4x512xbf16>
    %42 = vector.shape_cast %41 : vector<1x4x512xbf16> to vector<4x512xbf16>
    %c1_39 = arith.constant 1 : index
    %c0_40 = arith.constant 0 : index
    %c0_41 = arith.constant 0 : index
    %c0_42 = arith.constant 0 : index
    %43 = vector.load %arg3[%c1_39, %c0_40, %c0_41, %c0_42] : memref<3x3x512x128xbf16, #tpu.memory_space<vmem>>, vector<1x1x512x128xbf16>
    %44 = vector.shape_cast %43 : vector<1x1x512x128xbf16> to vector<512x128xbf16>
    %cst_43 = arith.constant dense<0.000000e+00> : vector<4x128xf32>
    %45 = tpu.matmul %42, %44, %cst_43 {dimension_numbers = #tpu.dot_dimension_numbers<[1], [0], [0], [1], [0, 0, 1, 1], [], []>} : vector<4x512xbf16>, vector<512x128xbf16>, vector<4x128xf32> -> vector<4x128xf32>
    %cst_44 = arith.constant 0.000000e+00 : f32
    %46 = vector.shape_cast %9 : vector<4x1xi1> to vector<4x1xi1>
    %47 = vector.broadcast %46 : vector<4x1xi1> to vector<4x128xi1>
    %48 = vector.broadcast %cst_44 : f32 to vector<4x128xf32>
    %49 = arith.select %47, %45, %48 : vector<4x128xi1>, vector<4x128xf32>
    %50 = arith.addf %40, %49 : vector<4x128xf32>
    %c0_45 = arith.constant 0 : index
    %c8_46 = arith.constant 8 : index
    %c0_47 = arith.constant 0 : index
    %51 = vector.load %arg8[%c0_45, %c8_46, %c0_47] : memref<2x15x512xbf16, #tpu.memory_space<vmem>>, vector<1x4x512xbf16>
    %52 = vector.shape_cast %51 : vector<1x4x512xbf16> to vector<4x512xbf16>
    %c1_48 = arith.constant 1 : index
    %c1_49 = arith.constant 1 : index
    %c0_50 = arith.constant 0 : index
    %c0_51 = arith.constant 0 : index
    %53 = vector.load %arg3[%c1_48, %c1_49, %c0_50, %c0_51] : memref<3x3x512x128xbf16, #tpu.memory_space<vmem>>, vector<1x1x512x128xbf16>
    %54 = vector.shape_cast %53 : vector<1x1x512x128xbf16> to vector<512x128xbf16>
    %cst_52 = arith.constant dense<0.000000e+00> : vector<4x128xf32>
    %55 = tpu.matmul %52, %54, %cst_52 {dimension_numbers = #tpu.dot_dimension_numbers<[1], [0], [0], [1], [0, 0, 1, 1], [], []>} : vector<4x512xbf16>, vector<512x128xbf16>, vector<4x128xf32> -> vector<4x128xf32>
    %56 = arith.addf %50, %55 : vector<4x128xf32>
    %c0_53 = arith.constant 0 : index
    %c9 = arith.constant 9 : index
    %c0_54 = arith.constant 0 : index
    %57 = vector.load %arg8[%c0_53, %c9, %c0_54] : memref<2x15x512xbf16, #tpu.memory_space<vmem>>, vector<1x4x512xbf16>
    %58 = vector.shape_cast %57 : vector<1x4x512xbf16> to vector<4x512xbf16>
    %c1_55 = arith.constant 1 : index
    %c2_56 = arith.constant 2 : index
    %c0_57 = arith.constant 0 : index
    %c0_58 = arith.constant 0 : index
    %59 = vector.load %arg3[%c1_55, %c2_56, %c0_57, %c0_58] : memref<3x3x512x128xbf16, #tpu.memory_space<vmem>>, vector<1x1x512x128xbf16>
    %60 = vector.shape_cast %59 : vector<1x1x512x128xbf16> to vector<512x128xbf16>
    %cst_59 = arith.constant dense<0.000000e+00> : vector<4x128xf32>
    %61 = tpu.matmul %58, %60, %cst_59 {dimension_numbers = #tpu.dot_dimension_numbers<[1], [0], [0], [1], [0, 0, 1, 1], [], []>} : vector<4x512xbf16>, vector<512x128xbf16>, vector<4x128xf32> -> vector<4x128xf32>
    %cst_60 = arith.constant 0.000000e+00 : f32
    %62 = vector.shape_cast %11 : vector<4x1xi1> to vector<4x1xi1>
    %63 = vector.broadcast %62 : vector<4x1xi1> to vector<4x128xi1>
    %64 = vector.broadcast %cst_60 : f32 to vector<4x128xf32>
    %65 = arith.select %63, %61, %64 : vector<4x128xi1>, vector<4x128xf32>
    %66 = arith.addf %56, %65 : vector<4x128xf32>
    %c0_61 = arith.constant 0 : index
    %c9_62 = arith.constant 9 : index
    %c0_63 = arith.constant 0 : index
    %67 = vector.load %arg8[%c0_61, %c9_62, %c0_63] : memref<2x15x512xbf16, #tpu.memory_space<vmem>>, vector<1x4x512xbf16>
    %68 = vector.shape_cast %67 : vector<1x4x512xbf16> to vector<4x512xbf16>
    %c2_64 = arith.constant 2 : index
    %c0_65 = arith.constant 0 : index
    %c0_66 = arith.constant 0 : index
    %c0_67 = arith.constant 0 : index
    %69 = vector.load %arg3[%c2_64, %c0_65, %c0_66, %c0_67] : memref<3x3x512x128xbf16, #tpu.memory_space<vmem>>, vector<1x1x512x128xbf16>
    %70 = vector.shape_cast %69 : vector<1x1x512x128xbf16> to vector<512x128xbf16>
    %cst_68 = arith.constant dense<0.000000e+00> : vector<4x128xf32>
    %71 = tpu.matmul %68, %70, %cst_68 {dimension_numbers = #tpu.dot_dimension_numbers<[1], [0], [0], [1], [0, 0, 1, 1], [], []>} : vector<4x512xbf16>, vector<512x128xbf16>, vector<4x128xf32> -> vector<4x128xf32>
    %cst_69 = arith.constant 0.000000e+00 : f32
    %72 = vector.shape_cast %9 : vector<4x1xi1> to vector<4x1xi1>
    %73 = vector.broadcast %72 : vector<4x1xi1> to vector<4x128xi1>
    %74 = vector.broadcast %cst_69 : f32 to vector<4x128xf32>
    %75 = arith.select %73, %71, %74 : vector<4x128xi1>, vector<4x128xf32>
    %76 = arith.addf %66, %75 : vector<4x128xf32>
    %c0_70 = arith.constant 0 : index
    %c10 = arith.constant 10 : index
    %c0_71 = arith.constant 0 : index
    %77 = vector.load %arg8[%c0_70, %c10, %c0_71] : memref<2x15x512xbf16, #tpu.memory_space<vmem>>, vector<1x4x512xbf16>
    %78 = vector.shape_cast %77 : vector<1x4x512xbf16> to vector<4x512xbf16>
    %c2_72 = arith.constant 2 : index
    %c1_73 = arith.constant 1 : index
    %c0_74 = arith.constant 0 : index
    %c0_75 = arith.constant 0 : index
    %79 = vector.load %arg3[%c2_72, %c1_73, %c0_74, %c0_75] : memref<3x3x512x128xbf16, #tpu.memory_space<vmem>>, vector<1x1x512x128xbf16>
    %80 = vector.shape_cast %79 : vector<1x1x512x128xbf16> to vector<512x128xbf16>
    %cst_76 = arith.constant dense<0.000000e+00> : vector<4x128xf32>
    %81 = tpu.matmul %78, %80, %cst_76 {dimension_numbers = #tpu.dot_dimension_numbers<[1], [0], [0], [1], [0, 0, 1, 1], [], []>} : vector<4x512xbf16>, vector<512x128xbf16>, vector<4x128xf32> -> vector<4x128xf32>
    %82 = arith.addf %76, %81 : vector<4x128xf32>
    %c0_77 = arith.constant 0 : index
    %c11 = arith.constant 11 : index
    %c0_78 = arith.constant 0 : index
    %83 = vector.load %arg8[%c0_77, %c11, %c0_78] : memref<2x15x512xbf16, #tpu.memory_space<vmem>>, vector<1x4x512xbf16>
    %84 = vector.shape_cast %83 : vector<1x4x512xbf16> to vector<4x512xbf16>
    %c2_79 = arith.constant 2 : index
    %c2_80 = arith.constant 2 : index
    %c0_81 = arith.constant 0 : index
    %c0_82 = arith.constant 0 : index
    %85 = vector.load %arg3[%c2_79, %c2_80, %c0_81, %c0_82] : memref<3x3x512x128xbf16, #tpu.memory_space<vmem>>, vector<1x1x512x128xbf16>
    %86 = vector.shape_cast %85 : vector<1x1x512x128xbf16> to vector<512x128xbf16>
    %cst_83 = arith.constant dense<0.000000e+00> : vector<4x128xf32>
    %87 = tpu.matmul %84, %86, %cst_83 {dimension_numbers = #tpu.dot_dimension_numbers<[1], [0], [0], [1], [0, 0, 1, 1], [], []>} : vector<4x512xbf16>, vector<512x128xbf16>, vector<4x128xf32> -> vector<4x128xf32>
    %cst_84 = arith.constant 0.000000e+00 : f32
    %88 = vector.shape_cast %11 : vector<4x1xi1> to vector<4x1xi1>
    %89 = vector.broadcast %88 : vector<4x1xi1> to vector<4x128xi1>
    %90 = vector.broadcast %cst_84 : f32 to vector<4x128xf32>
    %91 = arith.select %89, %87, %90 : vector<4x128xi1>, vector<4x128xf32>
    %92 = arith.addf %82, %91 : vector<4x128xf32>
    %c0_85 = arith.constant 0 : index
    %c0_86 = arith.constant 0 : index
    %c0_87 = arith.constant 0 : index
    %93 = vector.load %arg7[%c0_85, %c0_86, %c0_87] : memref<2x4x128xf32, #tpu.memory_space<vmem>>, vector<1x4x128xf32>
    %94 = vector.shape_cast %93 : vector<1x4x128xf32> to vector<4x128xf32>
    %95 = vector.shape_cast %92 : vector<4x128xf32> to vector<1x4x128xf32>
    tpu.vector_store %arg7[%c0_85, %c0_86, %c0_87], %95 {strides = array<i32>} : memref<2x4x128xf32, #tpu.memory_space<vmem>>, vector<1x4x128xf32>,
    %cst_88 = arith.constant dense<0.000000e+00> : vector<128xf32>
    %96 = vector.multi_reduction <add>, %92, %cst_88 [0] : vector<4x128xf32> to vector<128xf32>
    %97 = vector.shape_cast %96 : vector<128xf32> to vector<1x128xf32>
    %98 = arith.addf %12, %97 : vector<1x128xf32>
    %99 = arith.mulf %92, %92 : vector<4x128xf32>
    %cst_89 = arith.constant dense<0.000000e+00> : vector<128xf32>
    %100 = vector.multi_reduction <add>, %99, %cst_89 [0] : vector<4x128xf32> to vector<128xf32>
    %101 = vector.shape_cast %100 : vector<128xf32> to vector<1x128xf32>
    %102 = arith.addf %13, %101 : vector<1x128xf32>
    %cst_90 = arith.constant 0.000000e+00 : f32
    %103 = vector.broadcast %cst_90 : f32 to vector<4x128xf32>
    %c1_91 = arith.constant 1 : index
    %c5_92 = arith.constant 5 : index
    %c0_93 = arith.constant 0 : index
    %104 = vector.load %arg8[%c1_91, %c5_92, %c0_93] : memref<2x15x512xbf16, #tpu.memory_space<vmem>>, vector<1x4x512xbf16>
    %105 = vector.shape_cast %104 : vector<1x4x512xbf16> to vector<4x512xbf16>
    %c0_94 = arith.constant 0 : index
    %c0_95 = arith.constant 0 : index
    %c0_96 = arith.constant 0 : index
    %c0_97 = arith.constant 0 : index
    %106 = vector.load %arg3[%c0_94, %c0_95, %c0_96, %c0_97] : memref<3x3x512x128xbf16, #tpu.memory_space<vmem>>, vector<1x1x512x128xbf16>
    %107 = vector.shape_cast %106 : vector<1x1x512x128xbf16> to vector<512x128xbf16>
    %cst_98 = arith.constant dense<0.000000e+00> : vector<4x128xf32>
    %108 = tpu.matmul %105, %107, %cst_98 {dimension_numbers = #tpu.dot_dimension_numbers<[1], [0], [0], [1], [0, 0, 1, 1], [], []>} : vector<4x512xbf16>, vector<512x128xbf16>, vector<4x128xf32> -> vector<4x128xf32>
    %cst_99 = arith.constant 0.000000e+00 : f32
    %109 = vector.shape_cast %9 : vector<4x1xi1> to vector<4x1xi1>
    %110 = vector.broadcast %109 : vector<4x1xi1> to vector<4x128xi1>
    %111 = vector.broadcast %cst_99 : f32 to vector<4x128xf32>
    %112 = arith.select %110, %108, %111 : vector<4x128xi1>, vector<4x128xf32>
    %113 = arith.addf %103, %112 : vector<4x128xf32>
    %c1_100 = arith.constant 1 : index
    %c6_101 = arith.constant 6 : index
    %c0_102 = arith.constant 0 : index
    %114 = vector.load %arg8[%c1_100, %c6_101, %c0_102] : memref<2x15x512xbf16, #tpu.memory_space<vmem>>, vector<1x4x512xbf16>
    %115 = vector.shape_cast %114 : vector<1x4x512xbf16> to vector<4x512xbf16>
    %c0_103 = arith.constant 0 : index
    %c1_104 = arith.constant 1 : index
    %c0_105 = arith.constant 0 : index
    %c0_106 = arith.constant 0 : index
    %116 = vector.load %arg3[%c0_103, %c1_104, %c0_105, %c0_106] : memref<3x3x512x128xbf16, #tpu.memory_space<vmem>>, vector<1x1x512x128xbf16>
    %117 = vector.shape_cast %116 : vector<1x1x512x128xbf16> to vector<512x128xbf16>
    %cst_107 = arith.constant dense<0.000000e+00> : vector<4x128xf32>
    %118 = tpu.matmul %115, %117, %cst_107 {dimension_numbers = #tpu.dot_dimension_numbers<[1], [0], [0], [1], [0, 0, 1, 1], [], []>} : vector<4x512xbf16>, vector<512x128xbf16>, vector<4x128xf32> -> vector<4x128xf32>
    %119 = arith.addf %113, %118 : vector<4x128xf32>
    %c1_108 = arith.constant 1 : index
    %c7_109 = arith.constant 7 : index
    %c0_110 = arith.constant 0 : index
    %120 = vector.load %arg8[%c1_108, %c7_109, %c0_110] : memref<2x15x512xbf16, #tpu.memory_space<vmem>>, vector<1x4x512xbf16>
    %121 = vector.shape_cast %120 : vector<1x4x512xbf16> to vector<4x512xbf16>
    %c0_111 = arith.constant 0 : index
    %c2_112 = arith.constant 2 : index
    %c0_113 = arith.constant 0 : index
    %c0_114 = arith.constant 0 : index
    %122 = vector.load %arg3[%c0_111, %c2_112, %c0_113, %c0_114] : memref<3x3x512x128xbf16, #tpu.memory_space<vmem>>, vector<1x1x512x128xbf16>
    %123 = vector.shape_cast %122 : vector<1x1x512x128xbf16> to vector<512x128xbf16>
    %cst_115 = arith.constant dense<0.000000e+00> : vector<4x128xf32>
    %124 = tpu.matmul %121, %123, %cst_115 {dimension_numbers = #tpu.dot_dimension_numbers<[1], [0], [0], [1], [0, 0, 1, 1], [], []>} : vector<4x512xbf16>, vector<512x128xbf16>, vector<4x128xf32> -> vector<4x128xf32>
    %cst_116 = arith.constant 0.000000e+00 : f32
    %125 = vector.shape_cast %11 : vector<4x1xi1> to vector<4x1xi1>
    %126 = vector.broadcast %125 : vector<4x1xi1> to vector<4x128xi1>
    %127 = vector.broadcast %cst_116 : f32 to vector<4x128xf32>
    %128 = arith.select %126, %124, %127 : vector<4x128xi1>, vector<4x128xf32>
    %129 = arith.addf %119, %128 : vector<4x128xf32>
    %c1_117 = arith.constant 1 : index
    %c7_118 = arith.constant 7 : index
    %c0_119 = arith.constant 0 : index
    %130 = vector.load %arg8[%c1_117, %c7_118, %c0_119] : memref<2x15x512xbf16, #tpu.memory_space<vmem>>, vector<1x4x512xbf16>
    %131 = vector.shape_cast %130 : vector<1x4x512xbf16> to vector<4x512xbf16>
    %c1_120 = arith.constant 1 : index
    %c0_121 = arith.constant 0 : index
    %c0_122 = arith.constant 0 : index
    %c0_123 = arith.constant 0 : index
    %132 = vector.load %arg3[%c1_120, %c0_121, %c0_122, %c0_123] : memref<3x3x512x128xbf16, #tpu.memory_space<vmem>>, vector<1x1x512x128xbf16>
    %133 = vector.shape_cast %132 : vector<1x1x512x128xbf16> to vector<512x128xbf16>
    %cst_124 = arith.constant dense<0.000000e+00> : vector<4x128xf32>
    %134 = tpu.matmul %131, %133, %cst_124 {dimension_numbers = #tpu.dot_dimension_numbers<[1], [0], [0], [1], [0, 0, 1, 1], [], []>} : vector<4x512xbf16>, vector<512x128xbf16>, vector<4x128xf32> -> vector<4x128xf32>
    %cst_125 = arith.constant 0.000000e+00 : f32
    %135 = vector.shape_cast %9 : vector<4x1xi1> to vector<4x1xi1>
    %136 = vector.broadcast %135 : vector<4x1xi1> to vector<4x128xi1>
    %137 = vector.broadcast %cst_125 : f32 to vector<4x128xf32>
    %138 = arith.select %136, %134, %137 : vector<4x128xi1>, vector<4x128xf32>
    %139 = arith.addf %129, %138 : vector<4x128xf32>
    %c1_126 = arith.constant 1 : index
    %c8_127 = arith.constant 8 : index
    %c0_128 = arith.constant 0 : index
    %140 = vector.load %arg8[%c1_126, %c8_127, %c0_128] : memref<2x15x512xbf16, #tpu.memory_space<vmem>>, vector<1x4x512xbf16>
    %141 = vector.shape_cast %140 : vector<1x4x512xbf16> to vector<4x512xbf16>
    %c1_129 = arith.constant 1 : index
    %c1_130 = arith.constant 1 : index
    %c0_131 = arith.constant 0 : index
    %c0_132 = arith.constant 0 : index
    %142 = vector.load %arg3[%c1_129, %c1_130, %c0_131, %c0_132] : memref<3x3x512x128xbf16, #tpu.memory_space<vmem>>, vector<1x1x512x128xbf16>
    %143 = vector.shape_cast %142 : vector<1x1x512x128xbf16> to vector<512x128xbf16>
    %cst_133 = arith.constant dense<0.000000e+00> : vector<4x128xf32>
    %144 = tpu.matmul %141, %143, %cst_133 {dimension_numbers = #tpu.dot_dimension_numbers<[1], [0], [0], [1], [0, 0, 1, 1], [], []>} : vector<4x512xbf16>, vector<512x128xbf16>, vector<4x128xf32> -> vector<4x128xf32>
    %145 = arith.addf %139, %144 : vector<4x128xf32>
    %c1_134 = arith.constant 1 : index
    %c9_135 = arith.constant 9 : index
    %c0_136 = arith.constant 0 : index
    %146 = vector.load %arg8[%c1_134, %c9_135, %c0_136] : memref<2x15x512xbf16, #tpu.memory_space<vmem>>, vector<1x4x512xbf16>
    %147 = vector.shape_cast %146 : vector<1x4x512xbf16> to vector<4x512xbf16>
    %c1_137 = arith.constant 1 : index
    %c2_138 = arith.constant 2 : index
    %c0_139 = arith.constant 0 : index
    %c0_140 = arith.constant 0 : index
    %148 = vector.load %arg3[%c1_137, %c2_138, %c0_139, %c0_140] : memref<3x3x512x128xbf16, #tpu.memory_space<vmem>>, vector<1x1x512x128xbf16>
    %149 = vector.shape_cast %148 : vector<1x1x512x128xbf16> to vector<512x128xbf16>
    %cst_141 = arith.constant dense<0.000000e+00> : vector<4x128xf32>
    %150 = tpu.matmul %147, %149, %cst_141 {dimension_numbers = #tpu.dot_dimension_numbers<[1], [0], [0], [1], [0, 0, 1, 1], [], []>} : vector<4x512xbf16>, vector<512x128xbf16>, vector<4x128xf32> -> vector<4x128xf32>
    %cst_142 = arith.constant 0.000000e+00 : f32
    %151 = vector.shape_cast %11 : vector<4x1xi1> to vector<4x1xi1>
    %152 = vector.broadcast %151 : vector<4x1xi1> to vector<4x128xi1>
    %153 = vector.broadcast %cst_142 : f32 to vector<4x128xf32>
    %154 = arith.select %152, %150, %153 : vector<4x128xi1>, vector<4x128xf32>
    %155 = arith.addf %145, %154 : vector<4x128xf32>
    %c1_143 = arith.constant 1 : index
    %c9_144 = arith.constant 9 : index
    %c0_145 = arith.constant 0 : index
    %156 = vector.load %arg8[%c1_143, %c9_144, %c0_145] : memref<2x15x512xbf16, #tpu.memory_space<vmem>>, vector<1x4x512xbf16>
    %157 = vector.shape_cast %156 : vector<1x4x512xbf16> to vector<4x512xbf16>
    %c2_146 = arith.constant 2 : index
    %c0_147 = arith.constant 0 : index
    %c0_148 = arith.constant 0 : index
    %c0_149 = arith.constant 0 : index
    %158 = vector.load %arg3[%c2_146, %c0_147, %c0_148, %c0_149] : memref<3x3x512x128xbf16, #tpu.memory_space<vmem>>, vector<1x1x512x128xbf16>
    %159 = vector.shape_cast %158 : vector<1x1x512x128xbf16> to vector<512x128xbf16>
    %cst_150 = arith.constant dense<0.000000e+00> : vector<4x128xf32>
    %160 = tpu.matmul %157, %159, %cst_150 {dimension_numbers = #tpu.dot_dimension_numbers<[1], [0], [0], [1], [0, 0, 1, 1], [], []>} : vector<4x512xbf16>, vector<512x128xbf16>, vector<4x128xf32> -> vector<4x128xf32>
    %cst_151 = arith.constant 0.000000e+00 : f32
    %161 = vector.shape_cast %9 : vector<4x1xi1> to vector<4x1xi1>
    %162 = vector.broadcast %161 : vector<4x1xi1> to vector<4x128xi1>
    %163 = vector.broadcast %cst_151 : f32 to vector<4x128xf32>
    %164 = arith.select %162, %160, %163 : vector<4x128xi1>, vector<4x128xf32>
    %165 = arith.addf %155, %164 : vector<4x128xf32>
    %c1_152 = arith.constant 1 : index
    %c10_153 = arith.constant 10 : index
    %c0_154 = arith.constant 0 : index
    %166 = vector.load %arg8[%c1_152, %c10_153, %c0_154] : memref<2x15x512xbf16, #tpu.memory_space<vmem>>, vector<1x4x512xbf16>
    %167 = vector.shape_cast %166 : vector<1x4x512xbf16> to vector<4x512xbf16>
    %c2_155 = arith.constant 2 : index
    %c1_156 = arith.constant 1 : index
    %c0_157 = arith.constant 0 : index
    %c0_158 = arith.constant 0 : index
    %168 = vector.load %arg3[%c2_155, %c1_156, %c0_157, %c0_158] : memref<3x3x512x128xbf16, #tpu.memory_space<vmem>>, vector<1x1x512x128xbf16>
    %169 = vector.shape_cast %168 : vector<1x1x512x128xbf16> to vector<512x128xbf16>
    %cst_159 = arith.constant dense<0.000000e+00> : vector<4x128xf32>
    %170 = tpu.matmul %167, %169, %cst_159 {dimension_numbers = #tpu.dot_dimension_numbers<[1], [0], [0], [1], [0, 0, 1, 1], [], []>} : vector<4x512xbf16>, vector<512x128xbf16>, vector<4x128xf32> -> vector<4x128xf32>
    %171 = arith.addf %165, %170 : vector<4x128xf32>
    %c1_160 = arith.constant 1 : index
    %c11_161 = arith.constant 11 : index
    %c0_162 = arith.constant 0 : index
    %172 = vector.load %arg8[%c1_160, %c11_161, %c0_162] : memref<2x15x512xbf16, #tpu.memory_space<vmem>>, vector<1x4x512xbf16>
    %173 = vector.shape_cast %172 : vector<1x4x512xbf16> to vector<4x512xbf16>
    %c2_163 = arith.constant 2 : index
    %c2_164 = arith.constant 2 : index
    %c0_165 = arith.constant 0 : index
    %c0_166 = arith.constant 0 : index
    %174 = vector.load %arg3[%c2_163, %c2_164, %c0_165, %c0_166] : memref<3x3x512x128xbf16, #tpu.memory_space<vmem>>, vector<1x1x512x128xbf16>
    %175 = vector.shape_cast %174 : vector<1x1x512x128xbf16> to vector<512x128xbf16>
    %cst_167 = arith.constant dense<0.000000e+00> : vector<4x128xf32>
    %176 = tpu.matmul %173, %175, %cst_167 {dimension_numbers = #tpu.dot_dimension_numbers<[1], [0], [0], [1], [0, 0, 1, 1], [], []>} : vector<4x512xbf16>, vector<512x128xbf16>, vector<4x128xf32> -> vector<4x128xf32>
    %cst_168 = arith.constant 0.000000e+00 : f32
    %177 = vector.shape_cast %11 : vector<4x1xi1> to vector<4x1xi1>
    %178 = vector.broadcast %177 : vector<4x1xi1> to vector<4x128xi1>
    %179 = vector.broadcast %cst_168 : f32 to vector<4x128xf32>
    %180 = arith.select %178, %176, %179 : vector<4x128xi1>, vector<4x128xf32>
    %181 = arith.addf %171, %180 : vector<4x128xf32>
    %c1_169 = arith.constant 1 : index
    %c0_170 = arith.constant 0 : index
    %c0_171 = arith.constant 0 : index
    %182 = vector.load %arg7[%c1_169, %c0_170, %c0_171] : memref<2x4x128xf32, #tpu.memory_space<vmem>>, vector<1x4x128xf32>
    %183 = vector.shape_cast %182 : vector<1x4x128xf32> to vector<4x128xf32>
    %184 = vector.shape_cast %181 : vector<4x128xf32> to vector<1x4x128xf32>
    tpu.vector_store %arg7[%c1_169, %c0_170, %c0_171], %184 {strides = array<i32>} : memref<2x4x128xf32, #tpu.memory_space<vmem>>, vector<1x4x128xf32>,
    %cst_172 = arith.constant dense<0.000000e+00> : vector<128xf32>
    %185 = vector.multi_reduction <add>, %181, %cst_172 [0] : vector<4x128xf32> to vector<128xf32>
    %186 = vector.shape_cast %185 : vector<128xf32> to vector<1x128xf32>
    %187 = arith.addf %98, %186 : vector<1x128xf32>
    %188 = arith.mulf %181, %181 : vector<4x128xf32>
    %cst_173 = arith.constant dense<0.000000e+00> : vector<128xf32>
    %189 = vector.multi_reduction <add>, %188, %cst_173 [0] : vector<4x128xf32> to vector<128xf32>
    %190 = vector.shape_cast %189 : vector<128xf32> to vector<1x128xf32>
    %191 = arith.addf %102, %190 : vector<1x128xf32>
    %cst_174 = arith.constant 8.000000e+00 : f32
    %192 = vector.broadcast %cst_174 : f32 to vector<1x128xf32>
    %193 = arith.divf %187, %192 : vector<1x128xf32>
    %cst_175 = arith.constant 8.000000e+00 : f32
    %194 = vector.broadcast %cst_175 : f32 to vector<1x128xf32>
    %195 = arith.divf %191, %194 : vector<1x128xf32>
    %196 = arith.mulf %193, %193 : vector<1x128xf32>
    %197 = arith.subf %195, %196 : vector<1x128xf32>
    %cst_176 = arith.constant 0.000000e+00 : f32
    %198 = vector.broadcast %cst_176 : f32 to vector<1x128xf32>
    %199 = arith.maximumf %197, %198 : vector<1x128xf32>
    %c0_177 = arith.constant 0 : index
    %c0_178 = arith.constant 0 : index
    %200 = vector.load %arg5[%c0_177, %c0_178] : memref<1x128xf32, #tpu.memory_space<vmem>>, vector<1x128xf32>
    %cst_179 = arith.constant 9.99999974E-6 : f32
    %201 = vector.broadcast %cst_179 : f32 to vector<1x128xf32>
    %202 = arith.addf %199, %201 : vector<1x128xf32>
    %203 = math.rsqrt %202 : vector<1x128xf32>
    %204 = arith.mulf %200, %203 : vector<1x128xf32>
    %c0_180 = arith.constant 0 : index
    %c0_181 = arith.constant 0 : index
    %205 = vector.load %arg6[%c0_180, %c0_181] : memref<1x128xf32, #tpu.memory_space<vmem>>, vector<1x128xf32>
    %206 = arith.mulf %193, %204 : vector<1x128xf32>
    %207 = arith.subf %205, %206 : vector<1x128xf32>
    %c0_182 = arith.constant 0 : index
    %c0_183 = arith.constant 0 : index
    %c0_184 = arith.constant 0 : index
    %208 = vector.load %arg7[%c0_182, %c0_183, %c0_184] : memref<2x4x128xf32, #tpu.memory_space<vmem>>, vector<2x4x128xf32>
    %209 = vector.shape_cast %204 : vector<1x128xf32> to vector<1x1x128xf32>
    %210 = vector.broadcast %209 : vector<1x1x128xf32> to vector<2x4x128xf32>
    %211 = arith.mulf %208, %210 : vector<2x4x128xf32>
    %212 = vector.shape_cast %207 : vector<1x128xf32> to vector<1x1x128xf32>
    %213 = vector.broadcast %212 : vector<1x1x128xf32> to vector<2x4x128xf32>
    %214 = arith.addf %211, %213 : vector<2x4x128xf32>
    %cst_185 = arith.constant 0.000000e+00 : f32
    %215 = vector.broadcast %cst_185 : f32 to vector<2x4x128xf32>
    %216 = arith.maximumf %214, %215 : vector<2x4x128xf32>
    %c0_186 = arith.constant 0 : index
    %c0_187 = arith.constant 0 : index
    %c0_188 = arith.constant 0 : index
    %217 = vector.load %arg7[%c0_186, %c0_187, %c0_188] : memref<2x4x128xf32, #tpu.memory_space<vmem>>, vector<2x4x128xf32>
    tpu.vector_store %arg7[%c0_186, %c0_187, %c0_188], %216 {strides = array<i32>} : memref<2x4x128xf32, #tpu.memory_space<vmem>>, vector<2x4x128xf32>,
    return
  }
  func.func @transform_0(%arg0: i32) -> (i32, i32, i32) {
    %c0_i32 = arith.constant 0 : i32
    %c0_i32_0 = arith.constant 0 : i32
    %c0_i32_1 = arith.constant 0 : i32
    %c0_i32_2 = arith.constant 0 : i32
    return %c0_i32, %c0_i32_0, %c0_i32_1 : i32, i32, i32
  }
  func.func @transform_1(%arg0: i32) -> (i32, i32) {
    %c0_i32 = arith.constant 0 : i32
    %c0_i32_0 = arith.constant 0 : i32
    %c0_i32_1 = arith.constant 0 : i32
    return %c0_i32, %c0_i32_0 : i32, i32
  }
  func.func @transform_2(%arg0: i32) -> (i32, i32, i32, i32) {
    %c0_i32 = arith.constant 0 : i32
    %c0_i32_0 = arith.constant 0 : i32
    %c0_i32_1 = arith.constant 0 : i32
    %c0_i32_2 = arith.constant 0 : i32
    return %c0_i32, %c0_i32_0, %c0_i32_1, %arg0 : i32, i32, i32, i32
  }
  func.func @transform_3(%arg0: i32) -> (i32, i32) {
    %c0_i32 = arith.constant 0 : i32
    %c0_i32_0 = arith.constant 0 : i32
    return %c0_i32, %arg0 : i32, i32
  }
  func.func @transform_4(%arg0: i32) -> (i32, i32) {
    %c0_i32 = arith.constant 0 : i32
    %c0_i32_0 = arith.constant 0 : i32
    return %c0_i32, %arg0 : i32, i32
  }
  func.func @transform_5(%arg0: i32) -> (i32, i32) {
    %c0_i32 = arith.constant 0 : i32
    %c0_i32_0 = arith.constant 0 : i32
    return %c0_i32, %arg0 : i32, i32
  }
  func.func @transform_6(%arg0: i32) -> (i32, i32, i32) {
    %c0_i32 = arith.constant 0 : i32
    %c0_i32_0 = arith.constant 0 : i32
    %c0_i32_1 = arith.constant 0 : i32
    return %c0_i32, %c0_i32_0, %arg0 : i32, i32, i32
  }
}

</mosaic_0001>

<llo_original>
// kernel: tpu_custom_call.1
$region0: #{tpu_custom_call.1}
  #allocation0 [shape = 'u32[]', space=smem, size = 0x4, offset = 0x4, fixed_abs, tag = 'smem constant byte address 0x4 - core index']
  #allocation1 [shape = 'u32[72,128]{1,0:T(1,128)}', space=vmem, size = 0x9000, scoped, tag = 'internal scratch']
  #allocation2 [shape = 'bf16[2,15,512]{2,1,0:T(8,128)(2,1)}', space=vmem, size = 0x8000, scoped, tag = 'scratch operand']
  %s0 = inlined_call_operand.hbm [shape: f32[2,4,512], index: 0, kind: input, shape index: {}]
  %s1 = inlined_call_operand.vmem [shape: s32[4,1], index: 1, kind: input, shape index: {}]
  %s2 = inlined_call_operand.hbm [shape: bf16[3,3,512,512], index: 2, kind: input, shape index: {}]
  %s3 = inlined_call_operand.hbm [shape: f32[1,512], index: 3, kind: input, shape index: {}]
  %s4 = inlined_call_operand.hbm [shape: f32[1,512], index: 4, kind: input, shape index: {}]
  %s5 = inlined_call_operand.hbm [shape: f32[1,512], index: 5, kind: input, shape index: {}]
  %s6 = inlined_call_operand.hbm [shape: f32[2,4,512], index: 6, kind: output, shape index: {}]
  %s7 = sld [smem:[#allocation0]]
  $region77: #{tpu_custom_call.1} parent=0
    _
  %s9 = ssub.s32 1, %s7
  %s10 = scalar_select 0, %s9, %s7
  $region1: #{tpu_custom_call.1} parent=0
    #allocation3 [shape = 'u8[16384]{0}', space=vmem, size = 0x4000, scoped, tag = 'input window, operand 0, single buffered']
    #allocation4 [shape = 's32[2]{0}', space=sflag, size = 0x8, scoped, tag = 'scoped memory for tpu_custom_call.1']
    #allocation5 [shape = 's32[2]{0}', space=sflag, size = 0x8, scoped, tag = 'scoped memory for tpu_custom_call.1']
    #allocation6 [shape = 'u8[2359296]{0}', space=vmem, size = 0x240000, scoped, tag = 'input window, operand 2']
    #allocation7 [shape = 's32[2]{0}', space=sflag, size = 0x8, scoped, tag = 'scoped memory for tpu_custom_call.1']
    #allocation8 [shape = 'u8[1024]{0}', space=vmem, size = 0x400, scoped, tag = 'input window, operand 3']
    #allocation9 [shape = 'u8[1024]{0}', space=vmem, size = 0x400, scoped, tag = 'input window, operand 4']
    #allocation10 [shape = 's32[2]{0}', space=sflag, size = 0x8, scoped, tag = 'scoped memory for tpu_custom_call.1']
    #allocation11 [shape = 'u8[1024]{0}', space=vmem, size = 0x400, scoped, tag = 'input window, operand 5']
    #allocation12 [shape = 'u8[8192]{0}', space=vmem, size = 0x2000, scoped, tag = 'output window, operand 0']
    %11 = vsyncpa [#allocation4], 0
    %12 = vsyncpa [#allocation7], 0
    %s13 = scalar_lea.sflag [#allocation7], 1
    %14 = vsyncpa %s13, 0
    %15 = vsyncpa [#allocation10], 0
    %s16 = scalar_lea.sflag [#allocation10], 1
    %17 = vsyncpa %s16, 0
    %18 = vsyncpa [#allocation5], 0
    %s19 = scalar_lea.sflag [#allocation5], 1
    %20 = vsyncpa %s19, 0
    loop: start=0, step=1, limit=6
    $region2: #{tpu_custom_call.1} parent=1 // loop_pre_header
      _
    $region3: #{tpu_custom_call.1} parent=1 // loop_header
      %s22 = sphi 0, %s26
      %p23 = scmp.ge.s32.totalorder %s22, 6
      %s30 = sphi 0, %s30
      %s32 = sphi 0, %s30
      %s33 = sphi 0, %s32
      %s47 = sphi 0, %s33
      %s51 = sphi 0, %s51
      %s53 = sphi 0, %s51
      %s54 = sphi 0, %s53
      %s68 = sphi 0, %s54
      %s74 = sphi 0, %s76
      %s77 = sphi 0, %s74
      %s78 = sphi 0, %s77
      %s94 = sphi 0, %s78
      %s100 = sphi 0, %s102
      %s103 = sphi 0, %s100
      %s104 = sphi 0, %s103
      %s120 = sphi 0, %s104
      %s126 = sphi 0, %s128
      %s129 = sphi 0, %s126
      %s130 = sphi 0, %s129
      %s146 = sphi 0, %s130
      %s152 = sphi 0, %s154
      %s155 = sphi 0, %s152
      %s156 = sphi 0, %s155
      %s172 = sphi 0, %s156
      %s178 = sphi 0, %s180
      %s181 = sphi 0, %s178
      %s182 = sphi 0, %s181
      %s198 = sphi 0, %s182
    $region4: #{tpu_custom_call.1} parent=1 // loop_header_branch
      %25 = sbr.rel (%p23) target = $region8
    $region5: #{tpu_custom_call.1} parent=1 // loop_body
      %s27 = ssub.s32 %s22, 1
      %s28 = ssub.s32 %s22, 2
      %s29 = sadd.s32 %s22, 1
      %s31 = sadd.s32 %s30, 1
      %p34 = scmp.eq.s32.totalorder %s22, 3
      %p35 = scmp.ne.s32.totalorder %s30, %s32
      %p36 = scmp.eq.s32.totalorder %s22, 0
      %p37 = por %p35, %p36
      %p38 = scmp.ne.s32.totalorder %s30, %s32
      %p39 = scmp.eq.s32.totalorder %s27, 3
      %p40 = por %p38, %p39
      %p41 = scmp.ne.s32.totalorder %s32, %s33
      %p42 = scmp.eq.s32.totalorder %s27, 0
      %p43 = por %p41, %p42
      %p44 = scmp.ne.s32.totalorder %s32, %s33
      %p45 = scmp.eq.s32.totalorder %s28, 3
      %p46 = por %p44, %p45
      %p48 = scmp.ne.s32.totalorder %s33, %s47
      %p49 = scmp.eq.s32.totalorder %s28, 0
      %p50 = por %p48, %p49
      %s52 = sadd.s32 %s51, 1
      %p55 = scmp.eq.s32.totalorder %s22, 3
      %p56 = scmp.ne.s32.totalorder %s51, %s53
      %p57 = scmp.eq.s32.totalorder %s22, 0
      %p58 = por %p56, %p57
      %p59 = scmp.ne.s32.totalorder %s51, %s53
      %p60 = scmp.eq.s32.totalorder %s27, 3
      %p61 = por %p59, %p60
      %p62 = scmp.ne.s32.totalorder %s53, %s54
      %p63 = scmp.eq.s32.totalorder %s27, 0
      %p64 = por %p62, %p63
      %p65 = scmp.ne.s32.totalorder %s53, %s54
      %p66 = scmp.eq.s32.totalorder %s28, 3
      %p67 = por %p65, %p66
      %p69 = scmp.ne.s32.totalorder %s54, %s68
      %p70 = scmp.eq.s32.totalorder %s28, 0
      %p71 = por %p69, %p70
      %s72 = ssub.s32 %s22, %s29
      %p73 = scmp.eq.s32.totalorder %s72, 0
      %s75 = sadd.s32 %s74, 1
      %s76 = scalar_select %p73, %s74, %s75
      %p79 = pneg %p73
      %p80 = scmp.eq.s32.totalorder %s22, 3
      %p81 = por %p79, %p80
      %p82 = scmp.ne.s32.totalorder %s74, %s77
      %p83 = scmp.eq.s32.totalorder %s22, 0
      %p84 = por %p82, %p83
      %p85 = scmp.ne.s32.totalorder %s74, %s77
      %p86 = scmp.eq.s32.totalorder %s27, 3
      %p87 = por %p85, %p86
      %p88 = scmp.ne.s32.totalorder %s77, %s78
      %p89 = scmp.eq.s32.totalorder %s27, 0
      %p90 = por %p88, %p89
      %p91 = scmp.ne.s32.totalorder %s77, %s78
      %p92 = scmp.eq.s32.totalorder %s28, 3
      %p93 = por %p91, %p92
      %p95 = scmp.ne.s32.totalorder %s78, %s94
      %p96 = scmp.eq.s32.totalorder %s28, 0
      %p97 = por %p95, %p96
      %s98 = ssub.s32 %s22, %s29
      %p99 = scmp.eq.s32.totalorder %s98, 0
      %s101 = sadd.s32 %s100, 1
      %s102 = scalar_select %p99, %s100, %s101
      %p105 = pneg %p99
      %p106 = scmp.eq.s32.totalorder %s22, 3
      %p107 = por %p105, %p106
      %p108 = scmp.ne.s32.totalorder %s100, %s103
      %p109 = scmp.eq.s32.totalorder %s22, 0
      %p110 = por %p108, %p109
      %p111 = scmp.ne.s32.totalorder %s100, %s103
      %p112 = scmp.eq.s32.totalorder %s27, 3
      %p113 = por %p111, %p112
      %p114 = scmp.ne.s32.totalorder %s103, %s104
      %p115 = scmp.eq.s32.totalorder %s27, 0
      %p116 = por %p114, %p115
      %p117 = scmp.ne.s32.totalorder %s103, %s104
      %p118 = scmp.eq.s32.totalorder %s28, 3
      %p119 = por %p117, %p118
      %p121 = scmp.ne.s32.totalorder %s104, %s120
      %p122 = scmp.eq.s32.totalorder %s28, 0
      %p123 = por %p121, %p122
      %s124 = ssub.s32 %s22, %s29
      %p125 = scmp.eq.s32.totalorder %s124, 0
      %s127 = sadd.s32 %s126, 1
      %s128 = scalar_select %p125, %s126, %s127
      %p131 = pneg %p125
      %p132 = scmp.eq.s32.totalorder %s22, 3
      %p133 = por %p131, %p132
      %p134 = scmp.ne.s32.totalorder %s126, %s129
      %p135 = scmp.eq.s32.totalorder %s22, 0
      %p136 = por %p134, %p135
      %p137 = scmp.ne.s32.totalorder %s126, %s129
      %p138 = scmp.eq.s32.totalorder %s27, 3
      %p139 = por %p137, %p138
      %p140 = scmp.ne.s32.totalorder %s129, %s130
      %p141 = scmp.eq.s32.totalorder %s27, 0
      %p142 = por %p140, %p141
      %p143 = scmp.ne.s32.totalorder %s129, %s130
      %p144 = scmp.eq.s32.totalorder %s28, 3
      %p145 = por %p143, %p144
      %p147 = scmp.ne.s32.totalorder %s130, %s146
      %p148 = scmp.eq.s32.totalorder %s28, 0
      %p149 = por %p147, %p148
      %s150 = ssub.s32 %s22, %s29
      %p151 = scmp.eq.s32.totalorder %s150, 0
      %s153 = sadd.s32 %s152, 1
      %s154 = scalar_select %p151, %s152, %s153
      %p157 = pneg %p151
      %p158 = scmp.eq.s32.totalorder %s22, 3
      %p159 = por %p157, %p158
      %p160 = scmp.ne.s32.totalorder %s152, %s155
      %p161 = scmp.eq.s32.totalorder %s22, 0
      %p162 = por %p160, %p161
      %p163 = scmp.ne.s32.totalorder %s152, %s155
      %p164 = scmp.eq.s32.totalorder %s27, 3
      %p165 = por %p163, %p164
      %p166 = scmp.ne.s32.totalorder %s155, %s156
      %p167 = scmp.eq.s32.totalorder %s27, 0
      %p168 = por %p166, %p167
      %p169 = scmp.ne.s32.totalorder %s155, %s156
      %p170 = scmp.eq.s32.totalorder %s28, 3
      %p171 = por %p169, %p170
      %p173 = scmp.ne.s32.totalorder %s156, %s172
      %p174 = scmp.eq.s32.totalorder %s28, 0
      %p175 = por %p173, %p174
      %s176 = ssub.s32 %s22, %s29
      %p177 = scmp.eq.s32.totalorder %s176, 0
      %s179 = sadd.s32 %s178, 1
      %s180 = scalar_select %p177, %s178, %s179
      %p183 = pneg %p177
      %p184 = scmp.eq.s32.totalorder %s22, 3
      %p185 = por %p183, %p184
      %p186 = scmp.ne.s32.totalorder %s178, %s181
      %p187 = scmp.eq.s32.totalorder %s22, 0
      %p188 = por %p186, %p187
      %p189 = scmp.ne.s32.totalorder %s178, %s181
      %p190 = scmp.eq.s32.totalorder %s27, 3
      %p191 = por %p189, %p190
      %p192 = scmp.ne.s32.totalorder %s181, %s182
      %p193 = scmp.eq.s32.totalorder %s27, 0
      %p194 = por %p192, %p193
      %p195 = scmp.ne.s32.totalorder %s181, %s182
      %p196 = scmp.eq.s32.totalorder %s28, 3
      %p197 = por %p195, %p196
      %p199 = scmp.ne.s32.totalorder %s182, %s198
      %p200 = scmp.eq.s32.totalorder %s28, 0
      %p201 = por %p199, %p200
      %p202 = scmp.le.s32.totalorder 1, %s22
      %p203 = scmp.lt.s32.totalorder %s22, 5
      %p204 = pnand %p202, %p203
      %p205 = pneg %p204
      // Predicated region
      $region9: #{tpu_custom_call.1} parent=5 // pred_check
        _
      $region10: #{tpu_custom_call.1} parent=5 // pred_check_branch
        %207 = sbr.rel (%p204) target = $region12
      $region11: #{tpu_custom_call.1} parent=5 // pred_region
        %s208 = ssub.s32 %s22, 1
        // Predicated region
        $region13: #{tpu_custom_call.1} parent=11 // pred_check
          %p209 = pneg %p43
        $region14: #{tpu_custom_call.1} parent=11 // pred_check_branch
          %211 = sbr.rel (%p209) target = $region16
        $region15: #{tpu_custom_call.1} parent=11 // pred_region
          %213 = vsyncadd [#allocation4], 0
          %s214 = sshll.u32 %s0, 4
          %s215 = int_to_ptr.hbm [resolvable:$true] %s214
          %s216 = sshll.u32 [#allocation3], 4
          %s217 = int_to_ptr.vmem [resolvable:$true] %s216
          %222 = dma.hbm_to_vmem [thread:$0]  %s215, 512, %s217, [#allocation4], 256, 256, 16
        $region16: #{tpu_custom_call.1} parent=11 // pred_fallthru
          _
        // Predicated region
        $region17: #{tpu_custom_call.1} parent=11 // pred_check
          %p223 = pneg %p64
        $region18: #{tpu_custom_call.1} parent=11 // pred_check_branch
          %225 = sbr.rel (%p223) target = $region20
        $region19: #{tpu_custom_call.1} parent=11 // pred_region
          _
        $region20: #{tpu_custom_call.1} parent=11 // pred_fallthru
          _
      $region12: #{tpu_custom_call.1} parent=5 // pred_fallthru
        _
      %p226 = scmp.lt.s32.totalorder %s22, 4
      // Predicated region
      $region21: #{tpu_custom_call.1} parent=5 // pred_check
        %p227 = pneg %p226
      $region22: #{tpu_custom_call.1} parent=5 // pred_check_branch
        %229 = sbr.rel (%p227) target = $region24
      $region23: #{tpu_custom_call.1} parent=5 // pred_region
        // Predicated region
        $region25: #{tpu_custom_call.1} parent=23 // pred_check
          %p230 = pneg %p84
        $region26: #{tpu_custom_call.1} parent=23 // pred_check_branch
          %232 = sbr.rel (%p230) target = $region28
        $region27: #{tpu_custom_call.1} parent=23 // pred_region
          %s233 = sand.u32 %s22, 1
          %s234 = scalar_lea.sflag [#allocation7], %s233
          %s235 = sand.u32 %s74, 1
          %s236 = smul.addr %s235, 2304
          %s237 = scalar_lea.vmem [#allocation6], %s236
          %239 = vsyncadd %s234, 0
          %s240 = smul.addr %s22, 4
          %s241 = scalar_lea.hbm %s2, %s240
          %s242 = sshll.u32 %s241, 4
          %s243 = int_to_ptr.hbm [resolvable:$true] %s242
          %s244 = sshll.u32 %s237, 4
          %s245 = int_to_ptr.vmem [resolvable:$true] %s244
          %250 = dma.hbm_to_vmem [thread:$0]  %s243, 36864, %s245, %s234, 256, 64, 4
        $region28: #{tpu_custom_call.1} parent=23 // pred_fallthru
          _
        // Predicated region
        $region29: #{tpu_custom_call.1} parent=23 // pred_check
          %p251 = pneg %p110
        $region30: #{tpu_custom_call.1} parent=23 // pred_check_branch
          %253 = sbr.rel (%p251) target = $region32
        $region31: #{tpu_custom_call.1} parent=23 // pred_region
          %s254 = sand.u32 %s22, 1
          %s255 = scalar_lea.sflag [#allocation7], %s254
          %s256 = sand.u32 %s100, 1
          %s257 = scalar_lea.vmem [#allocation8], %s256
          %259 = vsyncadd %s255, 0
          %s260 = scalar_lea.hbm %s3, %s22
          %s262 = sshll.u32 %s260, 4
          %s263 = int_to_ptr.hbm [resolvable:$true] %s262
          %s264 = sshll.u32 %s257, 4
          %s265 = int_to_ptr.vmem [resolvable:$true] %s264
          %267 = dma.hbm_to_vmem [thread:$0]  %s263, 16, %s265, %s255
        $region32: #{tpu_custom_call.1} parent=23 // pred_fallthru
          _
        // Predicated region
        $region33: #{tpu_custom_call.1} parent=23 // pred_check
          %p268 = pneg %p136
        $region34: #{tpu_custom_call.1} parent=23 // pred_check_branch
          %270 = sbr.rel (%p268) target = $region36
        $region35: #{tpu_custom_call.1} parent=23 // pred_region
          %s271 = sand.u32 %s22, 1
          %s272 = scalar_lea.sflag [#allocation10], %s271
          %s273 = sand.u32 %s126, 1
          %s274 = scalar_lea.vmem [#allocation9], %s273
          %276 = vsyncadd %s272, 0
          %s277 = scalar_lea.hbm %s4, %s22
          %s279 = sshll.u32 %s277, 4
          %s280 = int_to_ptr.hbm [resolvable:$true] %s279
          %s281 = sshll.u32 %s274, 4
          %s282 = int_to_ptr.vmem [resolvable:$true] %s281
          %284 = dma.hbm_to_vmem [thread:$0]  %s280, 16, %s282, %s272
        $region36: #{tpu_custom_call.1} parent=23 // pred_fallthru
          _
        // Predicated region
        $region37: #{tpu_custom_call.1} parent=23 // pred_check
          %p285 = pneg %p162
        $region38: #{tpu_custom_call.1} parent=23 // pred_check_branch
          %287 = sbr.rel (%p285) target = $region40
        $region39: #{tpu_custom_call.1} parent=23 // pred_region
          %s288 = sand.u32 %s22, 1
          %s289 = scalar_lea.sflag [#allocation10], %s288
          %s290 = sand.u32 %s152, 1
          %s291 = scalar_lea.vmem [#allocation11], %s290
          %293 = vsyncadd %s289, 0
          %s294 = scalar_lea.hbm %s5, %s22
          %s296 = sshll.u32 %s294, 4
          %s297 = int_to_ptr.hbm [resolvable:$true] %s296
          %s298 = sshll.u32 %s291, 4
          %s299 = int_to_ptr.vmem [resolvable:$true] %s298
          %301 = dma.hbm_to_vmem [thread:$0]  %s297, 16, %s299, %s289
        $region40: #{tpu_custom_call.1} parent=23 // pred_fallthru
          _
      $region24: #{tpu_custom_call.1} parent=5 // pred_fallthru
        _
      %p302 = scmp.le.s32.totalorder 1, %s22
      %p303 = scmp.lt.s32.totalorder %s22, 5
      %p304 = pnand %p302, %p303
      %p305 = pneg %p304
      // Predicated region
      $region41: #{tpu_custom_call.1} parent=5 // pred_check
        _
      $region42: #{tpu_custom_call.1} parent=5 // pred_check_branch
        %307 = sbr.rel (%p304) target = $region44
      $region43: #{tpu_custom_call.1} parent=5 // pred_region
        %s308 = ssub.s32 %s22, 1
        // Predicated region
        $region45: #{tpu_custom_call.1} parent=43 // pred_check
          %p309 = pneg %p43
        $region46: #{tpu_custom_call.1} parent=43 // pred_check_branch
          %311 = sbr.rel (%p309) target = $region48
        $region47: #{tpu_custom_call.1} parent=43 // pred_region
          %313 = dma.done [#allocation4], 512
        $region48: #{tpu_custom_call.1} parent=43 // pred_fallthru
          _
        %s314 = sand.u32 %s27, 1
        %s315 = scalar_lea.sflag [#allocation7], %s314
        %s316 = sand.u32 %s77, 1
        %s317 = smul.addr %s316, 2304
        %s318 = scalar_lea.vmem [#allocation6], %s317
        // Predicated region
        $region49: #{tpu_custom_call.1} parent=43 // pred_check
          %p319 = pneg %p90
        $region50: #{tpu_custom_call.1} parent=43 // pred_check_branch
          %321 = sbr.rel (%p319) target = $region52
        $region51: #{tpu_custom_call.1} parent=43 // pred_region
          %323 = dma.done %s315, 36864
        $region52: #{tpu_custom_call.1} parent=43 // pred_fallthru
          _
        %s324 = sand.u32 %s27, 1
        %s325 = scalar_lea.sflag [#allocation7], %s324
        %s326 = sand.u32 %s103, 1
        %s327 = scalar_lea.vmem [#allocation8], %s326
        // Predicated region
        $region53: #{tpu_custom_call.1} parent=43 // pred_check
          %p328 = pneg %p116
        $region54: #{tpu_custom_call.1} parent=43 // pred_check_branch
          %330 = sbr.rel (%p328) target = $region56
        $region55: #{tpu_custom_call.1} parent=43 // pred_region
          %332 = dma.done %s325, 16
        $region56: #{tpu_custom_call.1} parent=43 // pred_fallthru
          _
        %s333 = sand.u32 %s27, 1
        %s334 = scalar_lea.sflag [#allocation10], %s333
        %s335 = sand.u32 %s129, 1
        %s336 = scalar_lea.vmem [#allocation9], %s335
        // Predicated region
        $region57: #{tpu_custom_call.1} parent=43 // pred_check
          %p337 = pneg %p142
        $region58: #{tpu_custom_call.1} parent=43 // pred_check_branch
          %339 = sbr.rel (%p337) target = $region60
        $region59: #{tpu_custom_call.1} parent=43 // pred_region
          %341 = dma.done %s334, 16
        $region60: #{tpu_custom_call.1} parent=43 // pred_fallthru
          _
        %s342 = sand.u32 %s27, 1
        %s343 = scalar_lea.sflag [#allocation10], %s342
        %s344 = sand.u32 %s155, 1
        %s345 = scalar_lea.vmem [#allocation11], %s344
        // Predicated region
        $region61: #{tpu_custom_call.1} parent=43 // pred_check
          %p346 = pneg %p168
        $region62: #{tpu_custom_call.1} parent=43 // pred_check_branch
          %348 = sbr.rel (%p346) target = $region64
        $region63: #{tpu_custom_call.1} parent=43 // pred_region
          %350 = dma.done %s343, 16
        $region64: #{tpu_custom_call.1} parent=43 // pred_fallthru
          _
        %p351 = pneg %p43
        %p352 = pneg %p40
        %p353 = pneg %p64
        %p354 = pneg %p61
        %s355 = sand.u32 %s27, 1
        %s356 = scalar_lea.sflag [#allocation7], %s355
        %s357 = sand.u32 %s77, 1
        %s358 = smul.addr %s357, 2304
        %s359 = scalar_lea.vmem [#allocation6], %s358
        %p360 = pneg %p90
        %p361 = pneg %p87
        %s362 = sand.u32 %s27, 1
        %s363 = scalar_lea.sflag [#allocation7], %s362
        %s364 = sand.u32 %s103, 1
        %s365 = scalar_lea.vmem [#allocation8], %s364
        %p366 = pneg %p116
        %p367 = pneg %p113
        %s368 = sand.u32 %s27, 1
        %s369 = scalar_lea.sflag [#allocation10], %s368
        %s370 = sand.u32 %s129, 1
        %s371 = scalar_lea.vmem [#allocation9], %s370
        %p372 = pneg %p142
        %p373 = pneg %p139
        %s374 = sand.u32 %s27, 1
        %s375 = scalar_lea.sflag [#allocation10], %s374
        %s376 = sand.u32 %s155, 1
        %s377 = scalar_lea.vmem [#allocation11], %s376
        %p378 = pneg %p168
        %p379 = pneg %p165
        %p380 = pneg %p194
        %p381 = pneg %p191
        %s382 = sand.u32 %s181, 1
        %s383 = scalar_lea.sflag [#allocation5], %s382
        %s384 = sand.u32 %s181, 1
        %s385 = smul.addr %s384, 8
        %s386 = scalar_lea.vmem [#allocation12], %s385
        %388 = vst [vmem:[#allocation2] sm:$0xff] 0
        %389 = vst [vmem:[#allocation2 + $0x8] sm:$0xff] 0
        %390 = vst [vmem:[#allocation2 + $0x20] sm:$0xff] 0
        %391 = vst [vmem:[#allocation2 + $0x28] sm:$0xff] 0
        %vm392 = vcmask 1043458
        %vm393 = vsmask.f32 3328
        %vm394 = vmand %vm392, %vm393
        %vm395 = vcmask 1047558
        %vm396 = vsmask.f32 7424
        %vm397 = vmand %vm395, %vm396
        %vm398 = vmor %vm397, %vm394
        %v399 = vld [vmem:[#allocation2 + $0x10] sm:$0xcc]
        %v400 = vsel %vm398, 0, %v399
        %401 = vst [vmem:[#allocation2 + $0x10] sm:$0xcc] %v400
        %v402 = vld [vmem:[#allocation2 + $0x18] sm:$0xcc]
        %v403 = vsel %vm398, 0, %v402
        %404 = vst [vmem:[#allocation2 + $0x18] sm:$0xcc] %v403
        %v405 = vld [vmem:[#allocation2 + $0x30] sm:$0xcc]
        %v406 = vsel %vm398, 0, %v405
        %407 = vst [vmem:[#allocation2 + $0x30] sm:$0xcc] %v406
        %v408 = vld [vmem:[#allocation2 + $0x38] sm:$0xcc]
        %v409 = vsel %vm398, 0, %v408
        %410 = vst [vmem:[#allocation2 + $0x38] sm:$0xcc] %v409
        %v411 = vld [vmem:[#allocation3] sm:$0xff]
        %v412 = vld [vmem:[#allocation3 + $0x8] sm:$0xff]
        %v413 = vld [vmem:[#allocation3 + $0x10] sm:$0xff]
        %v414 = vld [vmem:[#allocation3 + $0x18] sm:$0xff]
        %419 = vst [vmem:[#allocation1] ss:$2 sm:$0xff] %v411
        %s420 = scalar_lea.vmem [#allocation1], 16
        %421 = vst [vmem:[%s420] ss:$2 sm:$0xff] %v412
        %v422 = vld.sshfl [vmem:[#allocation1] sm:$0xff pattern:$0x75316420]
        %v423 = vld.sshfl [vmem:[#allocation1 + $0x8] sm:$0xff pattern:$0x75316420]
        %v424 = vld.sshfl [vmem:[#allocation1 + $0x10] sm:$0xff pattern:$0x75316420]
        %v425 = vld.sshfl [vmem:[#allocation1 + $0x18] sm:$0xff pattern:$0x75316420]
        %s426 = scalar_lea.vmem [#allocation1], 32
        %427 = vst [vmem:[%s426] ss:$2 sm:$0xff] %v413
        %s428 = scalar_lea.vmem [#allocation1], 48
        %429 = vst [vmem:[%s428] ss:$2 sm:$0xff] %v414
        %v430 = vld.sshfl [vmem:[#allocation1 + $0x20] sm:$0xff pattern:$0x75316420]
        %v431 = vld.sshfl [vmem:[#allocation1 + $0x28] sm:$0xff pattern:$0x75316420]
        %v432 = vld.sshfl [vmem:[#allocation1 + $0x30] sm:$0xff pattern:$0x75316420]
        %v433 = vld.sshfl [vmem:[#allocation1 + $0x38] sm:$0xff pattern:$0x75316420]
        %v442 = vpack.c.bf16 %v423, %v422
        %v443 = vpack.c.bf16 %v425, %v424
        %v444 = vpack.c.bf16 %v431, %v430
        %v445 = vpack.c.bf16 %v433, %v432
        %446 = vst [vmem:[#allocation2 + $0x10] sm:$0x33] %v442
        %447 = vst [vmem:[#allocation2 + $0x18] sm:$0x33] %v443
        %448 = vst [vmem:[#allocation2 + $0x30] sm:$0x33] %v444
        %449 = vst [vmem:[#allocation2 + $0x38] sm:$0x33] %v445
        %v450 = vld [vmem:[%s1] sm:$0xf]
        %vm451 = vcmp.ne.s32.totalorder %v450, 0
        %vm452 = vcmp.ne.s32.totalorder %v450, 1
        %v453 = vld [vmem:[#allocation2] sm:$0xcc]
        %v454 = vld [vmem:[#allocation2 + $0x8] sm:$0xcc]
        %v455 = vld [vmem:[#allocation2 + $0x10] sm:$0x11]
        %v456 = vld [vmem:[#allocation2 + $0x18] sm:$0x11]
        %v457 = vld [vmem:[%s318] sm:$0xf]
        %v458 = vld [vmem:[%s318 + $0x4] sm:$0xf]
        %v459 = vld [vmem:[%s318 + $0x8] sm:$0xf]
        %v460 = vld [vmem:[%s318 + $0xc] sm:$0xf]
        %v461 = vld [vmem:[%s318 + $0x10] sm:$0xf]
        %v462 = vld [vmem:[%s318 + $0x14] sm:$0xf]
        %v463 = vld [vmem:[%s318 + $0x18] sm:$0xf]
        %v464 = vld [vmem:[%s318 + $0x1c] sm:$0xf]
        %v465 = vld [vmem:[%s318 + $0x20] sm:$0xf]
        %v466 = vld [vmem:[%s318 + $0x24] sm:$0xf]
        %v467 = vld [vmem:[%s318 + $0x28] sm:$0xf]
        %v468 = vld [vmem:[%s318 + $0x2c] sm:$0xf]
        %v469 = vld [vmem:[%s318 + $0x30] sm:$0xf]
        %v470 = vld [vmem:[%s318 + $0x34] sm:$0xf]
        %v471 = vld [vmem:[%s318 + $0x38] sm:$0xf]
        %v472 = vld [vmem:[%s318 + $0x3c] sm:$0xf]
        %v473 = vld [vmem:[%s318 + $0x40] sm:$0xf]
        %v474 = vld [vmem:[%s318 + $0x44] sm:$0xf]
        %v475 = vld [vmem:[%s318 + $0x48] sm:$0xf]
        %v476 = vld [vmem:[%s318 + $0x4c] sm:$0xf]
        %v477 = vld [vmem:[%s318 + $0x50] sm:$0xf]
        %v478 = vld [vmem:[%s318 + $0x54] sm:$0xf]
        %v479 = vld [vmem:[%s318 + $0x58] sm:$0xf]
        %v480 = vld [vmem:[%s318 + $0x5c] sm:$0xf]
        %v481 = vld [vmem:[%s318 + $0x60] sm:$0xf]
        %v482 = vld [vmem:[%s318 + $0x64] sm:$0xf]
        %v483 = vld [vmem:[%s318 + $0x68] sm:$0xf]
        %v484 = vld [vmem:[%s318 + $0x6c] sm:$0xf]
        %v485 = vld [vmem:[%s318 + $0x70] sm:$0xf]
        %v486 = vld [vmem:[%s318 + $0x74] sm:$0xf]
        %v487 = vld [vmem:[%s318 + $0x78] sm:$0xf]
        %v488 = vld [vmem:[%s318 + $0x7c] sm:$0xf]
        %v489 = vld [vmem:[%s318 + $0x80] sm:$0xf]
        %v490 = vld [vmem:[%s318 + $0x84] sm:$0xf]
        %v491 = vld [vmem:[%s318 + $0x88] sm:$0xf]
        %v492 = vld [vmem:[%s318 + $0x8c] sm:$0xf]
        %v493 = vld [vmem:[%s318 + $0x90] sm:$0xf]
        %v494 = vld [vmem:[%s318 + $0x94] sm:$0xf]
        %v495 = vld [vmem:[%s318 + $0x98] sm:$0xf]
        %v496 = vld [vmem:[%s318 + $0x9c] sm:$0xf]
        %v497 = vld [vmem:[%s318 + $0xa0] sm:$0xf]
        %v498 = vld [vmem:[%s318 + $0xa4] sm:$0xf]
        %v499 = vld [vmem:[%s318 + $0xa8] sm:$0xf]
        %v500 = vld [vmem:[%s318 + $0xac] sm:$0xf]
        %v501 = vld [vmem:[%s318 + $0xb0] sm:$0xf]
        %v502 = vld [vmem:[%s318 + $0xb4] sm:$0xf]
        %v503 = vld [vmem:[%s318 + $0xb8] sm:$0xf]
        %v504 = vld [vmem:[%s318 + $0xbc] sm:$0xf]
        %v505 = vld [vmem:[%s318 + $0xc0] sm:$0xf]
        %v506 = vld [vmem:[%s318 + $0xc4] sm:$0xf]
        %v507 = vld [vmem:[%s318 + $0xc8] sm:$0xf]
        %v508 = vld [vmem:[%s318 + $0xcc] sm:$0xf]
        %v509 = vld [vmem:[%s318 + $0xd0] sm:$0xf]
        %v510 = vld [vmem:[%s318 + $0xd4] sm:$0xf]
        %v511 = vld [vmem:[%s318 + $0xd8] sm:$0xf]
        %v512 = vld [vmem:[%s318 + $0xdc] sm:$0xf]
        %v513 = vld [vmem:[%s318 + $0xe0] sm:$0xf]
        %v514 = vld [vmem:[%s318 + $0xe4] sm:$0xf]
        %v515 = vld [vmem:[%s318 + $0xe8] sm:$0xf]
        %v516 = vld [vmem:[%s318 + $0xec] sm:$0xf]
        %v517 = vld [vmem:[%s318 + $0xf0] sm:$0xf]
        %v518 = vld [vmem:[%s318 + $0xf4] sm:$0xf]
        %v519 = vld [vmem:[%s318 + $0xf8] sm:$0xf]
        %v520 = vld [vmem:[%s318 + $0xfc] sm:$0xf]
        %v525 = vunpack.c.l.b16 %v453
        %v526 = vunpack.c.h.b16 %v453
        %v527 = vunpack.c.l.b16 %v454
        %v528 = vunpack.c.h.b16 %v454
        %v529 = vunpack.c.l.b16 %v455
        %v530 = vunpack.c.h.b16 %v455
        %v531 = vunpack.c.l.b16 %v456
        %v532 = vunpack.c.h.b16 %v456
        %v533 = vpack.c.b16 %v529, %v525
        %v534 = vpack.c.b16 %v530, %v526
        %v535 = vpack.c.b16 %v531, %v527
        %v536 = vpack.c.b16 %v532, %v528
        %v538 = vshrl.u32 %v533, 16
        %v540 = vrot.slane %v538, 2
        %v541 = vshll.u32 %v533, 16
        %v543 = vrot.slane %v541, 3
        %v544 = vor.u32 %v540, %v543
        %v546 = vshrl.u32 %v534, 16
        %v548 = vrot.slane %v546, 2
        %v549 = vshll.u32 %v534, 16
        %v551 = vrot.slane %v549, 3
        %v552 = vor.u32 %v548, %v551
        %v554 = vshrl.u32 %v535, 16
        %v556 = vrot.slane %v554, 2
        %v557 = vshll.u32 %v535, 16
        %v559 = vrot.slane %v557, 3
        %v560 = vor.u32 %v556, %v559
        %v562 = vshrl.u32 %v536, 16
        %v564 = vrot.slane %v562, 2
        %v565 = vshll.u32 %v536, 16
        %v567 = vrot.slane %v565, 3
        %v568 = vor.u32 %v564, %v567
        %v637 = vunpack.c.l.b16 %v457
        %v638 = vunpack.c.l.b16 %v458
        %v639 = vunpack.c.l.b16 %v459
        %v640 = vunpack.c.l.b16 %v460
        %v641 = vunpack.c.l.b16 %v461
        %v642 = vunpack.c.l.b16 %v462
        %v643 = vunpack.c.l.b16 %v463
        %v644 = vunpack.c.l.b16 %v464
        %v645 = vunpack.c.l.b16 %v465
        %v646 = vunpack.c.l.b16 %v466
        %v647 = vunpack.c.l.b16 %v467
        %v648 = vunpack.c.l.b16 %v468
        %v649 = vunpack.c.l.b16 %v469
        %v650 = vunpack.c.l.b16 %v470
        %v651 = vunpack.c.l.b16 %v471
        %v652 = vunpack.c.l.b16 %v472
        %v653 = vunpack.c.l.b16 %v473
        %v654 = vunpack.c.l.b16 %v474
        %v655 = vunpack.c.l.b16 %v475
        %v656 = vunpack.c.l.b16 %v476
        %v657 = vunpack.c.l.b16 %v477
        %v658 = vunpack.c.l.b16 %v478
        %v659 = vunpack.c.l.b16 %v479
        %v660 = vunpack.c.l.b16 %v480
        %v661 = vunpack.c.l.b16 %v481
        %v662 = vunpack.c.l.b16 %v482
        %v663 = vunpack.c.l.b16 %v483
        %v664 = vunpack.c.l.b16 %v484
        %v665 = vunpack.c.l.b16 %v485
        %v666 = vunpack.c.l.b16 %v486
        %v667 = vunpack.c.l.b16 %v487
        %v668 = vunpack.c.l.b16 %v488
        %v669 = vunpack.c.l.b16 %v489
        %v670 = vunpack.c.l.b16 %v490
        %v671 = vunpack.c.l.b16 %v491
        %v672 = vunpack.c.l.b16 %v492
        %v673 = vunpack.c.l.b16 %v493
        %v674 = vunpack.c.l.b16 %v494
        %v675 = vunpack.c.l.b16 %v495
        %v676 = vunpack.c.l.b16 %v496
        %v677 = vunpack.c.l.b16 %v497
        %v678 = vunpack.c.l.b16 %v498
        %v679 = vunpack.c.l.b16 %v499
        %v680 = vunpack.c.l.b16 %v500
        %v681 = vunpack.c.l.b16 %v501
        %v682 = vunpack.c.l.b16 %v502
        %v683 = vunpack.c.l.b16 %v503
        %v684 = vunpack.c.l.b16 %v504
        %v685 = vunpack.c.l.b16 %v505
        %v686 = vunpack.c.l.b16 %v506
        %v687 = vunpack.c.l.b16 %v507
        %v688 = vunpack.c.l.b16 %v508
        %v689 = vunpack.c.l.b16 %v509
        %v690 = vunpack.c.l.b16 %v510
        %v691 = vunpack.c.l.b16 %v511
        %v692 = vunpack.c.l.b16 %v512
        %v693 = vunpack.c.l.b16 %v513
        %v694 = vunpack.c.l.b16 %v514
        %v695 = vunpack.c.l.b16 %v515
        %v696 = vunpack.c.l.b16 %v516
        %v697 = vunpack.c.l.b16 %v517
        %v698 = vunpack.c.l.b16 %v518
        %v699 = vunpack.c.l.b16 %v519
        %v700 = vunpack.c.l.b16 %v520
        %v701 = vpack.c.b16 %v638, %v637
        %v702 = vpack.c.b16 %v640, %v639
        %v703 = vpack.c.b16 %v642, %v641
        %v704 = vpack.c.b16 %v644, %v643
        %v705 = vpack.c.b16 %v646, %v645
        %v706 = vpack.c.b16 %v648, %v647
        %v707 = vpack.c.b16 %v650, %v649
        %v708 = vpack.c.b16 %v652, %v651
        %v709 = vpack.c.b16 %v654, %v653
        %v710 = vpack.c.b16 %v656, %v655
        %v711 = vpack.c.b16 %v658, %v657
        %v712 = vpack.c.b16 %v660, %v659
        %v713 = vpack.c.b16 %v662, %v661
        %v714 = vpack.c.b16 %v664, %v663
        %v715 = vpack.c.b16 %v666, %v665
        %v716 = vpack.c.b16 %v668, %v667
        %v717 = vpack.c.b16 %v670, %v669
        %v718 = vpack.c.b16 %v672, %v671
        %v719 = vpack.c.b16 %v674, %v673
        %v720 = vpack.c.b16 %v676, %v675
        %v721 = vpack.c.b16 %v678, %v677
        %v722 = vpack.c.b16 %v680, %v679
        %v723 = vpack.c.b16 %v682, %v681
        %v724 = vpack.c.b16 %v684, %v683
        %v725 = vpack.c.b16 %v686, %v685
        %v726 = vpack.c.b16 %v688, %v687
        %v727 = vpack.c.b16 %v690, %v689
        %v728 = vpack.c.b16 %v692, %v691
        %v729 = vpack.c.b16 %v694, %v693
        %v730 = vpack.c.b16 %v696, %v695
        %v731 = vpack.c.b16 %v698, %v697
        %v732 = vpack.c.b16 %v700, %v699
        %765 = vmatpush.bf16.msra.mxu0 %v708
        %766 = vmatpush.bf16.msra.mxu0 %v707
        %767 = vmatpush.bf16.msra.mxu0 %v706
        %768 = vmatpush.bf16.msra.mxu0 %v705
        %769 = vmatpush.bf16.msra.mxu0 %v704
        %770 = vmatpush.bf16.msra.mxu0 %v703
        %771 = vmatpush.bf16.msra.mxu0 %v702
        %772 = vmatpush.bf16.msra.mxu0 %v701
        %773 = vmatmul.bf16.gmra.mxu0 %v544
        %v774 = vpop.f32.mrf.mxu0
        %v775 = vadd.f32 0.0, %v774
        %v776 = vpop.f32.mrf.mxu0
        %777 = vdwg.mxu0
        %778 = vmatpush.bf16.msra.mxu0 %v716
        %779 = vmatpush.bf16.msra.mxu0 %v715
        %780 = vmatpush.bf16.msra.mxu0 %v714
        %781 = vmatpush.bf16.msra.mxu0 %v713
        %782 = vmatpush.bf16.msra.mxu0 %v712
        %783 = vmatpush.bf16.msra.mxu0 %v711
        %784 = vmatpush.bf16.msra.mxu0 %v710
        %785 = vmatpush.bf16.msra.mxu0 %v709
        %786 = vmatmul.bf16.gmra.mxu0 %v552
        %v787 = vpop.f32.mrf.mxu0
        %v788 = vadd.f32 %v775, %v787
        %v789 = vpop.f32.mrf.mxu0
        %790 = vdwg.mxu0
        %791 = vmatpush.bf16.msra.mxu0 %v724
        %792 = vmatpush.bf16.msra.mxu0 %v723
        %793 = vmatpush.bf16.msra.mxu0 %v722
        %794 = vmatpush.bf16.msra.mxu0 %v721
        %795 = vmatpush.bf16.msra.mxu0 %v720
        %796 = vmatpush.bf16.msra.mxu0 %v719
        %797 = vmatpush.bf16.msra.mxu0 %v718
        %798 = vmatpush.bf16.msra.mxu0 %v717
        %799 = vmatmul.bf16.gmra.mxu0 %v560
        %v800 = vpop.f32.mrf.mxu0
        %v801 = vadd.f32 %v788, %v800
        %v802 = vpop.f32.mrf.mxu0
        %803 = vdwg.mxu0
        %804 = vmatpush.bf16.msra.mxu0 %v732
        %805 = vmatpush.bf16.msra.mxu0 %v731
        %806 = vmatpush.bf16.msra.mxu0 %v730
        %807 = vmatpush.bf16.msra.mxu0 %v729
        %808 = vmatpush.bf16.msra.mxu0 %v728
        %809 = vmatpush.bf16.msra.mxu0 %v727
        %810 = vmatpush.bf16.msra.mxu0 %v726
        %811 = vmatpush.bf16.msra.mxu0 %v725
        %812 = vmatmul.bf16.gmra.mxu0 %v568
        %v813 = vpop.f32.mrf.mxu0
        %v814 = vadd.f32 %v801, %v813
        %v815 = vpop.f32.mrf.mxu0
        %816 = vdwg.mxu0
        %v817 = vsel %vm451, 1, 0
        %818 = vset.pattern.permute.xlu0 0
        %819 = vperm.xlu0 %818, %v817
        %v820 = vpop.permute.xlu0 %819
        %vm821 = vcmp.eq.s32.totalorder %v820, 1
        %v822 = vsel %vm821, %v814, 0.0
        %v823 = vadd.f32 %v822, 0.0
        %v824 = vld [vmem:[#allocation2] sm:$0x88]
        %v825 = vld [vmem:[#allocation2 + $0x8] sm:$0x88]
        %s826 = scalar_lea.vmem %s318, 256 [#allocation6]
        %v827 = vld [vmem:[%s826] sm:$0xf]
        %v828 = vld [vmem:[%s826 + $0x4] sm:$0xf]
        %v829 = vld [vmem:[%s826 + $0x8] sm:$0xf]
        %v830 = vld [vmem:[%s826 + $0xc] sm:$0xf]
        %v831 = vld [vmem:[%s826 + $0x10] sm:$0xf]
        %v832 = vld [vmem:[%s826 + $0x14] sm:$0xf]
        %v833 = vld [vmem:[%s826 + $0x18] sm:$0xf]
        %v834 = vld [vmem:[%s826 + $0x1c] sm:$0xf]
        %v835 = vld [vmem:[%s826 + $0x20] sm:$0xf]
        %v836 = vld [vmem:[%s826 + $0x24] sm:$0xf]
        %v837 = vld [vmem:[%s826 + $0x28] sm:$0xf]
        %v838 = vld [vmem:[%s826 + $0x2c] sm:$0xf]
        %v839 = vld [vmem:[%s826 + $0x30] sm:$0xf]
        %v840 = vld [vmem:[%s826 + $0x34] sm:$0xf]
        %v841 = vld [vmem:[%s826 + $0x38] sm:$0xf]
        %v842 = vld [vmem:[%s826 + $0x3c] sm:$0xf]
        %v843 = vld [vmem:[%s826 + $0x40] sm:$0xf]
        %v844 = vld [vmem:[%s826 + $0x44] sm:$0xf]
        %v845 = vld [vmem:[%s826 + $0x48] sm:$0xf]
        %v846 = vld [vmem:[%s826 + $0x4c] sm:$0xf]
        %v847 = vld [vmem:[%s826 + $0x50] sm:$0xf]
        %v848 = vld [vmem:[%s826 + $0x54] sm:$0xf]
        %v849 = vld [vmem:[%s826 + $0x58] sm:$0xf]
        %v850 = vld [vmem:[%s826 + $0x5c] sm:$0xf]
        %v851 = vld [vmem:[%s826 + $0x60] sm:$0xf]
        %v852 = vld [vmem:[%s826 + $0x64] sm:$0xf]
        %v853 = vld [vmem:[%s826 + $0x68] sm:$0xf]
        %v854 = vld [vmem:[%s826 + $0x6c] sm:$0xf]
        %v855 = vld [vmem:[%s826 + $0x70] sm:$0xf]
        %v856 = vld [vmem:[%s826 + $0x74] sm:$0xf]
        %v857 = vld [vmem:[%s826 + $0x78] sm:$0xf]
        %v858 = vld [vmem:[%s826 + $0x7c] sm:$0xf]
        %v859 = vld [vmem:[%s826 + $0x80] sm:$0xf]
        %v860 = vld [vmem:[%s826 + $0x84] sm:$0xf]
        %v861 = vld [vmem:[%s826 + $0x88] sm:$0xf]
        %v862 = vld [vmem:[%s826 + $0x8c] sm:$0xf]
        %v863 = vld [vmem:[%s826 + $0x90] sm:$0xf]
        %v864 = vld [vmem:[%s826 + $0x94] sm:$0xf]
        %v865 = vld [vmem:[%s826 + $0x98] sm:$0xf]
        %v866 = vld [vmem:[%s826 + $0x9c] sm:$0xf]
        %v867 = vld [vmem:[%s826 + $0xa0] sm:$0xf]
        %v868 = vld [vmem:[%s826 + $0xa4] sm:$0xf]
        %v869 = vld [vmem:[%s826 + $0xa8] sm:$0xf]
        %v870 = vld [vmem:[%s826 + $0xac] sm:$0xf]
        %v871 = vld [vmem:[%s826 + $0xb0] sm:$0xf]
        %v872 = vld [vmem:[%s826 + $0xb4] sm:$0xf]
        %v873 = vld [vmem:[%s826 + $0xb8] sm:$0xf]
        %v874 = vld [vmem:[%s826 + $0xbc] sm:$0xf]
        %v875 = vld [vmem:[%s826 + $0xc0] sm:$0xf]
        %v876 = vld [vmem:[%s826 + $0xc4] sm:$0xf]
        %v877 = vld [vmem:[%s826 + $0xc8] sm:$0xf]
        %v878 = vld [vmem:[%s826 + $0xcc] sm:$0xf]
        %v879 = vld [vmem:[%s826 + $0xd0] sm:$0xf]
        %v880 = vld [vmem:[%s826 + $0xd4] sm:$0xf]
        %v881 = vld [vmem:[%s826 + $0xd8] sm:$0xf]
        %v882 = vld [vmem:[%s826 + $0xdc] sm:$0xf]
        %v883 = vld [vmem:[%s826 + $0xe0] sm:$0xf]
        %v884 = vld [vmem:[%s826 + $0xe4] sm:$0xf]
        %v885 = vld [vmem:[%s826 + $0xe8] sm:$0xf]
        %v886 = vld [vmem:[%s826 + $0xec] sm:$0xf]
        %v887 = vld [vmem:[%s826 + $0xf0] sm:$0xf]
        %v888 = vld [vmem:[%s826 + $0xf4] sm:$0xf]
        %v889 = vld [vmem:[%s826 + $0xf8] sm:$0xf]
        %v890 = vld [vmem:[%s826 + $0xfc] sm:$0xf]
        %v893 = vunpack.c.l.b16 %v824
        %v894 = vunpack.c.h.b16 %v824
        %v895 = vunpack.c.l.b16 %v825
        %v896 = vunpack.c.h.b16 %v825
        %v897 = vpack.c.b16 %v529, %v893
        %v898 = vpack.c.b16 %v530, %v894
        %v899 = vpack.c.b16 %v531, %v895
        %v900 = vpack.c.b16 %v532, %v896
        %v901 = vrot.slane %v897, 3
        %v902 = vrot.slane %v898, 3
        %v903 = vrot.slane %v899, 3
        %v904 = vrot.slane %v900, 3
        %v973 = vunpack.c.l.b16 %v827
        %v974 = vunpack.c.l.b16 %v828
        %v975 = vunpack.c.l.b16 %v829
        %v976 = vunpack.c.l.b16 %v830
        %v977 = vunpack.c.l.b16 %v831
        %v978 = vunpack.c.l.b16 %v832
        %v979 = vunpack.c.l.b16 %v833
        %v980 = vunpack.c.l.b16 %v834
        %v981 = vunpack.c.l.b16 %v835
        %v982 = vunpack.c.l.b16 %v836
        %v983 = vunpack.c.l.b16 %v837
        %v984 = vunpack.c.l.b16 %v838
        %v985 = vunpack.c.l.b16 %v839
        %v986 = vunpack.c.l.b16 %v840
        %v987 = vunpack.c.l.b16 %v841
        %v988 = vunpack.c.l.b16 %v842
        %v989 = vunpack.c.l.b16 %v843
        %v990 = vunpack.c.l.b16 %v844
        %v991 = vunpack.c.l.b16 %v845
        %v992 = vunpack.c.l.b16 %v846
        %v993 = vunpack.c.l.b16 %v847
        %v994 = vunpack.c.l.b16 %v848
        %v995 = vunpack.c.l.b16 %v849
        %v996 = vunpack.c.l.b16 %v850
        %v997 = vunpack.c.l.b16 %v851
        %v998 = vunpack.c.l.b16 %v852
        %v999 = vunpack.c.l.b16 %v853
        %v1000 = vunpack.c.l.b16 %v854
        %v1001 = vunpack.c.l.b16 %v855
        %v1002 = vunpack.c.l.b16 %v856
        %v1003 = vunpack.c.l.b16 %v857
        %v1004 = vunpack.c.l.b16 %v858
        %v1005 = vunpack.c.l.b16 %v859
        %v1006 = vunpack.c.l.b16 %v860
        %v1007 = vunpack.c.l.b16 %v861
        %v1008 = vunpack.c.l.b16 %v862
        %v1009 = vunpack.c.l.b16 %v863
        %v1010 = vunpack.c.l.b16 %v864
        %v1011 = vunpack.c.l.b16 %v865
        %v1012 = vunpack.c.l.b16 %v866
        %v1013 = vunpack.c.l.b16 %v867
        %v1014 = vunpack.c.l.b16 %v868
        %v1015 = vunpack.c.l.b16 %v869
        %v1016 = vunpack.c.l.b16 %v870
        %v1017 = vunpack.c.l.b16 %v871
        %v1018 = vunpack.c.l.b16 %v872
        %v1019 = vunpack.c.l.b16 %v873
        %v1020 = vunpack.c.l.b16 %v874
        %v1021 = vunpack.c.l.b16 %v875
        %v1022 = vunpack.c.l.b16 %v876
        %v1023 = vunpack.c.l.b16 %v877
        %v1024 = vunpack.c.l.b16 %v878
        %v1025 = vunpack.c.l.b16 %v879
        %v1026 = vunpack.c.l.b16 %v880
        %v1027 = vunpack.c.l.b16 %v881
        %v1028 = vunpack.c.l.b16 %v882
        %v1029 = vunpack.c.l.b16 %v883
        %v1030 = vunpack.c.l.b16 %v884
        %v1031 = vunpack.c.l.b16 %v885
        %v1032 = vunpack.c.l.b16 %v886
        %v1033 = vunpack.c.l.b16 %v887
        %v1034 = vunpack.c.l.b16 %v888
        %v1035 = vunpack.c.l.b16 %v889
        %v1036 = vunpack.c.l.b16 %v890
        %v1037 = vpack.c.b16 %v974, %v973
        %v1038 = vpack.c.b16 %v976, %v975
        %v1039 = vpack.c.b16 %v978, %v977
        %v1040 = vpack.c.b16 %v980, %v979
        %v1041 = vpack.c.b16 %v982, %v981
        %v1042 = vpack.c.b16 %v984, %v983
        %v1043 = vpack.c.b16 %v986, %v985
        %v1044 = vpack.c.b16 %v988, %v987
        %v1045 = vpack.c.b16 %v990, %v989
        %v1046 = vpack.c.b16 %v992, %v991
        %v1047 = vpack.c.b16 %v994, %v993
        %v1048 = vpack.c.b16 %v996, %v995
        %v1049 = vpack.c.b16 %v998, %v997
        %v1050 = vpack.c.b16 %v1000, %v999
        %v1051 = vpack.c.b16 %v1002, %v1001
        %v1052 = vpack.c.b16 %v1004, %v1003
        %v1053 = vpack.c.b16 %v1006, %v1005
        %v1054 = vpack.c.b16 %v1008, %v1007
        %v1055 = vpack.c.b16 %v1010, %v1009
        %v1056 = vpack.c.b16 %v1012, %v1011
        %v1057 = vpack.c.b16 %v1014, %v1013
        %v1058 = vpack.c.b16 %v1016, %v1015
        %v1059 = vpack.c.b16 %v1018, %v1017
        %v1060 = vpack.c.b16 %v1020, %v1019
        %v1061 = vpack.c.b16 %v1022, %v1021
        %v1062 = vpack.c.b16 %v1024, %v1023
        %v1063 = vpack.c.b16 %v1026, %v1025
        %v1064 = vpack.c.b16 %v1028, %v1027
        %v1065 = vpack.c.b16 %v1030, %v1029
        %v1066 = vpack.c.b16 %v1032, %v1031
        %v1067 = vpack.c.b16 %v1034, %v1033
        %v1068 = vpack.c.b16 %v1036, %v1035
        %1101 = vmatpush.bf16.msra.mxu0 %v1044
        %1102 = vmatpush.bf16.msra.mxu0 %v1043
        %1103 = vmatpush.bf16.msra.mxu0 %v1042
        %1104 = vmatpush.bf16.msra.mxu0 %v1041
        %1105 = vmatpush.bf16.msra.mxu0 %v1040
        %1106 = vmatpush.bf16.msra.mxu0 %v1039
        %1107 = vmatpush.bf16.msra.mxu0 %v1038
        %1108 = vmatpush.bf16.msra.mxu0 %v1037
        %1109 = vmatmul.bf16.gmra.mxu0 %v901
        %v1110 = vpop.f32.mrf.mxu0
        %v1111 = vadd.f32 0.0, %v1110
        %v1112 = vpop.f32.mrf.mxu0
        %1113 = vdwg.mxu0
        %1114 = vmatpush.bf16.msra.mxu0 %v1052
        %1115 = vmatpush.bf16.msra.mxu0 %v1051
        %1116 = vmatpush.bf16.msra.mxu0 %v1050
        %1117 = vmatpush.bf16.msra.mxu0 %v1049
        %1118 = vmatpush.bf16.msra.mxu0 %v1048
        %1119 = vmatpush.bf16.msra.mxu0 %v1047
        %1120 = vmatpush.bf16.msra.mxu0 %v1046
        %1121 = vmatpush.bf16.msra.mxu0 %v1045
        %1122 = vmatmul.bf16.gmra.mxu0 %v902
        %v1123 = vpop.f32.mrf.mxu0
        %v1124 = vadd.f32 %v1111, %v1123
        %v1125 = vpop.f32.mrf.mxu0
        %1126 = vdwg.mxu0
        %1127 = vmatpush.bf16.msra.mxu0 %v1060
        %1128 = vmatpush.bf16.msra.mxu0 %v1059
        %1129 = vmatpush.bf16.msra.mxu0 %v1058
        %1130 = vmatpush.bf16.msra.mxu0 %v1057
        %1131 = vmatpush.bf16.msra.mxu0 %v1056
        %1132 = vmatpush.bf16.msra.mxu0 %v1055
        %1133 = vmatpush.bf16.msra.mxu0 %v1054
        %1134 = vmatpush.bf16.msra.mxu0 %v1053
        %1135 = vmatmul.bf16.gmra.mxu0 %v903
        %v1136 = vpop.f32.mrf.mxu0
        %v1137 = vadd.f32 %v1124, %v1136
        %v1138 = vpop.f32.mrf.mxu0
        %1139 = vdwg.mxu0
        %1140 = vmatpush.bf16.msra.mxu0 %v1068
        %1141 = vmatpush.bf16.msra.mxu0 %v1067
        %1142 = vmatpush.bf16.msra.mxu0 %v1066
        %1143 = vmatpush.bf16.msra.mxu0 %v1065
        %1144 = vmatpush.bf16.msra.mxu0 %v1064
        %1145 = vmatpush.bf16.msra.mxu0 %v1063
        %1146 = vmatpush.bf16.msra.mxu0 %v1062
        %1147 = vmatpush.bf16.msra.mxu0 %v1061
        %1148 = vmatmul.bf16.gmra.mxu0 %v904
        %v1149 = vpop.f32.mrf.mxu0
        %v1150 = vadd.f32 %v1137, %v1149
        %v1151 = vpop.f32.mrf.mxu0
        %1152 = vdwg.mxu0
        %v1153 = vadd.f32 %v823, %v1150
        %v1154 = vld [vmem:[#allocation2 + $0x10] sm:$0x33]
        %v1155 = vld [vmem:[#allocation2 + $0x18] sm:$0x33]
        %s1156 = scalar_lea.vmem %s318, 512 [#allocation6]
        %v1157 = vld [vmem:[%s1156] sm:$0xf]
        %v1158 = vld [vmem:[%s1156 + $0x4] sm:$0xf]
        %v1159 = vld [vmem:[%s1156 + $0x8] sm:$0xf]
        %v1160 = vld [vmem:[%s1156 + $0xc] sm:$0xf]
        %v1161 = vld [vmem:[%s1156 + $0x10] sm:$0xf]
        %v1162 = vld [vmem:[%s1156 + $0x14] sm:$0xf]
        %v1163 = vld [vmem:[%s1156 + $0x18] sm:$0xf]
        %v1164 = vld [vmem:[%s1156 + $0x1c] sm:$0xf]
        %v1165 = vld [vmem:[%s1156 + $0x20] sm:$0xf]
        %v1166 = vld [vmem:[%s1156 + $0x24] sm:$0xf]
        %v1167 = vld [vmem:[%s1156 + $0x28] sm:$0xf]
        %v1168 = vld [vmem:[%s1156 + $0x2c] sm:$0xf]
        %v1169 = vld [vmem:[%s1156 + $0x30] sm:$0xf]
        %v1170 = vld [vmem:[%s1156 + $0x34] sm:$0xf]
        %v1171 = vld [vmem:[%s1156 + $0x38] sm:$0xf]
        %v1172 = vld [vmem:[%s1156 + $0x3c] sm:$0xf]
        %v1173 = vld [vmem:[%s1156 + $0x40] sm:$0xf]
        %v1174 = vld [vmem:[%s1156 + $0x44] sm:$0xf]
        %v1175 = vld [vmem:[%s1156 + $0x48] sm:$0xf]
        %v1176 = vld [vmem:[%s1156 + $0x4c] sm:$0xf]
        %v1177 = vld [vmem:[%s1156 + $0x50] sm:$0xf]
        %v1178 = vld [vmem:[%s1156 + $0x54] sm:$0xf]
        %v1179 = vld [vmem:[%s1156 + $0x58] sm:$0xf]
        %v1180 = vld [vmem:[%s1156 + $0x5c] sm:$0xf]
        %v1181 = vld [vmem:[%s1156 + $0x60] sm:$0xf]
        %v1182 = vld [vmem:[%s1156 + $0x64] sm:$0xf]
        %v1183 = vld [vmem:[%s1156 + $0x68] sm:$0xf]
        %v1184 = vld [vmem:[%s1156 + $0x6c] sm:$0xf]
        %v1185 = vld [vmem:[%s1156 + $0x70] sm:$0xf]
        %v1186 = vld [vmem:[%s1156 + $0x74] sm:$0xf]
        %v1187 = vld [vmem:[%s1156 + $0x78] sm:$0xf]
        %v1188 = vld [vmem:[%s1156 + $0x7c] sm:$0xf]
        %v1189 = vld [vmem:[%s1156 + $0x80] sm:$0xf]
        %v1190 = vld [vmem:[%s1156 + $0x84] sm:$0xf]
        %v1191 = vld [vmem:[%s1156 + $0x88] sm:$0xf]
        %v1192 = vld [vmem:[%s1156 + $0x8c] sm:$0xf]
        %v1193 = vld [vmem:[%s1156 + $0x90] sm:$0xf]
        %v1194 = vld [vmem:[%s1156 + $0x94] sm:$0xf]
        %v1195 = vld [vmem:[%s1156 + $0x98] sm:$0xf]
        %v1196 = vld [vmem:[%s1156 + $0x9c] sm:$0xf]
        %v1197 = vld [vmem:[%s1156 + $0xa0] sm:$0xf]
        %v1198 = vld [vmem:[%s1156 + $0xa4] sm:$0xf]
        %v1199 = vld [vmem:[%s1156 + $0xa8] sm:$0xf]
        %v1200 = vld [vmem:[%s1156 + $0xac] sm:$0xf]
        %v1201 = vld [vmem:[%s1156 + $0xb0] sm:$0xf]
        %v1202 = vld [vmem:[%s1156 + $0xb4] sm:$0xf]
        %v1203 = vld [vmem:[%s1156 + $0xb8] sm:$0xf]
        %v1204 = vld [vmem:[%s1156 + $0xbc] sm:$0xf]
        %v1205 = vld [vmem:[%s1156 + $0xc0] sm:$0xf]
        %v1206 = vld [vmem:[%s1156 + $0xc4] sm:$0xf]
        %v1207 = vld [vmem:[%s1156 + $0xc8] sm:$0xf]
        %v1208 = vld [vmem:[%s1156 + $0xcc] sm:$0xf]
        %v1209 = vld [vmem:[%s1156 + $0xd0] sm:$0xf]
        %v1210 = vld [vmem:[%s1156 + $0xd4] sm:$0xf]
        %v1211 = vld [vmem:[%s1156 + $0xd8] sm:$0xf]
        %v1212 = vld [vmem:[%s1156 + $0xdc] sm:$0xf]
        %v1213 = vld [vmem:[%s1156 + $0xe0] sm:$0xf]
        %v1214 = vld [vmem:[%s1156 + $0xe4] sm:$0xf]
        %v1215 = vld [vmem:[%s1156 + $0xe8] sm:$0xf]
        %v1216 = vld [vmem:[%s1156 + $0xec] sm:$0xf]
        %v1217 = vld [vmem:[%s1156 + $0xf0] sm:$0xf]
        %v1218 = vld [vmem:[%s1156 + $0xf4] sm:$0xf]
        %v1219 = vld [vmem:[%s1156 + $0xf8] sm:$0xf]
        %v1220 = vld [vmem:[%s1156 + $0xfc] sm:$0xf]
        %v1223 = vunpack.c.l.b16 %v1154
        %v1224 = vunpack.c.h.b16 %v1154
        %v1225 = vunpack.c.l.b16 %v1155
        %v1226 = vunpack.c.h.b16 %v1155
        %v1227 = vpack.c.b16 %v1223, %v893
        %v1228 = vpack.c.b16 %v1224, %v894
        %v1229 = vpack.c.b16 %v1225, %v895
        %v1230 = vpack.c.b16 %v1226, %v896
        %v1232 = vshrl.u32 %v1227, 16
        %v1234 = vrot.slane %v1232, 3
        %v1235 = vshll.u32 %v1227, 16
        %v1237 = vrot.slane %v1235, 4
        %v1238 = vor.u32 %v1234, %v1237
        %v1240 = vshrl.u32 %v1228, 16
        %v1242 = vrot.slane %v1240, 3
        %v1243 = vshll.u32 %v1228, 16
        %v1245 = vrot.slane %v1243, 4
        %v1246 = vor.u32 %v1242, %v1245
        %v1248 = vshrl.u32 %v1229, 16
        %v1250 = vrot.slane %v1248, 3
        %v1251 = vshll.u32 %v1229, 16
        %v1253 = vrot.slane %v1251, 4
        %v1254 = vor.u32 %v1250, %v1253
        %v1256 = vshrl.u32 %v1230, 16
        %v1258 = vrot.slane %v1256, 3
        %v1259 = vshll.u32 %v1230, 16
        %v1261 = vrot.slane %v1259, 4
        %v1262 = vor.u32 %v1258, %v1261
        %v1331 = vunpack.c.l.b16 %v1157
        %v1332 = vunpack.c.l.b16 %v1158
        %v1333 = vunpack.c.l.b16 %v1159
        %v1334 = vunpack.c.l.b16 %v1160
        %v1335 = vunpack.c.l.b16 %v1161
        %v1336 = vunpack.c.l.b16 %v1162
        %v1337 = vunpack.c.l.b16 %v1163
        %v1338 = vunpack.c.l.b16 %v1164
        %v1339 = vunpack.c.l.b16 %v1165
        %v1340 = vunpack.c.l.b16 %v1166
        %v1341 = vunpack.c.l.b16 %v1167
        %v1342 = vunpack.c.l.b16 %v1168
        %v1343 = vunpack.c.l.b16 %v1169
        %v1344 = vunpack.c.l.b16 %v1170
        %v1345 = vunpack.c.l.b16 %v1171
        %v1346 = vunpack.c.l.b16 %v1172
        %v1347 = vunpack.c.l.b16 %v1173
        %v1348 = vunpack.c.l.b16 %v1174
        %v1349 = vunpack.c.l.b16 %v1175
        %v1350 = vunpack.c.l.b16 %v1176
        %v1351 = vunpack.c.l.b16 %v1177
        %v1352 = vunpack.c.l.b16 %v1178
        %v1353 = vunpack.c.l.b16 %v1179
        %v1354 = vunpack.c.l.b16 %v1180
        %v1355 = vunpack.c.l.b16 %v1181
        %v1356 = vunpack.c.l.b16 %v1182
        %v1357 = vunpack.c.l.b16 %v1183
        %v1358 = vunpack.c.l.b16 %v1184
        %v1359 = vunpack.c.l.b16 %v1185
        %v1360 = vunpack.c.l.b16 %v1186
        %v1361 = vunpack.c.l.b16 %v1187
        %v1362 = vunpack.c.l.b16 %v1188
        %v1363 = vunpack.c.l.b16 %v1189
        %v1364 = vunpack.c.l.b16 %v1190
        %v1365 = vunpack.c.l.b16 %v1191
        %v1366 = vunpack.c.l.b16 %v1192
        %v1367 = vunpack.c.l.b16 %v1193
        %v1368 = vunpack.c.l.b16 %v1194
        %v1369 = vunpack.c.l.b16 %v1195
        %v1370 = vunpack.c.l.b16 %v1196
        %v1371 = vunpack.c.l.b16 %v1197
        %v1372 = vunpack.c.l.b16 %v1198
        %v1373 = vunpack.c.l.b16 %v1199
        %v1374 = vunpack.c.l.b16 %v1200
        %v1375 = vunpack.c.l.b16 %v1201
        %v1376 = vunpack.c.l.b16 %v1202
        %v1377 = vunpack.c.l.b16 %v1203
        %v1378 = vunpack.c.l.b16 %v1204
        %v1379 = vunpack.c.l.b16 %v1205
        %v1380 = vunpack.c.l.b16 %v1206
        %v1381 = vunpack.c.l.b16 %v1207
        %v1382 = vunpack.c.l.b16 %v1208
        %v1383 = vunpack.c.l.b16 %v1209
        %v1384 = vunpack.c.l.b16 %v1210
        %v1385 = vunpack.c.l.b16 %v1211
        %v1386 = vunpack.c.l.b16 %v1212
        %v1387 = vunpack.c.l.b16 %v1213
        %v1388 = vunpack.c.l.b16 %v1214
        %v1389 = vunpack.c.l.b16 %v1215
        %v1390 = vunpack.c.l.b16 %v1216
        %v1391 = vunpack.c.l.b16 %v1217
        %v1392 = vunpack.c.l.b16 %v1218
        %v1393 = vunpack.c.l.b16 %v1219
        %v1394 = vunpack.c.l.b16 %v1220
        %v1395 = vpack.c.b16 %v1332, %v1331
        %v1396 = vpack.c.b16 %v1334, %v1333
        %v1397 = vpack.c.b16 %v1336, %v1335
        %v1398 = vpack.c.b16 %v1338, %v1337
        %v1399 = vpack.c.b16 %v1340, %v1339
        %v1400 = vpack.c.b16 %v1342, %v1341
        %v1401 = vpack.c.b16 %v1344, %v1343
        %v1402 = vpack.c.b16 %v1346, %v1345
        %v1403 = vpack.c.b16 %v1348, %v1347
        %v1404 = vpack.c.b16 %v1350, %v1349
        %v1405 = vpack.c.b16 %v1352, %v1351
        %v1406 = vpack.c.b16 %v1354, %v1353
        %v1407 = vpack.c.b16 %v1356, %v1355
        %v1408 = vpack.c.b16 %v1358, %v1357
        %v1409 = vpack.c.b16 %v1360, %v1359
        %v1410 = vpack.c.b16 %v1362, %v1361
        %v1411 = vpack.c.b16 %v1364, %v1363
        %v1412 = vpack.c.b16 %v1366, %v1365
        %v1413 = vpack.c.b16 %v1368, %v1367
        %v1414 = vpack.c.b16 %v1370, %v1369
        %v1415 = vpack.c.b16 %v1372, %v1371
        %v1416 = vpack.c.b16 %v1374, %v1373
        %v1417 = vpack.c.b16 %v1376, %v1375
        %v1418 = vpack.c.b16 %v1378, %v1377
        %v1419 = vpack.c.b16 %v1380, %v1379
        %v1420 = vpack.c.b16 %v1382, %v1381
        %v1421 = vpack.c.b16 %v1384, %v1383
        %v1422 = vpack.c.b16 %v1386, %v1385
        %v1423 = vpack.c.b16 %v1388, %v1387
        %v1424 = vpack.c.b16 %v1390, %v1389
        %v1425 = vpack.c.b16 %v1392, %v1391
        %v1426 = vpack.c.b16 %v1394, %v1393
        %1459 = vmatpush.bf16.msra.mxu0 %v1402
        %1460 = vmatpush.bf16.msra.mxu0 %v1401
        %1461 = vmatpush.bf16.msra.mxu0 %v1400
        %1462 = vmatpush.bf16.msra.mxu0 %v1399
        %1463 = vmatpush.bf16.msra.mxu0 %v1398
        %1464 = vmatpush.bf16.msra.mxu0 %v1397
        %1465 = vmatpush.bf16.msra.mxu0 %v1396
        %1466 = vmatpush.bf16.msra.mxu0 %v1395
        %1467 = vmatmul.bf16.gmra.mxu0 %v1238
        %v1468 = vpop.f32.mrf.mxu0
        %v1469 = vadd.f32 0.0, %v1468
        %v1470 = vpop.f32.mrf.mxu0
        %1471 = vdwg.mxu0
        %1472 = vmatpush.bf16.msra.mxu0 %v1410
        %1473 = vmatpush.bf16.msra.mxu0 %v1409
        %1474 = vmatpush.bf16.msra.mxu0 %v1408
        %1475 = vmatpush.bf16.msra.mxu0 %v1407
        %1476 = vmatpush.bf16.msra.mxu0 %v1406
        %1477 = vmatpush.bf16.msra.mxu0 %v1405
        %1478 = vmatpush.bf16.msra.mxu0 %v1404
        %1479 = vmatpush.bf16.msra.mxu0 %v1403
        %1480 = vmatmul.bf16.gmra.mxu0 %v1246
        %v1481 = vpop.f32.mrf.mxu0
        %v1482 = vadd.f32 %v1469, %v1481
        %v1483 = vpop.f32.mrf.mxu0
        %1484 = vdwg.mxu0
        %1485 = vmatpush.bf16.msra.mxu0 %v1418
        %1486 = vmatpush.bf16.msra.mxu0 %v1417
        %1487 = vmatpush.bf16.msra.mxu0 %v1416
        %1488 = vmatpush.bf16.msra.mxu0 %v1415
        %1489 = vmatpush.bf16.msra.mxu0 %v1414
        %1490 = vmatpush.bf16.msra.mxu0 %v1413
        %1491 = vmatpush.bf16.msra.mxu0 %v1412
        %1492 = vmatpush.bf16.msra.mxu0 %v1411
        %1493 = vmatmul.bf16.gmra.mxu0 %v1254
        %v1494 = vpop.f32.mrf.mxu0
        %v1495 = vadd.f32 %v1482, %v1494
        %v1496 = vpop.f32.mrf.mxu0
        %1497 = vdwg.mxu0
        %1498 = vmatpush.bf16.msra.mxu0 %v1426
        %1499 = vmatpush.bf16.msra.mxu0 %v1425
        %1500 = vmatpush.bf16.msra.mxu0 %v1424
        %1501 = vmatpush.bf16.msra.mxu0 %v1423
        %1502 = vmatpush.bf16.msra.mxu0 %v1422
        %1503 = vmatpush.bf16.msra.mxu0 %v1421
        %1504 = vmatpush.bf16.msra.mxu0 %v1420
        %1505 = vmatpush.bf16.msra.mxu0 %v1419
        %1506 = vmatmul.bf16.gmra.mxu0 %v1262
        %v1507 = vpop.f32.mrf.mxu0
        %v1508 = vadd.f32 %v1495, %v1507
        %v1509 = vpop.f32.mrf.mxu0
        %1510 = vdwg.mxu0
        %v1511 = vsel %vm452, 1, 0
        %1512 = vset.pattern.permute.xlu0 0
        %1513 = vperm.xlu0 %1512, %v1511
        %v1514 = vpop.permute.xlu0 %1513
        %vm1515 = vcmp.eq.s32.totalorder %v1514, 1
        %v1516 = vsel %vm1515, %v1508, 0.0
        %v1517 = vadd.f32 %v1153, %v1516
        %s1518 = scalar_lea.vmem %s318, 768 [#allocation6]
        %v1519 = vld [vmem:[%s1518] sm:$0xf]
        %v1520 = vld [vmem:[%s1518 + $0x4] sm:$0xf]
        %v1521 = vld [vmem:[%s1518 + $0x8] sm:$0xf]
        %v1522 = vld [vmem:[%s1518 + $0xc] sm:$0xf]
        %v1523 = vld [vmem:[%s1518 + $0x10] sm:$0xf]
        %v1524 = vld [vmem:[%s1518 + $0x14] sm:$0xf]
        %v1525 = vld [vmem:[%s1518 + $0x18] sm:$0xf]
        %v1526 = vld [vmem:[%s1518 + $0x1c] sm:$0xf]
        %v1527 = vld [vmem:[%s1518 + $0x20] sm:$0xf]
        %v1528 = vld [vmem:[%s1518 + $0x24] sm:$0xf]
        %v1529 = vld [vmem:[%s1518 + $0x28] sm:$0xf]
        %v1530 = vld [vmem:[%s1518 + $0x2c] sm:$0xf]
        %v1531 = vld [vmem:[%s1518 + $0x30] sm:$0xf]
        %v1532 = vld [vmem:[%s1518 + $0x34] sm:$0xf]
        %v1533 = vld [vmem:[%s1518 + $0x38] sm:$0xf]
        %v1534 = vld [vmem:[%s1518 + $0x3c] sm:$0xf]
        %v1535 = vld [vmem:[%s1518 + $0x40] sm:$0xf]
        %v1536 = vld [vmem:[%s1518 + $0x44] sm:$0xf]
        %v1537 = vld [vmem:[%s1518 + $0x48] sm:$0xf]
        %v1538 = vld [vmem:[%s1518 + $0x4c] sm:$0xf]
        %v1539 = vld [vmem:[%s1518 + $0x50] sm:$0xf]
        %v1540 = vld [vmem:[%s1518 + $0x54] sm:$0xf]
        %v1541 = vld [vmem:[%s1518 + $0x58] sm:$0xf]
        %v1542 = vld [vmem:[%s1518 + $0x5c] sm:$0xf]
        %v1543 = vld [vmem:[%s1518 + $0x60] sm:$0xf]
        %v1544 = vld [vmem:[%s1518 + $0x64] sm:$0xf]
        %v1545 = vld [vmem:[%s1518 + $0x68] sm:$0xf]
        %v1546 = vld [vmem:[%s1518 + $0x6c] sm:$0xf]
        %v1547 = vld [vmem:[%s1518 + $0x70] sm:$0xf]
        %v1548 = vld [vmem:[%s1518 + $0x74] sm:$0xf]
        %v1549 = vld [vmem:[%s1518 + $0x78] sm:$0xf]
        %v1550 = vld [vmem:[%s1518 + $0x7c] sm:$0xf]
        %v1551 = vld [vmem:[%s1518 + $0x80] sm:$0xf]
        %v1552 = vld [vmem:[%s1518 + $0x84] sm:$0xf]
        %v1553 = vld [vmem:[%s1518 + $0x88] sm:$0xf]
        %v1554 = vld [vmem:[%s1518 + $0x8c] sm:$0xf]
        %v1555 = vld [vmem:[%s1518 + $0x90] sm:$0xf]
        %v1556 = vld [vmem:[%s1518 + $0x94] sm:$0xf]
        %v1557 = vld [vmem:[%s1518 + $0x98] sm:$0xf]
        %v1558 = vld [vmem:[%s1518 + $0x9c] sm:$0xf]
        %v1559 = vld [vmem:[%s1518 + $0xa0] sm:$0xf]
        %v1560 = vld [vmem:[%s1518 + $0xa4] sm:$0xf]
        %v1561 = vld [vmem:[%s1518 + $0xa8] sm:$0xf]
        %v1562 = vld [vmem:[%s1518 + $0xac] sm:$0xf]
        %v1563 = vld [vmem:[%s1518 + $0xb0] sm:$0xf]
        %v1564 = vld [vmem:[%s1518 + $0xb4] sm:$0xf]
        %v1565 = vld [vmem:[%s1518 + $0xb8] sm:$0xf]
        %v1566 = vld [vmem:[%s1518 + $0xbc] sm:$0xf]
        %v1567 = vld [vmem:[%s1518 + $0xc0] sm:$0xf]
        %v1568 = vld [vmem:[%s1518 + $0xc4] sm:$0xf]
        %v1569 = vld [vmem:[%s1518 + $0xc8] sm:$0xf]
        %v1570 = vld [vmem:[%s1518 + $0xcc] sm:$0xf]
        %v1571 = vld [vmem:[%s1518 + $0xd0] sm:$0xf]
        %v1572 = vld [vmem:[%s1518 + $0xd4] sm:$0xf]
        %v1573 = vld [vmem:[%s1518 + $0xd8] sm:$0xf]
        %v1574 = vld [vmem:[%s1518 + $0xdc] sm:$0xf]
        %v1575 = vld [vmem:[%s1518 + $0xe0] sm:$0xf]
        %v1576 = vld [vmem:[%s1518 + $0xe4] sm:$0xf]
        %v1577 = vld [vmem:[%s1518 + $0xe8] sm:$0xf]
        %v1578 = vld [vmem:[%s1518 + $0xec] sm:$0xf]
        %v1579 = vld [vmem:[%s1518 + $0xf0] sm:$0xf]
        %v1580 = vld [vmem:[%s1518 + $0xf4] sm:$0xf]
        %v1581 = vld [vmem:[%s1518 + $0xf8] sm:$0xf]
        %v1582 = vld [vmem:[%s1518 + $0xfc] sm:$0xf]
        %v1647 = vunpack.c.l.b16 %v1519
        %v1648 = vunpack.c.l.b16 %v1520
        %v1649 = vunpack.c.l.b16 %v1521
        %v1650 = vunpack.c.l.b16 %v1522
        %v1651 = vunpack.c.l.b16 %v1523
        %v1652 = vunpack.c.l.b16 %v1524
        %v1653 = vunpack.c.l.b16 %v1525
        %v1654 = vunpack.c.l.b16 %v1526
        %v1655 = vunpack.c.l.b16 %v1527
        %v1656 = vunpack.c.l.b16 %v1528
        %v1657 = vunpack.c.l.b16 %v1529
        %v1658 = vunpack.c.l.b16 %v1530
        %v1659 = vunpack.c.l.b16 %v1531
        %v1660 = vunpack.c.l.b16 %v1532
        %v1661 = vunpack.c.l.b16 %v1533
        %v1662 = vunpack.c.l.b16 %v1534
        %v1663 = vunpack.c.l.b16 %v1535
        %v1664 = vunpack.c.l.b16 %v1536
        %v1665 = vunpack.c.l.b16 %v1537
        %v1666 = vunpack.c.l.b16 %v1538
        %v1667 = vunpack.c.l.b16 %v1539
        %v1668 = vunpack.c.l.b16 %v1540
        %v1669 = vunpack.c.l.b16 %v1541
        %v1670 = vunpack.c.l.b16 %v1542
        %v1671 = vunpack.c.l.b16 %v1543
        %v1672 = vunpack.c.l.b16 %v1544
        %v1673 = vunpack.c.l.b16 %v1545
        %v1674 = vunpack.c.l.b16 %v1546
        %v1675 = vunpack.c.l.b16 %v1547
        %v1676 = vunpack.c.l.b16 %v1548
        %v1677 = vunpack.c.l.b16 %v1549
        %v1678 = vunpack.c.l.b16 %v1550
        %v1679 = vunpack.c.l.b16 %v1551
        %v1680 = vunpack.c.l.b16 %v1552
        %v1681 = vunpack.c.l.b16 %v1553
        %v1682 = vunpack.c.l.b16 %v1554
        %v1683 = vunpack.c.l.b16 %v1555
        %v1684 = vunpack.c.l.b16 %v1556
        %v1685 = vunpack.c.l.b16 %v1557
        %v1686 = vunpack.c.l.b16 %v1558
        %v1687 = vunpack.c.l.b16 %v1559
        %v1688 = vunpack.c.l.b16 %v1560
        %v1689 = vunpack.c.l.b16 %v1561
        %v1690 = vunpack.c.l.b16 %v1562
        %v1691 = vunpack.c.l.b16 %v1563
        %v1692 = vunpack.c.l.b16 %v1564
        %v1693 = vunpack.c.l.b16 %v1565
        %v1694 = vunpack.c.l.b16 %v1566
        %v1695 = vunpack.c.l.b16 %v1567
        %v1696 = vunpack.c.l.b16 %v1568
        %v1697 = vunpack.c.l.b16 %v1569
        %v1698 = vunpack.c.l.b16 %v1570
        %v1699 = vunpack.c.l.b16 %v1571
        %v1700 = vunpack.c.l.b16 %v1572
        %v1701 = vunpack.c.l.b16 %v1573
        %v1702 = vunpack.c.l.b16 %v1574
        %v1703 = vunpack.c.l.b16 %v1575
        %v1704 = vunpack.c.l.b16 %v1576
        %v1705 = vunpack.c.l.b16 %v1577
        %v1706 = vunpack.c.l.b16 %v1578
        %v1707 = vunpack.c.l.b16 %v1579
        %v1708 = vunpack.c.l.b16 %v1580
        %v1709 = vunpack.c.l.b16 %v1581
        %v1710 = vunpack.c.l.b16 %v1582
        %v1711 = vpack.c.b16 %v1648, %v1647
        %v1712 = vpack.c.b16 %v1650, %v1649
        %v1713 = vpack.c.b16 %v1652, %v1651
        %v1714 = vpack.c.b16 %v1654, %v1653
        %v1715 = vpack.c.b16 %v1656, %v1655
        %v1716 = vpack.c.b16 %v1658, %v1657
        %v1717 = vpack.c.b16 %v1660, %v1659
        %v1718 = vpack.c.b16 %v1662, %v1661
        %v1719 = vpack.c.b16 %v1664, %v1663
        %v1720 = vpack.c.b16 %v1666, %v1665
        %v1721 = vpack.c.b16 %v1668, %v1667
        %v1722 = vpack.c.b16 %v1670, %v1669
        %v1723 = vpack.c.b16 %v1672, %v1671
        %v1724 = vpack.c.b16 %v1674, %v1673
        %v1725 = vpack.c.b16 %v1676, %v1675
        %v1726 = vpack.c.b16 %v1678, %v1677
        %v1727 = vpack.c.b16 %v1680, %v1679
        %v1728 = vpack.c.b16 %v1682, %v1681
        %v1729 = vpack.c.b16 %v1684, %v1683
        %v1730 = vpack.c.b16 %v1686, %v1685
        %v1731 = vpack.c.b16 %v1688, %v1687
        %v1732 = vpack.c.b16 %v1690, %v1689
        %v1733 = vpack.c.b16 %v1692, %v1691
        %v1734 = vpack.c.b16 %v1694, %v1693
        %v1735 = vpack.c.b16 %v1696, %v1695
        %v1736 = vpack.c.b16 %v1698, %v1697
        %v1737 = vpack.c.b16 %v1700, %v1699
        %v1738 = vpack.c.b16 %v1702, %v1701
        %v1739 = vpack.c.b16 %v1704, %v1703
        %v1740 = vpack.c.b16 %v1706, %v1705
        %v1741 = vpack.c.b16 %v1708, %v1707
        %v1742 = vpack.c.b16 %v1710, %v1709
        %1775 = vmatpush.bf16.msra.mxu0 %v1718
        %1776 = vmatpush.bf16.msra.mxu0 %v1717
        %1777 = vmatpush.bf16.msra.mxu0 %v1716
        %1778 = vmatpush.bf16.msra.mxu0 %v1715
        %1779 = vmatpush.bf16.msra.mxu0 %v1714
        %1780 = vmatpush.bf16.msra.mxu0 %v1713
        %1781 = vmatpush.bf16.msra.mxu0 %v1712
        %1782 = vmatpush.bf16.msra.mxu0 %v1711
        %1783 = vmatmul.bf16.gmra.mxu0 %v1238
        %v1784 = vpop.f32.mrf.mxu0
        %v1785 = vadd.f32 0.0, %v1784
        %v1786 = vpop.f32.mrf.mxu0
        %1787 = vdwg.mxu0
        %1788 = vmatpush.bf16.msra.mxu0 %v1726
        %1789 = vmatpush.bf16.msra.mxu0 %v1725
        %1790 = vmatpush.bf16.msra.mxu0 %v1724
        %1791 = vmatpush.bf16.msra.mxu0 %v1723
        %1792 = vmatpush.bf16.msra.mxu0 %v1722
        %1793 = vmatpush.bf16.msra.mxu0 %v1721
        %1794 = vmatpush.bf16.msra.mxu0 %v1720
        %1795 = vmatpush.bf16.msra.mxu0 %v1719
        %1796 = vmatmul.bf16.gmra.mxu0 %v1246
        %v1797 = vpop.f32.mrf.mxu0
        %v1798 = vadd.f32 %v1785, %v1797
        %v1799 = vpop.f32.mrf.mxu0
        %1800 = vdwg.mxu0
        %1801 = vmatpush.bf16.msra.mxu0 %v1734
        %1802 = vmatpush.bf16.msra.mxu0 %v1733
        %1803 = vmatpush.bf16.msra.mxu0 %v1732
        %1804 = vmatpush.bf16.msra.mxu0 %v1731
        %1805 = vmatpush.bf16.msra.mxu0 %v1730
        %1806 = vmatpush.bf16.msra.mxu0 %v1729
        %1807 = vmatpush.bf16.msra.mxu0 %v1728
        %1808 = vmatpush.bf16.msra.mxu0 %v1727
        %1809 = vmatmul.bf16.gmra.mxu0 %v1254
        %v1810 = vpop.f32.mrf.mxu0
        %v1811 = vadd.f32 %v1798, %v1810
        %v1812 = vpop.f32.mrf.mxu0
        %1813 = vdwg.mxu0
        %1814 = vmatpush.bf16.msra.mxu0 %v1742
        %1815 = vmatpush.bf16.msra.mxu0 %v1741
        %1816 = vmatpush.bf16.msra.mxu0 %v1740
        %1817 = vmatpush.bf16.msra.mxu0 %v1739
        %1818 = vmatpush.bf16.msra.mxu0 %v1738
        %1819 = vmatpush.bf16.msra.mxu0 %v1737
        %1820 = vmatpush.bf16.msra.mxu0 %v1736
        %1821 = vmatpush.bf16.msra.mxu0 %v1735
        %1822 = vmatmul.bf16.gmra.mxu0 %v1262
        %v1823 = vpop.f32.mrf.mxu0
        %v1824 = vadd.f32 %v1811, %v1823
        %v1825 = vpop.f32.mrf.mxu0
        %1826 = vdwg.mxu0
        %v1827 = vsel %vm821, %v1824, 0.0
        %v1828 = vadd.f32 %v1517, %v1827
        %s1829 = scalar_lea.vmem %s318, 1024 [#allocation6]
        %v1830 = vld [vmem:[%s1829] sm:$0xf]
        %v1831 = vld [vmem:[%s1829 + $0x4] sm:$0xf]
        %v1832 = vld [vmem:[%s1829 + $0x8] sm:$0xf]
        %v1833 = vld [vmem:[%s1829 + $0xc] sm:$0xf]
        %v1834 = vld [vmem:[%s1829 + $0x10] sm:$0xf]
        %v1835 = vld [vmem:[%s1829 + $0x14] sm:$0xf]
        %v1836 = vld [vmem:[%s1829 + $0x18] sm:$0xf]
        %v1837 = vld [vmem:[%s1829 + $0x1c] sm:$0xf]
        %v1838 = vld [vmem:[%s1829 + $0x20] sm:$0xf]
        %v1839 = vld [vmem:[%s1829 + $0x24] sm:$0xf]
        %v1840 = vld [vmem:[%s1829 + $0x28] sm:$0xf]
        %v1841 = vld [vmem:[%s1829 + $0x2c] sm:$0xf]
        %v1842 = vld [vmem:[%s1829 + $0x30] sm:$0xf]
        %v1843 = vld [vmem:[%s1829 + $0x34] sm:$0xf]
        %v1844 = vld [vmem:[%s1829 + $0x38] sm:$0xf]
        %v1845 = vld [vmem:[%s1829 + $0x3c] sm:$0xf]
        %v1846 = vld [vmem:[%s1829 + $0x40] sm:$0xf]
        %v1847 = vld [vmem:[%s1829 + $0x44] sm:$0xf]
        %v1848 = vld [vmem:[%s1829 + $0x48] sm:$0xf]
        %v1849 = vld [vmem:[%s1829 + $0x4c] sm:$0xf]
        %v1850 = vld [vmem:[%s1829 + $0x50] sm:$0xf]
        %v1851 = vld [vmem:[%s1829 + $0x54] sm:$0xf]
        %v1852 = vld [vmem:[%s1829 + $0x58] sm:$0xf]
        %v1853 = vld [vmem:[%s1829 + $0x5c] sm:$0xf]
        %v1854 = vld [vmem:[%s1829 + $0x60] sm:$0xf]
        %v1855 = vld [vmem:[%s1829 + $0x64] sm:$0xf]
        %v1856 = vld [vmem:[%s1829 + $0x68] sm:$0xf]
        %v1857 = vld [vmem:[%s1829 + $0x6c] sm:$0xf]
        %v1858 = vld [vmem:[%s1829 + $0x70] sm:$0xf]
        %v1859 = vld [vmem:[%s1829 + $0x74] sm:$0xf]
        %v1860 = vld [vmem:[%s1829 + $0x78] sm:$0xf]
        %v1861 = vld [vmem:[%s1829 + $0x7c] sm:$0xf]
        %v1862 = vld [vmem:[%s1829 + $0x80] sm:$0xf]
        %v1863 = vld [vmem:[%s1829 + $0x84] sm:$0xf]
        %v1864 = vld [vmem:[%s1829 + $0x88] sm:$0xf]
        %v1865 = vld [vmem:[%s1829 + $0x8c] sm:$0xf]
        %v1866 = vld [vmem:[%s1829 + $0x90] sm:$0xf]
        %v1867 = vld [vmem:[%s1829 + $0x94] sm:$0xf]
        %v1868 = vld [vmem:[%s1829 + $0x98] sm:$0xf]
        %v1869 = vld [vmem:[%s1829 + $0x9c] sm:$0xf]
        %v1870 = vld [vmem:[%s1829 + $0xa0] sm:$0xf]
        %v1871 = vld [vmem:[%s1829 + $0xa4] sm:$0xf]
        %v1872 = vld [vmem:[%s1829 + $0xa8] sm:$0xf]
        %v1873 = vld [vmem:[%s1829 + $0xac] sm:$0xf]
        %v1874 = vld [vmem:[%s1829 + $0xb0] sm:$0xf]
        %v1875 = vld [vmem:[%s1829 + $0xb4] sm:$0xf]
        %v1876 = vld [vmem:[%s1829 + $0xb8] sm:$0xf]
        %v1877 = vld [vmem:[%s1829 + $0xbc] sm:$0xf]
        %v1878 = vld [vmem:[%s1829 + $0xc0] sm:$0xf]
        %v1879 = vld [vmem:[%s1829 + $0xc4] sm:$0xf]
        %v1880 = vld [vmem:[%s1829 + $0xc8] sm:$0xf]
        %v1881 = vld [vmem:[%s1829 + $0xcc] sm:$0xf]
        %v1882 = vld [vmem:[%s1829 + $0xd0] sm:$0xf]
        %v1883 = vld [vmem:[%s1829 + $0xd4] sm:$0xf]
        %v1884 = vld [vmem:[%s1829 + $0xd8] sm:$0xf]
        %v1885 = vld [vmem:[%s1829 + $0xdc] sm:$0xf]
        %v1886 = vld [vmem:[%s1829 + $0xe0] sm:$0xf]
        %v1887 = vld [vmem:[%s1829 + $0xe4] sm:$0xf]
        %v1888 = vld [vmem:[%s1829 + $0xe8] sm:$0xf]
        %v1889 = vld [vmem:[%s1829 + $0xec] sm:$0xf]
        %v1890 = vld [vmem:[%s1829 + $0xf0] sm:$0xf]
        %v1891 = vld [vmem:[%s1829 + $0xf4] sm:$0xf]
        %v1892 = vld [vmem:[%s1829 + $0xf8] sm:$0xf]
        %v1893 = vld [vmem:[%s1829 + $0xfc] sm:$0xf]
        %v1894 = vpack.c.b16 %v1223, %v1223
        %v1895 = vpack.c.b16 %v1224, %v1224
        %v1896 = vpack.c.b16 %v1225, %v1225
        %v1897 = vpack.c.b16 %v1226, %v1226
        %v1966 = vunpack.c.l.b16 %v1830
        %v1967 = vunpack.c.l.b16 %v1831
        %v1968 = vunpack.c.l.b16 %v1832
        %v1969 = vunpack.c.l.b16 %v1833
        %v1970 = vunpack.c.l.b16 %v1834
        %v1971 = vunpack.c.l.b16 %v1835
        %v1972 = vunpack.c.l.b16 %v1836
        %v1973 = vunpack.c.l.b16 %v1837
        %v1974 = vunpack.c.l.b16 %v1838
        %v1975 = vunpack.c.l.b16 %v1839
        %v1976 = vunpack.c.l.b16 %v1840
        %v1977 = vunpack.c.l.b16 %v1841
        %v1978 = vunpack.c.l.b16 %v1842
        %v1979 = vunpack.c.l.b16 %v1843
        %v1980 = vunpack.c.l.b16 %v1844
        %v1981 = vunpack.c.l.b16 %v1845
        %v1982 = vunpack.c.l.b16 %v1846
        %v1983 = vunpack.c.l.b16 %v1847
        %v1984 = vunpack.c.l.b16 %v1848
        %v1985 = vunpack.c.l.b16 %v1849
        %v1986 = vunpack.c.l.b16 %v1850
        %v1987 = vunpack.c.l.b16 %v1851
        %v1988 = vunpack.c.l.b16 %v1852
        %v1989 = vunpack.c.l.b16 %v1853
        %v1990 = vunpack.c.l.b16 %v1854
        %v1991 = vunpack.c.l.b16 %v1855
        %v1992 = vunpack.c.l.b16 %v1856
        %v1993 = vunpack.c.l.b16 %v1857
        %v1994 = vunpack.c.l.b16 %v1858
        %v1995 = vunpack.c.l.b16 %v1859
        %v1996 = vunpack.c.l.b16 %v1860
        %v1997 = vunpack.c.l.b16 %v1861
        %v1998 = vunpack.c.l.b16 %v1862
        %v1999 = vunpack.c.l.b16 %v1863
        %v2000 = vunpack.c.l.b16 %v1864
        %v2001 = vunpack.c.l.b16 %v1865
        %v2002 = vunpack.c.l.b16 %v1866
        %v2003 = vunpack.c.l.b16 %v1867
        %v2004 = vunpack.c.l.b16 %v1868
        %v2005 = vunpack.c.l.b16 %v1869
        %v2006 = vunpack.c.l.b16 %v1870
        %v2007 = vunpack.c.l.b16 %v1871
        %v2008 = vunpack.c.l.b16 %v1872
        %v2009 = vunpack.c.l.b16 %v1873
        %v2010 = vunpack.c.l.b16 %v1874
        %v2011 = vunpack.c.l.b16 %v1875
        %v2012 = vunpack.c.l.b16 %v1876
        %v2013 = vunpack.c.l.b16 %v1877
        %v2014 = vunpack.c.l.b16 %v1878
        %v2015 = vunpack.c.l.b16 %v1879
        %v2016 = vunpack.c.l.b16 %v1880
        %v2017 = vunpack.c.l.b16 %v1881
        %v2018 = vunpack.c.l.b16 %v1882
        %v2019 = vunpack.c.l.b16 %v1883
        %v2020 = vunpack.c.l.b16 %v1884
        %v2021 = vunpack.c.l.b16 %v1885
        %v2022 = vunpack.c.l.b16 %v1886
        %v2023 = vunpack.c.l.b16 %v1887
        %v2024 = vunpack.c.l.b16 %v1888
        %v2025 = vunpack.c.l.b16 %v1889
        %v2026 = vunpack.c.l.b16 %v1890
        %v2027 = vunpack.c.l.b16 %v1891
        %v2028 = vunpack.c.l.b16 %v1892
        %v2029 = vunpack.c.l.b16 %v1893
        %v2030 = vpack.c.b16 %v1967, %v1966
        %v2031 = vpack.c.b16 %v1969, %v1968
        %v2032 = vpack.c.b16 %v1971, %v1970
        %v2033 = vpack.c.b16 %v1973, %v1972
        %v2034 = vpack.c.b16 %v1975, %v1974
        %v2035 = vpack.c.b16 %v1977, %v1976
        %v2036 = vpack.c.b16 %v1979, %v1978
        %v2037 = vpack.c.b16 %v1981, %v1980
        %v2038 = vpack.c.b16 %v1983, %v1982
        %v2039 = vpack.c.b16 %v1985, %v1984
        %v2040 = vpack.c.b16 %v1987, %v1986
        %v2041 = vpack.c.b16 %v1989, %v1988
        %v2042 = vpack.c.b16 %v1991, %v1990
        %v2043 = vpack.c.b16 %v1993, %v1992
        %v2044 = vpack.c.b16 %v1995, %v1994
        %v2045 = vpack.c.b16 %v1997, %v1996
        %v2046 = vpack.c.b16 %v1999, %v1998
        %v2047 = vpack.c.b16 %v2001, %v2000
        %v2048 = vpack.c.b16 %v2003, %v2002
        %v2049 = vpack.c.b16 %v2005, %v2004
        %v2050 = vpack.c.b16 %v2007, %v2006
        %v2051 = vpack.c.b16 %v2009, %v2008
        %v2052 = vpack.c.b16 %v2011, %v2010
        %v2053 = vpack.c.b16 %v2013, %v2012
        %v2054 = vpack.c.b16 %v2015, %v2014
        %v2055 = vpack.c.b16 %v2017, %v2016
        %v2056 = vpack.c.b16 %v2019, %v2018
        %v2057 = vpack.c.b16 %v2021, %v2020
        %v2058 = vpack.c.b16 %v2023, %v2022
        %v2059 = vpack.c.b16 %v2025, %v2024
        %v2060 = vpack.c.b16 %v2027, %v2026
        %v2061 = vpack.c.b16 %v2029, %v2028
        %2094 = vmatpush.bf16.msra.mxu0 %v2037
        %2095 = vmatpush.bf16.msra.mxu0 %v2036
        %2096 = vmatpush.bf16.msra.mxu0 %v2035
        %2097 = vmatpush.bf16.msra.mxu0 %v2034
        %2098 = vmatpush.bf16.msra.mxu0 %v2033
        %2099 = vmatpush.bf16.msra.mxu0 %v2032
        %2100 = vmatpush.bf16.msra.mxu0 %v2031
        %2101 = vmatpush.bf16.msra.mxu0 %v2030
        %2102 = vmatmul.bf16.gmra.mxu0 %v1894
        %v2103 = vpop.f32.mrf.mxu0
        %v2104 = vadd.f32 0.0, %v2103
        %v2105 = vpop.f32.mrf.mxu0
        %2106 = vdwg.mxu0
        %2107 = vmatpush.bf16.msra.mxu0 %v2045
        %2108 = vmatpush.bf16.msra.mxu0 %v2044
        %2109 = vmatpush.bf16.msra.mxu0 %v2043
        %2110 = vmatpush.bf16.msra.mxu0 %v2042
        %2111 = vmatpush.bf16.msra.mxu0 %v2041
        %2112 = vmatpush.bf16.msra.mxu0 %v2040
        %2113 = vmatpush.bf16.msra.mxu0 %v2039
        %2114 = vmatpush.bf16.msra.mxu0 %v2038
        %2115 = vmatmul.bf16.gmra.mxu0 %v1895
        %v2116 = vpop.f32.mrf.mxu0
        %v2117 = vadd.f32 %v2104, %v2116
        %v2118 = vpop.f32.mrf.mxu0
        %2119 = vdwg.mxu0
        %2120 = vmatpush.bf16.msra.mxu0 %v2053
        %2121 = vmatpush.bf16.msra.mxu0 %v2052
        %2122 = vmatpush.bf16.msra.mxu0 %v2051
        %2123 = vmatpush.bf16.msra.mxu0 %v2050
        %2124 = vmatpush.bf16.msra.mxu0 %v2049
        %2125 = vmatpush.bf16.msra.mxu0 %v2048
        %2126 = vmatpush.bf16.msra.mxu0 %v2047
        %2127 = vmatpush.bf16.msra.mxu0 %v2046
        %2128 = vmatmul.bf16.gmra.mxu0 %v1896
        %v2129 = vpop.f32.mrf.mxu0
        %v2130 = vadd.f32 %v2117, %v2129
        %v2131 = vpop.f32.mrf.mxu0
        %2132 = vdwg.mxu0
        %2133 = vmatpush.bf16.msra.mxu0 %v2061
        %2134 = vmatpush.bf16.msra.mxu0 %v2060
        %2135 = vmatpush.bf16.msra.mxu0 %v2059
        %2136 = vmatpush.bf16.msra.mxu0 %v2058
        %2137 = vmatpush.bf16.msra.mxu0 %v2057
        %2138 = vmatpush.bf16.msra.mxu0 %v2056
        %2139 = vmatpush.bf16.msra.mxu0 %v2055
        %2140 = vmatpush.bf16.msra.mxu0 %v2054
        %2141 = vmatmul.bf16.gmra.mxu0 %v1897
        %v2142 = vpop.f32.mrf.mxu0
        %v2143 = vadd.f32 %v2130, %v2142
        %v2144 = vpop.f32.mrf.mxu0
        %2145 = vdwg.mxu0
        %v2146 = vadd.f32 %v1828, %v2143
        %v2147 = vld [vmem:[#allocation2 + $0x10] sm:$0x77]
        %v2148 = vld [vmem:[#allocation2 + $0x18] sm:$0x77]
        %s2149 = scalar_lea.vmem %s318, 1280 [#allocation6]
        %v2150 = vld [vmem:[%s2149] sm:$0xf]
        %v2151 = vld [vmem:[%s2149 + $0x4] sm:$0xf]
        %v2152 = vld [vmem:[%s2149 + $0x8] sm:$0xf]
        %v2153 = vld [vmem:[%s2149 + $0xc] sm:$0xf]
        %v2154 = vld [vmem:[%s2149 + $0x10] sm:$0xf]
        %v2155 = vld [vmem:[%s2149 + $0x14] sm:$0xf]
        %v2156 = vld [vmem:[%s2149 + $0x18] sm:$0xf]
        %v2157 = vld [vmem:[%s2149 + $0x1c] sm:$0xf]
        %v2158 = vld [vmem:[%s2149 + $0x20] sm:$0xf]
        %v2159 = vld [vmem:[%s2149 + $0x24] sm:$0xf]
        %v2160 = vld [vmem:[%s2149 + $0x28] sm:$0xf]
        %v2161 = vld [vmem:[%s2149 + $0x2c] sm:$0xf]
        %v2162 = vld [vmem:[%s2149 + $0x30] sm:$0xf]
        %v2163 = vld [vmem:[%s2149 + $0x34] sm:$0xf]
        %v2164 = vld [vmem:[%s2149 + $0x38] sm:$0xf]
        %v2165 = vld [vmem:[%s2149 + $0x3c] sm:$0xf]
        %v2166 = vld [vmem:[%s2149 + $0x40] sm:$0xf]
        %v2167 = vld [vmem:[%s2149 + $0x44] sm:$0xf]
        %v2168 = vld [vmem:[%s2149 + $0x48] sm:$0xf]
        %v2169 = vld [vmem:[%s2149 + $0x4c] sm:$0xf]
        %v2170 = vld [vmem:[%s2149 + $0x50] sm:$0xf]
        %v2171 = vld [vmem:[%s2149 + $0x54] sm:$0xf]
        %v2172 = vld [vmem:[%s2149 + $0x58] sm:$0xf]
        %v2173 = vld [vmem:[%s2149 + $0x5c] sm:$0xf]
        %v2174 = vld [vmem:[%s2149 + $0x60] sm:$0xf]
        %v2175 = vld [vmem:[%s2149 + $0x64] sm:$0xf]
        %v2176 = vld [vmem:[%s2149 + $0x68] sm:$0xf]
        %v2177 = vld [vmem:[%s2149 + $0x6c] sm:$0xf]
        %v2178 = vld [vmem:[%s2149 + $0x70] sm:$0xf]
        %v2179 = vld [vmem:[%s2149 + $0x74] sm:$0xf]
        %v2180 = vld [vmem:[%s2149 + $0x78] sm:$0xf]
        %v2181 = vld [vmem:[%s2149 + $0x7c] sm:$0xf]
        %v2182 = vld [vmem:[%s2149 + $0x80] sm:$0xf]
        %v2183 = vld [vmem:[%s2149 + $0x84] sm:$0xf]
        %v2184 = vld [vmem:[%s2149 + $0x88] sm:$0xf]
        %v2185 = vld [vmem:[%s2149 + $0x8c] sm:$0xf]
        %v2186 = vld [vmem:[%s2149 + $0x90] sm:$0xf]
        %v2187 = vld [vmem:[%s2149 + $0x94] sm:$0xf]
        %v2188 = vld [vmem:[%s2149 + $0x98] sm:$0xf]
        %v2189 = vld [vmem:[%s2149 + $0x9c] sm:$0xf]
        %v2190 = vld [vmem:[%s2149 + $0xa0] sm:$0xf]
        %v2191 = vld [vmem:[%s2149 + $0xa4] sm:$0xf]
        %v2192 = vld [vmem:[%s2149 + $0xa8] sm:$0xf]
        %v2193 = vld [vmem:[%s2149 + $0xac] sm:$0xf]
        %v2194 = vld [vmem:[%s2149 + $0xb0] sm:$0xf]
        %v2195 = vld [vmem:[%s2149 + $0xb4] sm:$0xf]
        %v2196 = vld [vmem:[%s2149 + $0xb8] sm:$0xf]
        %v2197 = vld [vmem:[%s2149 + $0xbc] sm:$0xf]
        %v2198 = vld [vmem:[%s2149 + $0xc0] sm:$0xf]
        %v2199 = vld [vmem:[%s2149 + $0xc4] sm:$0xf]
        %v2200 = vld [vmem:[%s2149 + $0xc8] sm:$0xf]
        %v2201 = vld [vmem:[%s2149 + $0xcc] sm:$0xf]
        %v2202 = vld [vmem:[%s2149 + $0xd0] sm:$0xf]
        %v2203 = vld [vmem:[%s2149 + $0xd4] sm:$0xf]
        %v2204 = vld [vmem:[%s2149 + $0xd8] sm:$0xf]
        %v2205 = vld [vmem:[%s2149 + $0xdc] sm:$0xf]
        %v2206 = vld [vmem:[%s2149 + $0xe0] sm:$0xf]
        %v2207 = vld [vmem:[%s2149 + $0xe4] sm:$0xf]
        %v2208 = vld [vmem:[%s2149 + $0xe8] sm:$0xf]
        %v2209 = vld [vmem:[%s2149 + $0xec] sm:$0xf]
        %v2210 = vld [vmem:[%s2149 + $0xf0] sm:$0xf]
        %v2211 = vld [vmem:[%s2149 + $0xf4] sm:$0xf]
        %v2212 = vld [vmem:[%s2149 + $0xf8] sm:$0xf]
        %v2213 = vld [vmem:[%s2149 + $0xfc] sm:$0xf]
        %v2216 = vunpack.c.l.b16 %v2147
        %v2217 = vunpack.c.h.b16 %v2147
        %v2218 = vunpack.c.l.b16 %v2148
        %v2219 = vunpack.c.h.b16 %v2148
        %v2220 = vpack.c.b16 %v2216, %v2216
        %v2221 = vpack.c.b16 %v2217, %v2217
        %v2222 = vpack.c.b16 %v2218, %v2218
        %v2223 = vpack.c.b16 %v2219, %v2219
        %v2225 = vshrl.u32 %v2220, 16
        %v2227 = vshll.u32 %v2220, 16
        %v2229 = vrot.slane %v2227, 1
        %v2230 = vor.u32 %v2225, %v2229
        %v2232 = vshrl.u32 %v2221, 16
        %v2234 = vshll.u32 %v2221, 16
        %v2236 = vrot.slane %v2234, 1
        %v2237 = vor.u32 %v2232, %v2236
        %v2239 = vshrl.u32 %v2222, 16
        %v2241 = vshll.u32 %v2222, 16
        %v2243 = vrot.slane %v2241, 1
        %v2244 = vor.u32 %v2239, %v2243
        %v2246 = vshrl.u32 %v2223, 16
        %v2248 = vshll.u32 %v2223, 16
        %v2250 = vrot.slane %v2248, 1
        %v2251 = vor.u32 %v2246, %v2250
        %v2320 = vunpack.c.l.b16 %v2150
        %v2321 = vunpack.c.l.b16 %v2151
        %v2322 = vunpack.c.l.b16 %v2152
        %v2323 = vunpack.c.l.b16 %v2153
        %v2324 = vunpack.c.l.b16 %v2154
        %v2325 = vunpack.c.l.b16 %v2155
        %v2326 = vunpack.c.l.b16 %v2156
        %v2327 = vunpack.c.l.b16 %v2157
        %v2328 = vunpack.c.l.b16 %v2158
        %v2329 = vunpack.c.l.b16 %v2159
        %v2330 = vunpack.c.l.b16 %v2160
        %v2331 = vunpack.c.l.b16 %v2161
        %v2332 = vunpack.c.l.b16 %v2162
        %v2333 = vunpack.c.l.b16 %v2163
        %v2334 = vunpack.c.l.b16 %v2164
        %v2335 = vunpack.c.l.b16 %v2165
        %v2336 = vunpack.c.l.b16 %v2166
        %v2337 = vunpack.c.l.b16 %v2167
        %v2338 = vunpack.c.l.b16 %v2168
        %v2339 = vunpack.c.l.b16 %v2169
        %v2340 = vunpack.c.l.b16 %v2170
        %v2341 = vunpack.c.l.b16 %v2171
        %v2342 = vunpack.c.l.b16 %v2172
        %v2343 = vunpack.c.l.b16 %v2173
        %v2344 = vunpack.c.l.b16 %v2174
        %v2345 = vunpack.c.l.b16 %v2175
        %v2346 = vunpack.c.l.b16 %v2176
        %v2347 = vunpack.c.l.b16 %v2177
        %v2348 = vunpack.c.l.b16 %v2178
        %v2349 = vunpack.c.l.b16 %v2179
        %v2350 = vunpack.c.l.b16 %v2180
        %v2351 = vunpack.c.l.b16 %v2181
        %v2352 = vunpack.c.l.b16 %v2182
        %v2353 = vunpack.c.l.b16 %v2183
        %v2354 = vunpack.c.l.b16 %v2184
        %v2355 = vunpack.c.l.b16 %v2185
        %v2356 = vunpack.c.l.b16 %v2186
        %v2357 = vunpack.c.l.b16 %v2187
        %v2358 = vunpack.c.l.b16 %v2188
        %v2359 = vunpack.c.l.b16 %v2189
        %v2360 = vunpack.c.l.b16 %v2190
        %v2361 = vunpack.c.l.b16 %v2191
        %v2362 = vunpack.c.l.b16 %v2192
        %v2363 = vunpack.c.l.b16 %v2193
        %v2364 = vunpack.c.l.b16 %v2194
        %v2365 = vunpack.c.l.b16 %v2195
        %v2366 = vunpack.c.l.b16 %v2196
        %v2367 = vunpack.c.l.b16 %v2197
        %v2368 = vunpack.c.l.b16 %v2198
        %v2369 = vunpack.c.l.b16 %v2199
        %v2370 = vunpack.c.l.b16 %v2200
        %v2371 = vunpack.c.l.b16 %v2201
        %v2372 = vunpack.c.l.b16 %v2202
        %v2373 = vunpack.c.l.b16 %v2203
        %v2374 = vunpack.c.l.b16 %v2204
        %v2375 = vunpack.c.l.b16 %v2205
        %v2376 = vunpack.c.l.b16 %v2206
        %v2377 = vunpack.c.l.b16 %v2207
        %v2378 = vunpack.c.l.b16 %v2208
        %v2379 = vunpack.c.l.b16 %v2209
        %v2380 = vunpack.c.l.b16 %v2210
        %v2381 = vunpack.c.l.b16 %v2211
        %v2382 = vunpack.c.l.b16 %v2212
        %v2383 = vunpack.c.l.b16 %v2213
        %v2384 = vpack.c.b16 %v2321, %v2320
        %v2385 = vpack.c.b16 %v2323, %v2322
        %v2386 = vpack.c.b16 %v2325, %v2324
        %v2387 = vpack.c.b16 %v2327, %v2326
        %v2388 = vpack.c.b16 %v2329, %v2328
        %v2389 = vpack.c.b16 %v2331, %v2330
        %v2390 = vpack.c.b16 %v2333, %v2332
        %v2391 = vpack.c.b16 %v2335, %v2334
        %v2392 = vpack.c.b16 %v2337, %v2336
        %v2393 = vpack.c.b16 %v2339, %v2338
        %v2394 = vpack.c.b16 %v2341, %v2340
        %v2395 = vpack.c.b16 %v2343, %v2342
        %v2396 = vpack.c.b16 %v2345, %v2344
        %v2397 = vpack.c.b16 %v2347, %v2346
        %v2398 = vpack.c.b16 %v2349, %v2348
        %v2399 = vpack.c.b16 %v2351, %v2350
        %v2400 = vpack.c.b16 %v2353, %v2352
        %v2401 = vpack.c.b16 %v2355, %v2354
        %v2402 = vpack.c.b16 %v2357, %v2356
        %v2403 = vpack.c.b16 %v2359, %v2358
        %v2404 = vpack.c.b16 %v2361, %v2360
        %v2405 = vpack.c.b16 %v2363, %v2362
        %v2406 = vpack.c.b16 %v2365, %v2364
        %v2407 = vpack.c.b16 %v2367, %v2366
        %v2408 = vpack.c.b16 %v2369, %v2368
        %v2409 = vpack.c.b16 %v2371, %v2370
        %v2410 = vpack.c.b16 %v2373, %v2372
        %v2411 = vpack.c.b16 %v2375, %v2374
        %v2412 = vpack.c.b16 %v2377, %v2376
        %v2413 = vpack.c.b16 %v2379, %v2378
        %v2414 = vpack.c.b16 %v2381, %v2380
        %v2415 = vpack.c.b16 %v2383, %v2382
        %2448 = vmatpush.bf16.msra.mxu0 %v2391
        %2449 = vmatpush.bf16.msra.mxu0 %v2390
        %2450 = vmatpush.bf16.msra.mxu0 %v2389
        %2451 = vmatpush.bf16.msra.mxu0 %v2388
        %2452 = vmatpush.bf16.msra.mxu0 %v2387
        %2453 = vmatpush.bf16.msra.mxu0 %v2386
        %2454 = vmatpush.bf16.msra.mxu0 %v2385
        %2455 = vmatpush.bf16.msra.mxu0 %v2384
        %2456 = vmatmul.bf16.gmra.mxu0 %v2230
        %v2457 = vpop.f32.mrf.mxu0
        %v2458 = vadd.f32 0.0, %v2457
        %v2459 = vpop.f32.mrf.mxu0
        %2460 = vdwg.mxu0
        %2461 = vmatpush.bf16.msra.mxu0 %v2399
        %2462 = vmatpush.bf16.msra.mxu0 %v2398
        %2463 = vmatpush.bf16.msra.mxu0 %v2397
        %2464 = vmatpush.bf16.msra.mxu0 %v2396
        %2465 = vmatpush.bf16.msra.mxu0 %v2395
        %2466 = vmatpush.bf16.msra.mxu0 %v2394
        %2467 = vmatpush.bf16.msra.mxu0 %v2393
        %2468 = vmatpush.bf16.msra.mxu0 %v2392
        %2469 = vmatmul.bf16.gmra.mxu0 %v2237
        %v2470 = vpop.f32.mrf.mxu0
        %v2471 = vadd.f32 %v2458, %v2470
        %v2472 = vpop.f32.mrf.mxu0
        %2473 = vdwg.mxu0
        %2474 = vmatpush.bf16.msra.mxu0 %v2407
        %2475 = vmatpush.bf16.msra.mxu0 %v2406
        %2476 = vmatpush.bf16.msra.mxu0 %v2405
        %2477 = vmatpush.bf16.msra.mxu0 %v2404
        %2478 = vmatpush.bf16.msra.mxu0 %v2403
        %2479 = vmatpush.bf16.msra.mxu0 %v2402
        %2480 = vmatpush.bf16.msra.mxu0 %v2401
        %2481 = vmatpush.bf16.msra.mxu0 %v2400
        %2482 = vmatmul.bf16.gmra.mxu0 %v2244
        %v2483 = vpop.f32.mrf.mxu0
        %v2484 = vadd.f32 %v2471, %v2483
        %v2485 = vpop.f32.mrf.mxu0
        %2486 = vdwg.mxu0
        %2487 = vmatpush.bf16.msra.mxu0 %v2415
        %2488 = vmatpush.bf16.msra.mxu0 %v2414
        %2489 = vmatpush.bf16.msra.mxu0 %v2413
        %2490 = vmatpush.bf16.msra.mxu0 %v2412
        %2491 = vmatpush.bf16.msra.mxu0 %v2411
        %2492 = vmatpush.bf16.msra.mxu0 %v2410
        %2493 = vmatpush.bf16.msra.mxu0 %v2409
        %2494 = vmatpush.bf16.msra.mxu0 %v2408
        %2495 = vmatmul.bf16.gmra.mxu0 %v2251
        %v2496 = vpop.f32.mrf.mxu0
        %v2497 = vadd.f32 %v2484, %v2496
        %v2498 = vpop.f32.mrf.mxu0
        %2499 = vdwg.mxu0
        %v2500 = vsel %vm1515, %v2497, 0.0
        %v2501 = vadd.f32 %v2146, %v2500
        %s2502 = scalar_lea.vmem %s318, 1536 [#allocation6]
        %v2503 = vld [vmem:[%s2502] sm:$0xf]
        %v2504 = vld [vmem:[%s2502 + $0x4] sm:$0xf]
        %v2505 = vld [vmem:[%s2502 + $0x8] sm:$0xf]
        %v2506 = vld [vmem:[%s2502 + $0xc] sm:$0xf]
        %v2507 = vld [vmem:[%s2502 + $0x10] sm:$0xf]
        %v2508 = vld [vmem:[%s2502 + $0x14] sm:$0xf]
        %v2509 = vld [vmem:[%s2502 + $0x18] sm:$0xf]
        %v2510 = vld [vmem:[%s2502 + $0x1c] sm:$0xf]
        %v2511 = vld [vmem:[%s2502 + $0x20] sm:$0xf]
        %v2512 = vld [vmem:[%s2502 + $0x24] sm:$0xf]
        %v2513 = vld [vmem:[%s2502 + $0x28] sm:$0xf]
        %v2514 = vld [vmem:[%s2502 + $0x2c] sm:$0xf]
        %v2515 = vld [vmem:[%s2502 + $0x30] sm:$0xf]
        %v2516 = vld [vmem:[%s2502 + $0x34] sm:$0xf]
        %v2517 = vld [vmem:[%s2502 + $0x38] sm:$0xf]
        %v2518 = vld [vmem:[%s2502 + $0x3c] sm:$0xf]
        %v2519 = vld [vmem:[%s2502 + $0x40] sm:$0xf]
        %v2520 = vld [vmem:[%s2502 + $0x44] sm:$0xf]
        %v2521 = vld [vmem:[%s2502 + $0x48] sm:$0xf]
        %v2522 = vld [vmem:[%s2502 + $0x4c] sm:$0xf]
        %v2523 = vld [vmem:[%s2502 + $0x50] sm:$0xf]
        %v2524 = vld [vmem:[%s2502 + $0x54] sm:$0xf]
        %v2525 = vld [vmem:[%s2502 + $0x58] sm:$0xf]
        %v2526 = vld [vmem:[%s2502 + $0x5c] sm:$0xf]
        %v2527 = vld [vmem:[%s2502 + $0x60] sm:$0xf]
        %v2528 = vld [vmem:[%s2502 + $0x64] sm:$0xf]
        %v2529 = vld [vmem:[%s2502 + $0x68] sm:$0xf]
        %v2530 = vld [vmem:[%s2502 + $0x6c] sm:$0xf]
        %v2531 = vld [vmem:[%s2502 + $0x70] sm:$0xf]
        %v2532 = vld [vmem:[%s2502 + $0x74] sm:$0xf]
        %v2533 = vld [vmem:[%s2502 + $0x78] sm:$0xf]
        %v2534 = vld [vmem:[%s2502 + $0x7c] sm:$0xf]
        %v2535 = vld [vmem:[%s2502 + $0x80] sm:$0xf]
        %v2536 = vld [vmem:[%s2502 + $0x84] sm:$0xf]
        %v2537 = vld [vmem:[%s2502 + $0x88] sm:$0xf]
        %v2538 = vld [vmem:[%s2502 + $0x8c] sm:$0xf]
        %v2539 = vld [vmem:[%s2502 + $0x90] sm:$0xf]
        %v2540 = vld [vmem:[%s2502 + $0x94] sm:$0xf]
        %v2541 = vld [vmem:[%s2502 + $0x98] sm:$0xf]
        %v2542 = vld [vmem:[%s2502 + $0x9c] sm:$0xf]
        %v2543 = vld [vmem:[%s2502 + $0xa0] sm:$0xf]
        %v2544 = vld [vmem:[%s2502 + $0xa4] sm:$0xf]
        %v2545 = vld [vmem:[%s2502 + $0xa8] sm:$0xf]
        %v2546 = vld [vmem:[%s2502 + $0xac] sm:$0xf]
        %v2547 = vld [vmem:[%s2502 + $0xb0] sm:$0xf]
        %v2548 = vld [vmem:[%s2502 + $0xb4] sm:$0xf]
        %v2549 = vld [vmem:[%s2502 + $0xb8] sm:$0xf]
        %v2550 = vld [vmem:[%s2502 + $0xbc] sm:$0xf]
        %v2551 = vld [vmem:[%s2502 + $0xc0] sm:$0xf]
        %v2552 = vld [vmem:[%s2502 + $0xc4] sm:$0xf]
        %v2553 = vld [vmem:[%s2502 + $0xc8] sm:$0xf]
        %v2554 = vld [vmem:[%s2502 + $0xcc] sm:$0xf]
        %v2555 = vld [vmem:[%s2502 + $0xd0] sm:$0xf]
        %v2556 = vld [vmem:[%s2502 + $0xd4] sm:$0xf]
        %v2557 = vld [vmem:[%s2502 + $0xd8] sm:$0xf]
        %v2558 = vld [vmem:[%s2502 + $0xdc] sm:$0xf]
        %v2559 = vld [vmem:[%s2502 + $0xe0] sm:$0xf]
        %v2560 = vld [vmem:[%s2502 + $0xe4] sm:$0xf]
        %v2561 = vld [vmem:[%s2502 + $0xe8] sm:$0xf]
        %v2562 = vld [vmem:[%s2502 + $0xec] sm:$0xf]
        %v2563 = vld [vmem:[%s2502 + $0xf0] sm:$0xf]
        %v2564 = vld [vmem:[%s2502 + $0xf4] sm:$0xf]
        %v2565 = vld [vmem:[%s2502 + $0xf8] sm:$0xf]
        %v2566 = vld [vmem:[%s2502 + $0xfc] sm:$0xf]
        %v2631 = vunpack.c.l.b16 %v2503
        %v2632 = vunpack.c.l.b16 %v2504
        %v2633 = vunpack.c.l.b16 %v2505
        %v2634 = vunpack.c.l.b16 %v2506
        %v2635 = vunpack.c.l.b16 %v2507
        %v2636 = vunpack.c.l.b16 %v2508
        %v2637 = vunpack.c.l.b16 %v2509
        %v2638 = vunpack.c.l.b16 %v2510
        %v2639 = vunpack.c.l.b16 %v2511
        %v2640 = vunpack.c.l.b16 %v2512
        %v2641 = vunpack.c.l.b16 %v2513
        %v2642 = vunpack.c.l.b16 %v2514
        %v2643 = vunpack.c.l.b16 %v2515
        %v2644 = vunpack.c.l.b16 %v2516
        %v2645 = vunpack.c.l.b16 %v2517
        %v2646 = vunpack.c.l.b16 %v2518
        %v2647 = vunpack.c.l.b16 %v2519
        %v2648 = vunpack.c.l.b16 %v2520
        %v2649 = vunpack.c.l.b16 %v2521
        %v2650 = vunpack.c.l.b16 %v2522
        %v2651 = vunpack.c.l.b16 %v2523
        %v2652 = vunpack.c.l.b16 %v2524
        %v2653 = vunpack.c.l.b16 %v2525
        %v2654 = vunpack.c.l.b16 %v2526
        %v2655 = vunpack.c.l.b16 %v2527
        %v2656 = vunpack.c.l.b16 %v2528
        %v2657 = vunpack.c.l.b16 %v2529
        %v2658 = vunpack.c.l.b16 %v2530
        %v2659 = vunpack.c.l.b16 %v2531
        %v2660 = vunpack.c.l.b16 %v2532
        %v2661 = vunpack.c.l.b16 %v2533
        %v2662 = vunpack.c.l.b16 %v2534
        %v2663 = vunpack.c.l.b16 %v2535
        %v2664 = vunpack.c.l.b16 %v2536
        %v2665 = vunpack.c.l.b16 %v2537
        %v2666 = vunpack.c.l.b16 %v2538
        %v2667 = vunpack.c.l.b16 %v2539
        %v2668 = vunpack.c.l.b16 %v2540
        %v2669 = vunpack.c.l.b16 %v2541
        %v2670 = vunpack.c.l.b16 %v2542
        %v2671 = vunpack.c.l.b16 %v2543
        %v2672 = vunpack.c.l.b16 %v2544
        %v2673 = vunpack.c.l.b16 %v2545
        %v2674 = vunpack.c.l.b16 %v2546
        %v2675 = vunpack.c.l.b16 %v2547
        %v2676 = vunpack.c.l.b16 %v2548
        %v2677 = vunpack.c.l.b16 %v2549
        %v2678 = vunpack.c.l.b16 %v2550
        %v2679 = vunpack.c.l.b16 %v2551
        %v2680 = vunpack.c.l.b16 %v2552
        %v2681 = vunpack.c.l.b16 %v2553
        %v2682 = vunpack.c.l.b16 %v2554
        %v2683 = vunpack.c.l.b16 %v2555
        %v2684 = vunpack.c.l.b16 %v2556
        %v2685 = vunpack.c.l.b16 %v2557
        %v2686 = vunpack.c.l.b16 %v2558
        %v2687 = vunpack.c.l.b16 %v2559
        %v2688 = vunpack.c.l.b16 %v2560
        %v2689 = vunpack.c.l.b16 %v2561
        %v2690 = vunpack.c.l.b16 %v2562
        %v2691 = vunpack.c.l.b16 %v2563
        %v2692 = vunpack.c.l.b16 %v2564
        %v2693 = vunpack.c.l.b16 %v2565
        %v2694 = vunpack.c.l.b16 %v2566
        %v2695 = vpack.c.b16 %v2632, %v2631
        %v2696 = vpack.c.b16 %v2634, %v2633
        %v2697 = vpack.c.b16 %v2636, %v2635
        %v2698 = vpack.c.b16 %v2638, %v2637
        %v2699 = vpack.c.b16 %v2640, %v2639
        %v2700 = vpack.c.b16 %v2642, %v2641
        %v2701 = vpack.c.b16 %v2644, %v2643
        %v2702 = vpack.c.b16 %v2646, %v2645
        %v2703 = vpack.c.b16 %v2648, %v2647
        %v2704 = vpack.c.b16 %v2650, %v2649
        %v2705 = vpack.c.b16 %v2652, %v2651
        %v2706 = vpack.c.b16 %v2654, %v2653
        %v2707 = vpack.c.b16 %v2656, %v2655
        %v2708 = vpack.c.b16 %v2658, %v2657
        %v2709 = vpack.c.b16 %v2660, %v2659
        %v2710 = vpack.c.b16 %v2662, %v2661
        %v2711 = vpack.c.b16 %v2664, %v2663
        %v2712 = vpack.c.b16 %v2666, %v2665
        %v2713 = vpack.c.b16 %v2668, %v2667
        %v2714 = vpack.c.b16 %v2670, %v2669
        %v2715 = vpack.c.b16 %v2672, %v2671
        %v2716 = vpack.c.b16 %v2674, %v2673
        %v2717 = vpack.c.b16 %v2676, %v2675
        %v2718 = vpack.c.b16 %v2678, %v2677
        %v2719 = vpack.c.b16 %v2680, %v2679
        %v2720 = vpack.c.b16 %v2682, %v2681
        %v2721 = vpack.c.b16 %v2684, %v2683
        %v2722 = vpack.c.b16 %v2686, %v2685
        %v2723 = vpack.c.b16 %v2688, %v2687
        %v2724 = vpack.c.b16 %v2690, %v2689
        %v2725 = vpack.c.b16 %v2692, %v2691
        %v2726 = vpack.c.b16 %v2694, %v2693
        %2759 = vmatpush.bf16.msra.mxu0 %v2702
        %2760 = vmatpush.bf16.msra.mxu0 %v2701
        %2761 = vmatpush.bf16.msra.mxu0 %v2700
        %2762 = vmatpush.bf16.msra.mxu0 %v2699
        %2763 = vmatpush.bf16.msra.mxu0 %v2698
        %2764 = vmatpush.bf16.msra.mxu0 %v2697
        %2765 = vmatpush.bf16.msra.mxu0 %v2696
        %2766 = vmatpush.bf16.msra.mxu0 %v2695
        %2767 = vmatmul.bf16.gmra.mxu0 %v2230
        %v2768 = vpop.f32.mrf.mxu0
        %v2769 = vadd.f32 0.0, %v2768
        %v2770 = vpop.f32.mrf.mxu0
        %2771 = vdwg.mxu0
        %2772 = vmatpush.bf16.msra.mxu0 %v2710
        %2773 = vmatpush.bf16.msra.mxu0 %v2709
        %2774 = vmatpush.bf16.msra.mxu0 %v2708
        %2775 = vmatpush.bf16.msra.mxu0 %v2707
        %2776 = vmatpush.bf16.msra.mxu0 %v2706
        %2777 = vmatpush.bf16.msra.mxu0 %v2705
        %2778 = vmatpush.bf16.msra.mxu0 %v2704
        %2779 = vmatpush.bf16.msra.mxu0 %v2703
        %2780 = vmatmul.bf16.gmra.mxu0 %v2237
        %v2781 = vpop.f32.mrf.mxu0
        %v2782 = vadd.f32 %v2769, %v2781
        %v2783 = vpop.f32.mrf.mxu0
        %2784 = vdwg.mxu0
        %2785 = vmatpush.bf16.msra.mxu0 %v2718
        %2786 = vmatpush.bf16.msra.mxu0 %v2717
        %2787 = vmatpush.bf16.msra.mxu0 %v2716
        %2788 = vmatpush.bf16.msra.mxu0 %v2715
        %2789 = vmatpush.bf16.msra.mxu0 %v2714
        %2790 = vmatpush.bf16.msra.mxu0 %v2713
        %2791 = vmatpush.bf16.msra.mxu0 %v2712
        %2792 = vmatpush.bf16.msra.mxu0 %v2711
        %2793 = vmatmul.bf16.gmra.mxu0 %v2244
        %v2794 = vpop.f32.mrf.mxu0
        %v2795 = vadd.f32 %v2782, %v2794
        %v2796 = vpop.f32.mrf.mxu0
        %2797 = vdwg.mxu0
        %2798 = vmatpush.bf16.msra.mxu0 %v2726
        %2799 = vmatpush.bf16.msra.mxu0 %v2725
        %2800 = vmatpush.bf16.msra.mxu0 %v2724
        %2801 = vmatpush.bf16.msra.mxu0 %v2723
        %2802 = vmatpush.bf16.msra.mxu0 %v2722
        %2803 = vmatpush.bf16.msra.mxu0 %v2721
        %2804 = vmatpush.bf16.msra.mxu0 %v2720
        %2805 = vmatpush.bf16.msra.mxu0 %v2719
        %2806 = vmatmul.bf16.gmra.mxu0 %v2251
        %v2807 = vpop.f32.mrf.mxu0
        %v2808 = vadd.f32 %v2795, %v2807
        %v2809 = vpop.f32.mrf.mxu0
        %2810 = vdwg.mxu0
        %v2811 = vsel %vm821, %v2808, 0.0
        %v2812 = vadd.f32 %v2501, %v2811
        %v2813 = vld [vmem:[#allocation2 + $0x10] sm:$0x66]
        %v2814 = vld [vmem:[#allocation2 + $0x18] sm:$0x66]
        %s2815 = scalar_lea.vmem %s318, 1792 [#allocation6]
        %v2816 = vld [vmem:[%s2815] sm:$0xf]
        %v2817 = vld [vmem:[%s2815 + $0x4] sm:$0xf]
        %v2818 = vld [vmem:[%s2815 + $0x8] sm:$0xf]
        %v2819 = vld [vmem:[%s2815 + $0xc] sm:$0xf]
        %v2820 = vld [vmem:[%s2815 + $0x10] sm:$0xf]
        %v2821 = vld [vmem:[%s2815 + $0x14] sm:$0xf]
        %v2822 = vld [vmem:[%s2815 + $0x18] sm:$0xf]
        %v2823 = vld [vmem:[%s2815 + $0x1c] sm:$0xf]
        %v2824 = vld [vmem:[%s2815 + $0x20] sm:$0xf]
        %v2825 = vld [vmem:[%s2815 + $0x24] sm:$0xf]
        %v2826 = vld [vmem:[%s2815 + $0x28] sm:$0xf]
        %v2827 = vld [vmem:[%s2815 + $0x2c] sm:$0xf]
        %v2828 = vld [vmem:[%s2815 + $0x30] sm:$0xf]
        %v2829 = vld [vmem:[%s2815 + $0x34] sm:$0xf]
        %v2830 = vld [vmem:[%s2815 + $0x38] sm:$0xf]
        %v2831 = vld [vmem:[%s2815 + $0x3c] sm:$0xf]
        %v2832 = vld [vmem:[%s2815 + $0x40] sm:$0xf]
        %v2833 = vld [vmem:[%s2815 + $0x44] sm:$0xf]
        %v2834 = vld [vmem:[%s2815 + $0x48] sm:$0xf]
        %v2835 = vld [vmem:[%s2815 + $0x4c] sm:$0xf]
        %v2836 = vld [vmem:[%s2815 + $0x50] sm:$0xf]
        %v2837 = vld [vmem:[%s2815 + $0x54] sm:$0xf]
        %v2838 = vld [vmem:[%s2815 + $0x58] sm:$0xf]
        %v2839 = vld [vmem:[%s2815 + $0x5c] sm:$0xf]
        %v2840 = vld [vmem:[%s2815 + $0x60] sm:$0xf]
        %v2841 = vld [vmem:[%s2815 + $0x64] sm:$0xf]
        %v2842 = vld [vmem:[%s2815 + $0x68] sm:$0xf]
        %v2843 = vld [vmem:[%s2815 + $0x6c] sm:$0xf]
        %v2844 = vld [vmem:[%s2815 + $0x70] sm:$0xf]
        %v2845 = vld [vmem:[%s2815 + $0x74] sm:$0xf]
        %v2846 = vld [vmem:[%s2815 + $0x78] sm:$0xf]
        %v2847 = vld [vmem:[%s2815 + $0x7c] sm:$0xf]
        %v2848 = vld [vmem:[%s2815 + $0x80] sm:$0xf]
        %v2849 = vld [vmem:[%s2815 + $0x84] sm:$0xf]
        %v2850 = vld [vmem:[%s2815 + $0x88] sm:$0xf]
        %v2851 = vld [vmem:[%s2815 + $0x8c] sm:$0xf]
        %v2852 = vld [vmem:[%s2815 + $0x90] sm:$0xf]
        %v2853 = vld [vmem:[%s2815 + $0x94] sm:$0xf]
        %v2854 = vld [vmem:[%s2815 + $0x98] sm:$0xf]
        %v2855 = vld [vmem:[%s2815 + $0x9c] sm:$0xf]
        %v2856 = vld [vmem:[%s2815 + $0xa0] sm:$0xf]
        %v2857 = vld [vmem:[%s2815 + $0xa4] sm:$0xf]
        %v2858 = vld [vmem:[%s2815 + $0xa8] sm:$0xf]
        %v2859 = vld [vmem:[%s2815 + $0xac] sm:$0xf]
        %v2860 = vld [vmem:[%s2815 + $0xb0] sm:$0xf]
        %v2861 = vld [vmem:[%s2815 + $0xb4] sm:$0xf]
        %v2862 = vld [vmem:[%s2815 + $0xb8] sm:$0xf]
        %v2863 = vld [vmem:[%s2815 + $0xbc] sm:$0xf]
        %v2864 = vld [vmem:[%s2815 + $0xc0] sm:$0xf]
        %v2865 = vld [vmem:[%s2815 + $0xc4] sm:$0xf]
        %v2866 = vld [vmem:[%s2815 + $0xc8] sm:$0xf]
        %v2867 = vld [vmem:[%s2815 + $0xcc] sm:$0xf]
        %v2868 = vld [vmem:[%s2815 + $0xd0] sm:$0xf]
        %v2869 = vld [vmem:[%s2815 + $0xd4] sm:$0xf]
        %v2870 = vld [vmem:[%s2815 + $0xd8] sm:$0xf]
        %v2871 = vld [vmem:[%s2815 + $0xdc] sm:$0xf]
        %v2872 = vld [vmem:[%s2815 + $0xe0] sm:$0xf]
        %v2873 = vld [vmem:[%s2815 + $0xe4] sm:$0xf]
        %v2874 = vld [vmem:[%s2815 + $0xe8] sm:$0xf]
        %v2875 = vld [vmem:[%s2815 + $0xec] sm:$0xf]
        %v2876 = vld [vmem:[%s2815 + $0xf0] sm:$0xf]
        %v2877 = vld [vmem:[%s2815 + $0xf4] sm:$0xf]
        %v2878 = vld [vmem:[%s2815 + $0xf8] sm:$0xf]
        %v2879 = vld [vmem:[%s2815 + $0xfc] sm:$0xf]
        %v2882 = vunpack.c.l.b16 %v2813
        %v2883 = vunpack.c.h.b16 %v2813
        %v2884 = vunpack.c.l.b16 %v2814
        %v2885 = vunpack.c.h.b16 %v2814
        %v2886 = vpack.c.b16 %v2882, %v2882
        %v2887 = vpack.c.b16 %v2883, %v2883
        %v2888 = vpack.c.b16 %v2884, %v2884
        %v2889 = vpack.c.b16 %v2885, %v2885
        %v2890 = vrot.slane %v2886, 1
        %v2891 = vrot.slane %v2887, 1
        %v2892 = vrot.slane %v2888, 1
        %v2893 = vrot.slane %v2889, 1
        %v2962 = vunpack.c.l.b16 %v2816
        %v2963 = vunpack.c.l.b16 %v2817
        %v2964 = vunpack.c.l.b16 %v2818
        %v2965 = vunpack.c.l.b16 %v2819
        %v2966 = vunpack.c.l.b16 %v2820
        %v2967 = vunpack.c.l.b16 %v2821
        %v2968 = vunpack.c.l.b16 %v2822
        %v2969 = vunpack.c.l.b16 %v2823
        %v2970 = vunpack.c.l.b16 %v2824
        %v2971 = vunpack.c.l.b16 %v2825
        %v2972 = vunpack.c.l.b16 %v2826
        %v2973 = vunpack.c.l.b16 %v2827
        %v2974 = vunpack.c.l.b16 %v2828
        %v2975 = vunpack.c.l.b16 %v2829
        %v2976 = vunpack.c.l.b16 %v2830
        %v2977 = vunpack.c.l.b16 %v2831
        %v2978 = vunpack.c.l.b16 %v2832
        %v2979 = vunpack.c.l.b16 %v2833
        %v2980 = vunpack.c.l.b16 %v2834
        %v2981 = vunpack.c.l.b16 %v2835
        %v2982 = vunpack.c.l.b16 %v2836
        %v2983 = vunpack.c.l.b16 %v2837
        %v2984 = vunpack.c.l.b16 %v2838
        %v2985 = vunpack.c.l.b16 %v2839
        %v2986 = vunpack.c.l.b16 %v2840
        %v2987 = vunpack.c.l.b16 %v2841
        %v2988 = vunpack.c.l.b16 %v2842
        %v2989 = vunpack.c.l.b16 %v2843
        %v2990 = vunpack.c.l.b16 %v2844
        %v2991 = vunpack.c.l.b16 %v2845
        %v2992 = vunpack.c.l.b16 %v2846
        %v2993 = vunpack.c.l.b16 %v2847
        %v2994 = vunpack.c.l.b16 %v2848
        %v2995 = vunpack.c.l.b16 %v2849
        %v2996 = vunpack.c.l.b16 %v2850
        %v2997 = vunpack.c.l.b16 %v2851
        %v2998 = vunpack.c.l.b16 %v2852
        %v2999 = vunpack.c.l.b16 %v2853
        %v3000 = vunpack.c.l.b16 %v2854
        %v3001 = vunpack.c.l.b16 %v2855
        %v3002 = vunpack.c.l.b16 %v2856
        %v3003 = vunpack.c.l.b16 %v2857
        %v3004 = vunpack.c.l.b16 %v2858
        %v3005 = vunpack.c.l.b16 %v2859
        %v3006 = vunpack.c.l.b16 %v2860
        %v3007 = vunpack.c.l.b16 %v2861
        %v3008 = vunpack.c.l.b16 %v2862
        %v3009 = vunpack.c.l.b16 %v2863
        %v3010 = vunpack.c.l.b16 %v2864
        %v3011 = vunpack.c.l.b16 %v2865
        %v3012 = vunpack.c.l.b16 %v2866
        %v3013 = vunpack.c.l.b16 %v2867
        %v3014 = vunpack.c.l.b16 %v2868
        %v3015 = vunpack.c.l.b16 %v2869
        %v3016 = vunpack.c.l.b16 %v2870
        %v3017 = vunpack.c.l.b16 %v2871
        %v3018 = vunpack.c.l.b16 %v2872
        %v3019 = vunpack.c.l.b16 %v2873
        %v3020 = vunpack.c.l.b16 %v2874
        %v3021 = vunpack.c.l.b16 %v2875
        %v3022 = vunpack.c.l.b16 %v2876
        %v3023 = vunpack.c.l.b16 %v2877
        %v3024 = vunpack.c.l.b16 %v2878
        %v3025 = vunpack.c.l.b16 %v2879
        %v3026 = vpack.c.b16 %v2963, %v2962
        %v3027 = vpack.c.b16 %v2965, %v2964
        %v3028 = vpack.c.b16 %v2967, %v2966
        %v3029 = vpack.c.b16 %v2969, %v2968
        %v3030 = vpack.c.b16 %v2971, %v2970
        %v3031 = vpack.c.b16 %v2973, %v2972
        %v3032 = vpack.c.b16 %v2975, %v2974
        %v3033 = vpack.c.b16 %v2977, %v2976
        %v3034 = vpack.c.b16 %v2979, %v2978
        %v3035 = vpack.c.b16 %v2981, %v2980
        %v3036 = vpack.c.b16 %v2983, %v2982
        %v3037 = vpack.c.b16 %v2985, %v2984
        %v3038 = vpack.c.b16 %v2987, %v2986
        %v3039 = vpack.c.b16 %v2989, %v2988
        %v3040 = vpack.c.b16 %v2991, %v2990
        %v3041 = vpack.c.b16 %v2993, %v2992
        %v3042 = vpack.c.b16 %v2995, %v2994
        %v3043 = vpack.c.b16 %v2997, %v2996
        %v3044 = vpack.c.b16 %v2999, %v2998
        %v3045 = vpack.c.b16 %v3001, %v3000
        %v3046 = vpack.c.b16 %v3003, %v3002
        %v3047 = vpack.c.b16 %v3005, %v3004
        %v3048 = vpack.c.b16 %v3007, %v3006
        %v3049 = vpack.c.b16 %v3009, %v3008
        %v3050 = vpack.c.b16 %v3011, %v3010
        %v3051 = vpack.c.b16 %v3013, %v3012
        %v3052 = vpack.c.b16 %v3015, %v3014
        %v3053 = vpack.c.b16 %v3017, %v3016
        %v3054 = vpack.c.b16 %v3019, %v3018
        %v3055 = vpack.c.b16 %v3021, %v3020
        %v3056 = vpack.c.b16 %v3023, %v3022
        %v3057 = vpack.c.b16 %v3025, %v3024
        %3090 = vmatpush.bf16.msra.mxu0 %v3033
        %3091 = vmatpush.bf16.msra.mxu0 %v3032
        %3092 = vmatpush.bf16.msra.mxu0 %v3031
        %3093 = vmatpush.bf16.msra.mxu0 %v3030
        %3094 = vmatpush.bf16.msra.mxu0 %v3029
        %3095 = vmatpush.bf16.msra.mxu0 %v3028
        %3096 = vmatpush.bf16.msra.mxu0 %v3027
        %3097 = vmatpush.bf16.msra.mxu0 %v3026
        %3098 = vmatmul.bf16.gmra.mxu0 %v2890
        %v3099 = vpop.f32.mrf.mxu0
        %v3100 = vadd.f32 0.0, %v3099
        %v3101 = vpop.f32.mrf.mxu0
        %3102 = vdwg.mxu0
        %3103 = vmatpush.bf16.msra.mxu0 %v3041
        %3104 = vmatpush.bf16.msra.mxu0 %v3040
        %3105 = vmatpush.bf16.msra.mxu0 %v3039
        %3106 = vmatpush.bf16.msra.mxu0 %v3038
        %3107 = vmatpush.bf16.msra.mxu0 %v3037
        %3108 = vmatpush.bf16.msra.mxu0 %v3036
        %3109 = vmatpush.bf16.msra.mxu0 %v3035
        %3110 = vmatpush.bf16.msra.mxu0 %v3034
        %3111 = vmatmul.bf16.gmra.mxu0 %v2891
        %v3112 = vpop.f32.mrf.mxu0
        %v3113 = vadd.f32 %v3100, %v3112
        %v3114 = vpop.f32.mrf.mxu0
        %3115 = vdwg.mxu0
        %3116 = vmatpush.bf16.msra.mxu0 %v3049
        %3117 = vmatpush.bf16.msra.mxu0 %v3048
        %3118 = vmatpush.bf16.msra.mxu0 %v3047
        %3119 = vmatpush.bf16.msra.mxu0 %v3046
        %3120 = vmatpush.bf16.msra.mxu0 %v3045
        %3121 = vmatpush.bf16.msra.mxu0 %v3044
        %3122 = vmatpush.bf16.msra.mxu0 %v3043
        %3123 = vmatpush.bf16.msra.mxu0 %v3042
        %3124 = vmatmul.bf16.gmra.mxu0 %v2892
        %v3125 = vpop.f32.mrf.mxu0
        %v3126 = vadd.f32 %v3113, %v3125
        %v3127 = vpop.f32.mrf.mxu0
        %3128 = vdwg.mxu0
        %3129 = vmatpush.bf16.msra.mxu0 %v3057
        %3130 = vmatpush.bf16.msra.mxu0 %v3056
        %3131 = vmatpush.bf16.msra.mxu0 %v3055
        %3132 = vmatpush.bf16.msra.mxu0 %v3054
        %3133 = vmatpush.bf16.msra.mxu0 %v3053
        %3134 = vmatpush.bf16.msra.mxu0 %v3052
        %3135 = vmatpush.bf16.msra.mxu0 %v3051
        %3136 = vmatpush.bf16.msra.mxu0 %v3050
        %3137 = vmatmul.bf16.gmra.mxu0 %v2893
        %v3138 = vpop.f32.mrf.mxu0
        %v3139 = vadd.f32 %v3126, %v3138
        %v3140 = vpop.f32.mrf.mxu0
        %3141 = vdwg.mxu0
        %v3142 = vadd.f32 %v2812, %v3139
        %v3143 = vld [vmem:[#allocation2 + $0x10] sm:$0xee]
        %v3144 = vld [vmem:[#allocation2 + $0x18] sm:$0xee]
        %s3145 = scalar_lea.vmem %s318, 2048 [#allocation6]
        %v3146 = vld [vmem:[%s3145] sm:$0xf]
        %v3147 = vld [vmem:[%s3145 + $0x4] sm:$0xf]
        %v3148 = vld [vmem:[%s3145 + $0x8] sm:$0xf]
        %v3149 = vld [vmem:[%s3145 + $0xc] sm:$0xf]
        %v3150 = vld [vmem:[%s3145 + $0x10] sm:$0xf]
        %v3151 = vld [vmem:[%s3145 + $0x14] sm:$0xf]
        %v3152 = vld [vmem:[%s3145 + $0x18] sm:$0xf]
        %v3153 = vld [vmem:[%s3145 + $0x1c] sm:$0xf]
        %v3154 = vld [vmem:[%s3145 + $0x20] sm:$0xf]
        %v3155 = vld [vmem:[%s3145 + $0x24] sm:$0xf]
        %v3156 = vld [vmem:[%s3145 + $0x28] sm:$0xf]
        %v3157 = vld [vmem:[%s3145 + $0x2c] sm:$0xf]
        %v3158 = vld [vmem:[%s3145 + $0x30] sm:$0xf]
        %v3159 = vld [vmem:[%s3145 + $0x34] sm:$0xf]
        %v3160 = vld [vmem:[%s3145 + $0x38] sm:$0xf]
        %v3161 = vld [vmem:[%s3145 + $0x3c] sm:$0xf]
        %v3162 = vld [vmem:[%s3145 + $0x40] sm:$0xf]
        %v3163 = vld [vmem:[%s3145 + $0x44] sm:$0xf]
        %v3164 = vld [vmem:[%s3145 + $0x48] sm:$0xf]
        %v3165 = vld [vmem:[%s3145 + $0x4c] sm:$0xf]
        %v3166 = vld [vmem:[%s3145 + $0x50] sm:$0xf]
        %v3167 = vld [vmem:[%s3145 + $0x54] sm:$0xf]
        %v3168 = vld [vmem:[%s3145 + $0x58] sm:$0xf]
        %v3169 = vld [vmem:[%s3145 + $0x5c] sm:$0xf]
        %v3170 = vld [vmem:[%s3145 + $0x60] sm:$0xf]
        %v3171 = vld [vmem:[%s3145 + $0x64] sm:$0xf]
        %v3172 = vld [vmem:[%s3145 + $0x68] sm:$0xf]
        %v3173 = vld [vmem:[%s3145 + $0x6c] sm:$0xf]
        %v3174 = vld [vmem:[%s3145 + $0x70] sm:$0xf]
        %v3175 = vld [vmem:[%s3145 + $0x74] sm:$0xf]
        %v3176 = vld [vmem:[%s3145 + $0x78] sm:$0xf]
        %v3177 = vld [vmem:[%s3145 + $0x7c] sm:$0xf]
        %v3178 = vld [vmem:[%s3145 + $0x80] sm:$0xf]
        %v3179 = vld [vmem:[%s3145 + $0x84] sm:$0xf]
        %v3180 = vld [vmem:[%s3145 + $0x88] sm:$0xf]
        %v3181 = vld [vmem:[%s3145 + $0x8c] sm:$0xf]
        %v3182 = vld [vmem:[%s3145 + $0x90] sm:$0xf]
        %v3183 = vld [vmem:[%s3145 + $0x94] sm:$0xf]
        %v3184 = vld [vmem:[%s3145 + $0x98] sm:$0xf]
        %v3185 = vld [vmem:[%s3145 + $0x9c] sm:$0xf]
        %v3186 = vld [vmem:[%s3145 + $0xa0] sm:$0xf]
        %v3187 = vld [vmem:[%s3145 + $0xa4] sm:$0xf]
        %v3188 = vld [vmem:[%s3145 + $0xa8] sm:$0xf]
        %v3189 = vld [vmem:[%s3145 + $0xac] sm:$0xf]
        %v3190 = vld [vmem:[%s3145 + $0xb0] sm:$0xf]
        %v3191 = vld [vmem:[%s3145 + $0xb4] sm:$0xf]
        %v3192 = vld [vmem:[%s3145 + $0xb8] sm:$0xf]
        %v3193 = vld [vmem:[%s3145 + $0xbc] sm:$0xf]
        %v3194 = vld [vmem:[%s3145 + $0xc0] sm:$0xf]
        %v3195 = vld [vmem:[%s3145 + $0xc4] sm:$0xf]
        %v3196 = vld [vmem:[%s3145 + $0xc8] sm:$0xf]
        %v3197 = vld [vmem:[%s3145 + $0xcc] sm:$0xf]
        %v3198 = vld [vmem:[%s3145 + $0xd0] sm:$0xf]
        %v3199 = vld [vmem:[%s3145 + $0xd4] sm:$0xf]
        %v3200 = vld [vmem:[%s3145 + $0xd8] sm:$0xf]
        %v3201 = vld [vmem:[%s3145 + $0xdc] sm:$0xf]
        %v3202 = vld [vmem:[%s3145 + $0xe0] sm:$0xf]
        %v3203 = vld [vmem:[%s3145 + $0xe4] sm:$0xf]
        %v3204 = vld [vmem:[%s3145 + $0xe8] sm:$0xf]
        %v3205 = vld [vmem:[%s3145 + $0xec] sm:$0xf]
        %v3206 = vld [vmem:[%s3145 + $0xf0] sm:$0xf]
        %v3207 = vld [vmem:[%s3145 + $0xf4] sm:$0xf]
        %v3208 = vld [vmem:[%s3145 + $0xf8] sm:$0xf]
        %v3209 = vld [vmem:[%s3145 + $0xfc] sm:$0xf]
        %v3212 = vunpack.c.l.b16 %v3143
        %v3213 = vunpack.c.h.b16 %v3143
        %v3214 = vunpack.c.l.b16 %v3144
        %v3215 = vunpack.c.h.b16 %v3144
        %v3216 = vpack.c.b16 %v3212, %v3212
        %v3217 = vpack.c.b16 %v3213, %v3213
        %v3218 = vpack.c.b16 %v3214, %v3214
        %v3219 = vpack.c.b16 %v3215, %v3215
        %v3221 = vshrl.u32 %v3216, 16
        %v3223 = vrot.slane %v3221, 1
        %v3224 = vshll.u32 %v3216, 16
        %v3226 = vrot.slane %v3224, 2
        %v3227 = vor.u32 %v3223, %v3226
        %v3229 = vshrl.u32 %v3217, 16
        %v3231 = vrot.slane %v3229, 1
        %v3232 = vshll.u32 %v3217, 16
        %v3234 = vrot.slane %v3232, 2
        %v3235 = vor.u32 %v3231, %v3234
        %v3237 = vshrl.u32 %v3218, 16
        %v3239 = vrot.slane %v3237, 1
        %v3240 = vshll.u32 %v3218, 16
        %v3242 = vrot.slane %v3240, 2
        %v3243 = vor.u32 %v3239, %v3242
        %v3245 = vshrl.u32 %v3219, 16
        %v3247 = vrot.slane %v3245, 1
        %v3248 = vshll.u32 %v3219, 16
        %v3250 = vrot.slane %v3248, 2
        %v3251 = vor.u32 %v3247, %v3250
        %v3320 = vunpack.c.l.b16 %v3146
        %v3321 = vunpack.c.l.b16 %v3147
        %v3322 = vunpack.c.l.b16 %v3148
        %v3323 = vunpack.c.l.b16 %v3149
        %v3324 = vunpack.c.l.b16 %v3150
        %v3325 = vunpack.c.l.b16 %v3151
        %v3326 = vunpack.c.l.b16 %v3152
        %v3327 = vunpack.c.l.b16 %v3153
        %v3328 = vunpack.c.l.b16 %v3154
        %v3329 = vunpack.c.l.b16 %v3155
        %v3330 = vunpack.c.l.b16 %v3156
        %v3331 = vunpack.c.l.b16 %v3157
        %v3332 = vunpack.c.l.b16 %v3158
        %v3333 = vunpack.c.l.b16 %v3159
        %v3334 = vunpack.c.l.b16 %v3160
        %v3335 = vunpack.c.l.b16 %v3161
        %v3336 = vunpack.c.l.b16 %v3162
        %v3337 = vunpack.c.l.b16 %v3163
        %v3338 = vunpack.c.l.b16 %v3164
        %v3339 = vunpack.c.l.b16 %v3165
        %v3340 = vunpack.c.l.b16 %v3166
        %v3341 = vunpack.c.l.b16 %v3167
        %v3342 = vunpack.c.l.b16 %v3168
        %v3343 = vunpack.c.l.b16 %v3169
        %v3344 = vunpack.c.l.b16 %v3170
        %v3345 = vunpack.c.l.b16 %v3171
        %v3346 = vunpack.c.l.b16 %v3172
        %v3347 = vunpack.c.l.b16 %v3173
        %v3348 = vunpack.c.l.b16 %v3174
        %v3349 = vunpack.c.l.b16 %v3175
        %v3350 = vunpack.c.l.b16 %v3176
        %v3351 = vunpack.c.l.b16 %v3177
        %v3352 = vunpack.c.l.b16 %v3178
        %v3353 = vunpack.c.l.b16 %v3179
        %v3354 = vunpack.c.l.b16 %v3180
        %v3355 = vunpack.c.l.b16 %v3181
        %v3356 = vunpack.c.l.b16 %v3182
        %v3357 = vunpack.c.l.b16 %v3183
        %v3358 = vunpack.c.l.b16 %v3184
        %v3359 = vunpack.c.l.b16 %v3185
        %v3360 = vunpack.c.l.b16 %v3186
        %v3361 = vunpack.c.l.b16 %v3187
        %v3362 = vunpack.c.l.b16 %v3188
        %v3363 = vunpack.c.l.b16 %v3189
        %v3364 = vunpack.c.l.b16 %v3190
        %v3365 = vunpack.c.l.b16 %v3191
        %v3366 = vunpack.c.l.b16 %v3192
        %v3367 = vunpack.c.l.b16 %v3193
        %v3368 = vunpack.c.l.b16 %v3194
        %v3369 = vunpack.c.l.b16 %v3195
        %v3370 = vunpack.c.l.b16 %v3196
        %v3371 = vunpack.c.l.b16 %v3197
        %v3372 = vunpack.c.l.b16 %v3198
        %v3373 = vunpack.c.l.b16 %v3199
        %v3374 = vunpack.c.l.b16 %v3200
        %v3375 = vunpack.c.l.b16 %v3201
        %v3376 = vunpack.c.l.b16 %v3202
        %v3377 = vunpack.c.l.b16 %v3203
        %v3378 = vunpack.c.l.b16 %v3204
        %v3379 = vunpack.c.l.b16 %v3205
        %v3380 = vunpack.c.l.b16 %v3206
        %v3381 = vunpack.c.l.b16 %v3207
        %v3382 = vunpack.c.l.b16 %v3208
        %v3383 = vunpack.c.l.b16 %v3209
        %v3384 = vpack.c.b16 %v3321, %v3320
        %v3385 = vpack.c.b16 %v3323, %v3322
        %v3386 = vpack.c.b16 %v3325, %v3324
        %v3387 = vpack.c.b16 %v3327, %v3326
        %v3388 = vpack.c.b16 %v3329, %v3328
        %v3389 = vpack.c.b16 %v3331, %v3330
        %v3390 = vpack.c.b16 %v3333, %v3332
        %v3391 = vpack.c.b16 %v3335, %v3334
        %v3392 = vpack.c.b16 %v3337, %v3336
        %v3393 = vpack.c.b16 %v3339, %v3338
        %v3394 = vpack.c.b16 %v3341, %v3340
        %v3395 = vpack.c.b16 %v3343, %v3342
        %v3396 = vpack.c.b16 %v3345, %v3344
        %v3397 = vpack.c.b16 %v3347, %v3346
        %v3398 = vpack.c.b16 %v3349, %v3348
        %v3399 = vpack.c.b16 %v3351, %v3350
        %v3400 = vpack.c.b16 %v3353, %v3352
        %v3401 = vpack.c.b16 %v3355, %v3354
        %v3402 = vpack.c.b16 %v3357, %v3356
        %v3403 = vpack.c.b16 %v3359, %v3358
        %v3404 = vpack.c.b16 %v3361, %v3360
        %v3405 = vpack.c.b16 %v3363, %v3362
        %v3406 = vpack.c.b16 %v3365, %v3364
        %v3407 = vpack.c.b16 %v3367, %v3366
        %v3408 = vpack.c.b16 %v3369, %v3368
        %v3409 = vpack.c.b16 %v3371, %v3370
        %v3410 = vpack.c.b16 %v3373, %v3372
        %v3411 = vpack.c.b16 %v3375, %v3374
        %v3412 = vpack.c.b16 %v3377, %v3376
        %v3413 = vpack.c.b16 %v3379, %v3378
        %v3414 = vpack.c.b16 %v3381, %v3380
        %v3415 = vpack.c.b16 %v3383, %v3382
        %3448 = vmatpush.bf16.msra.mxu0 %v3391
        %3449 = vmatpush.bf16.msra.mxu0 %v3390
        %3450 = vmatpush.bf16.msra.mxu0 %v3389
        %3451 = vmatpush.bf16.msra.mxu0 %v3388
        %3452 = vmatpush.bf16.msra.mxu0 %v3387
        %3453 = vmatpush.bf16.msra.mxu0 %v3386
        %3454 = vmatpush.bf16.msra.mxu0 %v3385
        %3455 = vmatpush.bf16.msra.mxu0 %v3384
        %3456 = vmatmul.bf16.gmra.mxu0 %v3227
        %v3457 = vpop.f32.mrf.mxu0
        %v3458 = vadd.f32 0.0, %v3457
        %v3459 = vpop.f32.mrf.mxu0
        %3460 = vdwg.mxu0
        %3461 = vmatpush.bf16.msra.mxu0 %v3399
        %3462 = vmatpush.bf16.msra.mxu0 %v3398
        %3463 = vmatpush.bf16.msra.mxu0 %v3397
        %3464 = vmatpush.bf16.msra.mxu0 %v3396
        %3465 = vmatpush.bf16.msra.mxu0 %v3395
        %3466 = vmatpush.bf16.msra.mxu0 %v3394
        %3467 = vmatpush.bf16.msra.mxu0 %v3393
        %3468 = vmatpush.bf16.msra.mxu0 %v3392
        %3469 = vmatmul.bf16.gmra.mxu0 %v3235
        %v3470 = vpop.f32.mrf.mxu0
        %v3471 = vadd.f32 %v3458, %v3470
        %v3472 = vpop.f32.mrf.mxu0
        %3473 = vdwg.mxu0
        %3474 = vmatpush.bf16.msra.mxu0 %v3407
        %3475 = vmatpush.bf16.msra.mxu0 %v3406
        %3476 = vmatpush.bf16.msra.mxu0 %v3405
        %3477 = vmatpush.bf16.msra.mxu0 %v3404
        %3478 = vmatpush.bf16.msra.mxu0 %v3403
        %3479 = vmatpush.bf16.msra.mxu0 %v3402
        %3480 = vmatpush.bf16.msra.mxu0 %v3401
        %3481 = vmatpush.bf16.msra.mxu0 %v3400
        %3482 = vmatmul.bf16.gmra.mxu0 %v3243
        %v3483 = vpop.f32.mrf.mxu0
        %v3484 = vadd.f32 %v3471, %v3483
        %v3485 = vpop.f32.mrf.mxu0
        %3486 = vdwg.mxu0
        %3487 = vmatpush.bf16.msra.mxu0 %v3415
        %3488 = vmatpush.bf16.msra.mxu0 %v3414
        %3489 = vmatpush.bf16.msra.mxu0 %v3413
        %3490 = vmatpush.bf16.msra.mxu0 %v3412
        %3491 = vmatpush.bf16.msra.mxu0 %v3411
        %3492 = vmatpush.bf16.msra.mxu0 %v3410
        %3493 = vmatpush.bf16.msra.mxu0 %v3409
        %3494 = vmatpush.bf16.msra.mxu0 %v3408
        %3495 = vmatmul.bf16.gmra.mxu0 %v3251
        %v3496 = vpop.f32.mrf.mxu0
        %v3497 = vadd.f32 %v3484, %v3496
        %v3498 = vpop.f32.mrf.mxu0
        %3499 = vdwg.mxu0
        %v3500 = vsel %vm1515, %v3497, 0.0
        %v3501 = vadd.f32 %v3142, %v3500
        %3502 = vst [vmem:[%s386] sm:$0xf] %v3501
        %vm3503 = vcmask 1043456
        %v3504 = vsel %vm3503, %v3501, 0.0
        %v3505 = vrot.slane %v3504, 4
        %v3506 = vadd.f32 %v3504, %v3505
        %v3507 = vrot.slane %v3506, 2
        %v3508 = vadd.f32 %v3506, %v3507
        %v3509 = vrot.slane %v3508, 1
        %v3510 = vadd.f32 %v3508, %v3509
        %v3511 = vadd.f32 %v3510, 0.0
        %v3512 = vmul.f32 %v3501, %v3501
        %v3513 = vsel %vm3503, %v3512, 0.0
        %v3514 = vrot.slane %v3513, 4
        %v3515 = vadd.f32 %v3513, %v3514
        %v3516 = vrot.slane %v3515, 2
        %v3517 = vadd.f32 %v3515, %v3516
        %v3518 = vrot.slane %v3517, 1
        %v3519 = vadd.f32 %v3517, %v3518
        %v3520 = vadd.f32 %v3519, 0.0
        %s3521 = scalar_lea.vmem [#allocation2], 32
        %v3522 = vld [vmem:[%s3521] sm:$0xcc]
        %v3523 = vld [vmem:[%s3521 + $0x8] sm:$0xcc]
        %v3524 = vld [vmem:[%s3521 + $0x10] sm:$0x11]
        %v3525 = vld [vmem:[%s3521 + $0x18] sm:$0x11]
        %v3526 = vld [vmem:[%s318] sm:$0xf]
        %v3527 = vld [vmem:[%s318 + $0x4] sm:$0xf]
        %v3528 = vld [vmem:[%s318 + $0x8] sm:$0xf]
        %v3529 = vld [vmem:[%s318 + $0xc] sm:$0xf]
        %v3530 = vld [vmem:[%s318 + $0x10] sm:$0xf]
        %v3531 = vld [vmem:[%s318 + $0x14] sm:$0xf]
        %v3532 = vld [vmem:[%s318 + $0x18] sm:$0xf]
        %v3533 = vld [vmem:[%s318 + $0x1c] sm:$0xf]
        %v3534 = vld [vmem:[%s318 + $0x20] sm:$0xf]
        %v3535 = vld [vmem:[%s318 + $0x24] sm:$0xf]
        %v3536 = vld [vmem:[%s318 + $0x28] sm:$0xf]
        %v3537 = vld [vmem:[%s318 + $0x2c] sm:$0xf]
        %v3538 = vld [vmem:[%s318 + $0x30] sm:$0xf]
        %v3539 = vld [vmem:[%s318 + $0x34] sm:$0xf]
        %v3540 = vld [vmem:[%s318 + $0x38] sm:$0xf]
        %v3541 = vld [vmem:[%s318 + $0x3c] sm:$0xf]
        %v3542 = vld [vmem:[%s318 + $0x40] sm:$0xf]
        %v3543 = vld [vmem:[%s318 + $0x44] sm:$0xf]
        %v3544 = vld [vmem:[%s318 + $0x48] sm:$0xf]
        %v3545 = vld [vmem:[%s318 + $0x4c] sm:$0xf]
        %v3546 = vld [vmem:[%s318 + $0x50] sm:$0xf]
        %v3547 = vld [vmem:[%s318 + $0x54] sm:$0xf]
        %v3548 = vld [vmem:[%s318 + $0x58] sm:$0xf]
        %v3549 = vld [vmem:[%s318 + $0x5c] sm:$0xf]
        %v3550 = vld [vmem:[%s318 + $0x60] sm:$0xf]
        %v3551 = vld [vmem:[%s318 + $0x64] sm:$0xf]
        %v3552 = vld [vmem:[%s318 + $0x68] sm:$0xf]
        %v3553 = vld [vmem:[%s318 + $0x6c] sm:$0xf]
        %v3554 = vld [vmem:[%s318 + $0x70] sm:$0xf]
        %v3555 = vld [vmem:[%s318 + $0x74] sm:$0xf]
        %v3556 = vld [vmem:[%s318 + $0x78] sm:$0xf]
        %v3557 = vld [vmem:[%s318 + $0x7c] sm:$0xf]
        %v3558 = vld [vmem:[%s318 + $0x80] sm:$0xf]
        %v3559 = vld [vmem:[%s318 + $0x84] sm:$0xf]
        %v3560 = vld [vmem:[%s318 + $0x88] sm:$0xf]
        %v3561 = vld [vmem:[%s318 + $0x8c] sm:$0xf]
        %v3562 = vld [vmem:[%s318 + $0x90] sm:$0xf]
        %v3563 = vld [vmem:[%s318 + $0x94] sm:$0xf]
        %v3564 = vld [vmem:[%s318 + $0x98] sm:$0xf]
        %v3565 = vld [vmem:[%s318 + $0x9c] sm:$0xf]
        %v3566 = vld [vmem:[%s318 + $0xa0] sm:$0xf]
        %v3567 = vld [vmem:[%s318 + $0xa4] sm:$0xf]
        %v3568 = vld [vmem:[%s318 + $0xa8] sm:$0xf]
        %v3569 = vld [vmem:[%s318 + $0xac] sm:$0xf]
        %v3570 = vld [vmem:[%s318 + $0xb0] sm:$0xf]
        %v3571 = vld [vmem:[%s318 + $0xb4] sm:$0xf]
        %v3572 = vld [vmem:[%s318 + $0xb8] sm:$0xf]
        %v3573 = vld [vmem:[%s318 + $0xbc] sm:$0xf]
        %v3574 = vld [vmem:[%s318 + $0xc0] sm:$0xf]
        %v3575 = vld [vmem:[%s318 + $0xc4] sm:$0xf]
        %v3576 = vld [vmem:[%s318 + $0xc8] sm:$0xf]
        %v3577 = vld [vmem:[%s318 + $0xcc] sm:$0xf]
        %v3578 = vld [vmem:[%s318 + $0xd0] sm:$0xf]
        %v3579 = vld [vmem:[%s318 + $0xd4] sm:$0xf]
        %v3580 = vld [vmem:[%s318 + $0xd8] sm:$0xf]
        %v3581 = vld [vmem:[%s318 + $0xdc] sm:$0xf]
        %v3582 = vld [vmem:[%s318 + $0xe0] sm:$0xf]
        %v3583 = vld [vmem:[%s318 + $0xe4] sm:$0xf]
        %v3584 = vld [vmem:[%s318 + $0xe8] sm:$0xf]
        %v3585 = vld [vmem:[%s318 + $0xec] sm:$0xf]
        %v3586 = vld [vmem:[%s318 + $0xf0] sm:$0xf]
        %v3587 = vld [vmem:[%s318 + $0xf4] sm:$0xf]
        %v3588 = vld [vmem:[%s318 + $0xf8] sm:$0xf]
        %v3589 = vld [vmem:[%s318 + $0xfc] sm:$0xf]
        %v3594 = vunpack.c.l.b16 %v3522
        %v3595 = vunpack.c.h.b16 %v3522
        %v3596 = vunpack.c.l.b16 %v3523
        %v3597 = vunpack.c.h.b16 %v3523
        %v3598 = vunpack.c.l.b16 %v3524
        %v3599 = vunpack.c.h.b16 %v3524
        %v3600 = vunpack.c.l.b16 %v3525
        %v3601 = vunpack.c.h.b16 %v3525
        %v3602 = vpack.c.b16 %v3598, %v3594
        %v3603 = vpack.c.b16 %v3599, %v3595
        %v3604 = vpack.c.b16 %v3600, %v3596
        %v3605 = vpack.c.b16 %v3601, %v3597
        %v3607 = vshrl.u32 %v3602, 16
        %v3609 = vrot.slane %v3607, 2
        %v3610 = vshll.u32 %v3602, 16
        %v3612 = vrot.slane %v3610, 3
        %v3613 = vor.u32 %v3609, %v3612
        %v3615 = vshrl.u32 %v3603, 16
        %v3617 = vrot.slane %v3615, 2
        %v3618 = vshll.u32 %v3603, 16
        %v3620 = vrot.slane %v3618, 3
        %v3621 = vor.u32 %v3617, %v3620
        %v3623 = vshrl.u32 %v3604, 16
        %v3625 = vrot.slane %v3623, 2
        %v3626 = vshll.u32 %v3604, 16
        %v3628 = vrot.slane %v3626, 3
        %v3629 = vor.u32 %v3625, %v3628
        %v3631 = vshrl.u32 %v3605, 16
        %v3633 = vrot.slane %v3631, 2
        %v3634 = vshll.u32 %v3605, 16
        %v3636 = vrot.slane %v3634, 3
        %v3637 = vor.u32 %v3633, %v3636
        %v3706 = vunpack.c.l.b16 %v3526
        %v3707 = vunpack.c.l.b16 %v3527
        %v3708 = vunpack.c.l.b16 %v3528
        %v3709 = vunpack.c.l.b16 %v3529
        %v3710 = vunpack.c.l.b16 %v3530
        %v3711 = vunpack.c.l.b16 %v3531
        %v3712 = vunpack.c.l.b16 %v3532
        %v3713 = vunpack.c.l.b16 %v3533
        %v3714 = vunpack.c.l.b16 %v3534
        %v3715 = vunpack.c.l.b16 %v3535
        %v3716 = vunpack.c.l.b16 %v3536
        %v3717 = vunpack.c.l.b16 %v3537
        %v3718 = vunpack.c.l.b16 %v3538
        %v3719 = vunpack.c.l.b16 %v3539
        %v3720 = vunpack.c.l.b16 %v3540
        %v3721 = vunpack.c.l.b16 %v3541
        %v3722 = vunpack.c.l.b16 %v3542
        %v3723 = vunpack.c.l.b16 %v3543
        %v3724 = vunpack.c.l.b16 %v3544
        %v3725 = vunpack.c.l.b16 %v3545
        %v3726 = vunpack.c.l.b16 %v3546
        %v3727 = vunpack.c.l.b16 %v3547
        %v3728 = vunpack.c.l.b16 %v3548
        %v3729 = vunpack.c.l.b16 %v3549
        %v3730 = vunpack.c.l.b16 %v3550
        %v3731 = vunpack.c.l.b16 %v3551
        %v3732 = vunpack.c.l.b16 %v3552
        %v3733 = vunpack.c.l.b16 %v3553
        %v3734 = vunpack.c.l.b16 %v3554
        %v3735 = vunpack.c.l.b16 %v3555
        %v3736 = vunpack.c.l.b16 %v3556
        %v3737 = vunpack.c.l.b16 %v3557
        %v3738 = vunpack.c.l.b16 %v3558
        %v3739 = vunpack.c.l.b16 %v3559
        %v3740 = vunpack.c.l.b16 %v3560
        %v3741 = vunpack.c.l.b16 %v3561
        %v3742 = vunpack.c.l.b16 %v3562
        %v3743 = vunpack.c.l.b16 %v3563
        %v3744 = vunpack.c.l.b16 %v3564
        %v3745 = vunpack.c.l.b16 %v3565
        %v3746 = vunpack.c.l.b16 %v3566
        %v3747 = vunpack.c.l.b16 %v3567
        %v3748 = vunpack.c.l.b16 %v3568
        %v3749 = vunpack.c.l.b16 %v3569
        %v3750 = vunpack.c.l.b16 %v3570
        %v3751 = vunpack.c.l.b16 %v3571
        %v3752 = vunpack.c.l.b16 %v3572
        %v3753 = vunpack.c.l.b16 %v3573
        %v3754 = vunpack.c.l.b16 %v3574
        %v3755 = vunpack.c.l.b16 %v3575
        %v3756 = vunpack.c.l.b16 %v3576
        %v3757 = vunpack.c.l.b16 %v3577
        %v3758 = vunpack.c.l.b16 %v3578
        %v3759 = vunpack.c.l.b16 %v3579
        %v3760 = vunpack.c.l.b16 %v3580
        %v3761 = vunpack.c.l.b16 %v3581
        %v3762 = vunpack.c.l.b16 %v3582
        %v3763 = vunpack.c.l.b16 %v3583
        %v3764 = vunpack.c.l.b16 %v3584
        %v3765 = vunpack.c.l.b16 %v3585
        %v3766 = vunpack.c.l.b16 %v3586
        %v3767 = vunpack.c.l.b16 %v3587
        %v3768 = vunpack.c.l.b16 %v3588
        %v3769 = vunpack.c.l.b16 %v3589
        %v3770 = vpack.c.b16 %v3707, %v3706
        %v3771 = vpack.c.b16 %v3709, %v3708
        %v3772 = vpack.c.b16 %v3711, %v3710
        %v3773 = vpack.c.b16 %v3713, %v3712
        %v3774 = vpack.c.b16 %v3715, %v3714
        %v3775 = vpack.c.b16 %v3717, %v3716
        %v3776 = vpack.c.b16 %v3719, %v3718
        %v3777 = vpack.c.b16 %v3721, %v3720
        %v3778 = vpack.c.b16 %v3723, %v3722
        %v3779 = vpack.c.b16 %v3725, %v3724
        %v3780 = vpack.c.b16 %v3727, %v3726
        %v3781 = vpack.c.b16 %v3729, %v3728
        %v3782 = vpack.c.b16 %v3731, %v3730
        %v3783 = vpack.c.b16 %v3733, %v3732
        %v3784 = vpack.c.b16 %v3735, %v3734
        %v3785 = vpack.c.b16 %v3737, %v3736
        %v3786 = vpack.c.b16 %v3739, %v3738
        %v3787 = vpack.c.b16 %v3741, %v3740
        %v3788 = vpack.c.b16 %v3743, %v3742
        %v3789 = vpack.c.b16 %v3745, %v3744
        %v3790 = vpack.c.b16 %v3747, %v3746
        %v3791 = vpack.c.b16 %v3749, %v3748
        %v3792 = vpack.c.b16 %v3751, %v3750
        %v3793 = vpack.c.b16 %v3753, %v3752
        %v3794 = vpack.c.b16 %v3755, %v3754
        %v3795 = vpack.c.b16 %v3757, %v3756
        %v3796 = vpack.c.b16 %v3759, %v3758
        %v3797 = vpack.c.b16 %v3761, %v3760
        %v3798 = vpack.c.b16 %v3763, %v3762
        %v3799 = vpack.c.b16 %v3765, %v3764
        %v3800 = vpack.c.b16 %v3767, %v3766
        %v3801 = vpack.c.b16 %v3769, %v3768
        %3834 = vmatpush.bf16.msra.mxu0 %v3777
        %3835 = vmatpush.bf16.msra.mxu0 %v3776
        %3836 = vmatpush.bf16.msra.mxu0 %v3775
        %3837 = vmatpush.bf16.msra.mxu0 %v3774
        %3838 = vmatpush.bf16.msra.mxu0 %v3773
        %3839 = vmatpush.bf16.msra.mxu0 %v3772
        %3840 = vmatpush.bf16.msra.mxu0 %v3771
        %3841 = vmatpush.bf16.msra.mxu0 %v3770
        %3842 = vmatmul.bf16.gmra.mxu0 %v3613
        %v3843 = vpop.f32.mrf.mxu0
        %v3844 = vadd.f32 0.0, %v3843
        %v3845 = vpop.f32.mrf.mxu0
        %3846 = vdwg.mxu0
        %3847 = vmatpush.bf16.msra.mxu0 %v3785
        %3848 = vmatpush.bf16.msra.mxu0 %v3784
        %3849 = vmatpush.bf16.msra.mxu0 %v3783
        %3850 = vmatpush.bf16.msra.mxu0 %v3782
        %3851 = vmatpush.bf16.msra.mxu0 %v3781
        %3852 = vmatpush.bf16.msra.mxu0 %v3780
        %3853 = vmatpush.bf16.msra.mxu0 %v3779
        %3854 = vmatpush.bf16.msra.mxu0 %v3778
        %3855 = vmatmul.bf16.gmra.mxu0 %v3621
        %v3856 = vpop.f32.mrf.mxu0
        %v3857 = vadd.f32 %v3844, %v3856
        %v3858 = vpop.f32.mrf.mxu0
        %3859 = vdwg.mxu0
        %3860 = vmatpush.bf16.msra.mxu0 %v3793
        %3861 = vmatpush.bf16.msra.mxu0 %v3792
        %3862 = vmatpush.bf16.msra.mxu0 %v3791
        %3863 = vmatpush.bf16.msra.mxu0 %v3790
        %3864 = vmatpush.bf16.msra.mxu0 %v3789
        %3865 = vmatpush.bf16.msra.mxu0 %v3788
        %3866 = vmatpush.bf16.msra.mxu0 %v3787
        %3867 = vmatpush.bf16.msra.mxu0 %v3786
        %3868 = vmatmul.bf16.gmra.mxu0 %v3629
        %v3869 = vpop.f32.mrf.mxu0
        %v3870 = vadd.f32 %v3857, %v3869
        %v3871 = vpop.f32.mrf.mxu0
        %3872 = vdwg.mxu0
        %3873 = vmatpush.bf16.msra.mxu0 %v3801
        %3874 = vmatpush.bf16.msra.mxu0 %v3800
        %3875 = vmatpush.bf16.msra.mxu0 %v3799
        %3876 = vmatpush.bf16.msra.mxu0 %v3798
        %3877 = vmatpush.bf16.msra.mxu0 %v3797
        %3878 = vmatpush.bf16.msra.mxu0 %v3796
        %3879 = vmatpush.bf16.msra.mxu0 %v3795
        %3880 = vmatpush.bf16.msra.mxu0 %v3794
        %3881 = vmatmul.bf16.gmra.mxu0 %v3637
        %v3882 = vpop.f32.mrf.mxu0
        %v3883 = vadd.f32 %v3870, %v3882
        %v3884 = vpop.f32.mrf.mxu0
        %3885 = vdwg.mxu0
        %v3886 = vsel %vm821, %v3883, 0.0
        %v3887 = vadd.f32 %v3886, 0.0
        %v3888 = vld [vmem:[%s3521] sm:$0x88]
        %v3889 = vld [vmem:[%s3521 + $0x8] sm:$0x88]
        %v3890 = vld [vmem:[%s826] sm:$0xf]
        %v3891 = vld [vmem:[%s826 + $0x4] sm:$0xf]
        %v3892 = vld [vmem:[%s826 + $0x8] sm:$0xf]
        %v3893 = vld [vmem:[%s826 + $0xc] sm:$0xf]
        %v3894 = vld [vmem:[%s826 + $0x10] sm:$0xf]
        %v3895 = vld [vmem:[%s826 + $0x14] sm:$0xf]
        %v3896 = vld [vmem:[%s826 + $0x18] sm:$0xf]
        %v3897 = vld [vmem:[%s826 + $0x1c] sm:$0xf]
        %v3898 = vld [vmem:[%s826 + $0x20] sm:$0xf]
        %v3899 = vld [vmem:[%s826 + $0x24] sm:$0xf]
        %v3900 = vld [vmem:[%s826 + $0x28] sm:$0xf]
        %v3901 = vld [vmem:[%s826 + $0x2c] sm:$0xf]
        %v3902 = vld [vmem:[%s826 + $0x30] sm:$0xf]
        %v3903 = vld [vmem:[%s826 + $0x34] sm:$0xf]
        %v3904 = vld [vmem:[%s826 + $0x38] sm:$0xf]
        %v3905 = vld [vmem:[%s826 + $0x3c] sm:$0xf]
        %v3906 = vld [vmem:[%s826 + $0x40] sm:$0xf]
        %v3907 = vld [vmem:[%s826 + $0x44] sm:$0xf]
        %v3908 = vld [vmem:[%s826 + $0x48] sm:$0xf]
        %v3909 = vld [vmem:[%s826 + $0x4c] sm:$0xf]
        %v3910 = vld [vmem:[%s826 + $0x50] sm:$0xf]
        %v3911 = vld [vmem:[%s826 + $0x54] sm:$0xf]
        %v3912 = vld [vmem:[%s826 + $0x58] sm:$0xf]
        %v3913 = vld [vmem:[%s826 + $0x5c] sm:$0xf]
        %v3914 = vld [vmem:[%s826 + $0x60] sm:$0xf]
        %v3915 = vld [vmem:[%s826 + $0x64] sm:$0xf]
        %v3916 = vld [vmem:[%s826 + $0x68] sm:$0xf]
        %v3917 = vld [vmem:[%s826 + $0x6c] sm:$0xf]
        %v3918 = vld [vmem:[%s826 + $0x70] sm:$0xf]
        %v3919 = vld [vmem:[%s826 + $0x74] sm:$0xf]
        %v3920 = vld [vmem:[%s826 + $0x78] sm:$0xf]
        %v3921 = vld [vmem:[%s826 + $0x7c] sm:$0xf]
        %v3922 = vld [vmem:[%s826 + $0x80] sm:$0xf]
        %v3923 = vld [vmem:[%s826 + $0x84] sm:$0xf]
        %v3924 = vld [vmem:[%s826 + $0x88] sm:$0xf]
        %v3925 = vld [vmem:[%s826 + $0x8c] sm:$0xf]
        %v3926 = vld [vmem:[%s826 + $0x90] sm:$0xf]
        %v3927 = vld [vmem:[%s826 + $0x94] sm:$0xf]
        %v3928 = vld [vmem:[%s826 + $0x98] sm:$0xf]
        %v3929 = vld [vmem:[%s826 + $0x9c] sm:$0xf]
        %v3930 = vld [vmem:[%s826 + $0xa0] sm:$0xf]
        %v3931 = vld [vmem:[%s826 + $0xa4] sm:$0xf]
        %v3932 = vld [vmem:[%s826 + $0xa8] sm:$0xf]
        %v3933 = vld [vmem:[%s826 + $0xac] sm:$0xf]
        %v3934 = vld [vmem:[%s826 + $0xb0] sm:$0xf]
        %v3935 = vld [vmem:[%s826 + $0xb4] sm:$0xf]
        %v3936 = vld [vmem:[%s826 + $0xb8] sm:$0xf]
        %v3937 = vld [vmem:[%s826 + $0xbc] sm:$0xf]
        %v3938 = vld [vmem:[%s826 + $0xc0] sm:$0xf]
        %v3939 = vld [vmem:[%s826 + $0xc4] sm:$0xf]
        %v3940 = vld [vmem:[%s826 + $0xc8] sm:$0xf]
        %v3941 = vld [vmem:[%s826 + $0xcc] sm:$0xf]
        %v3942 = vld [vmem:[%s826 + $0xd0] sm:$0xf]
        %v3943 = vld [vmem:[%s826 + $0xd4] sm:$0xf]
        %v3944 = vld [vmem:[%s826 + $0xd8] sm:$0xf]
        %v3945 = vld [vmem:[%s826 + $0xdc] sm:$0xf]
        %v3946 = vld [vmem:[%s826 + $0xe0] sm:$0xf]
        %v3947 = vld [vmem:[%s826 + $0xe4] sm:$0xf]
        %v3948 = vld [vmem:[%s826 + $0xe8] sm:$0xf]
        %v3949 = vld [vmem:[%s826 + $0xec] sm:$0xf]
        %v3950 = vld [vmem:[%s826 + $0xf0] sm:$0xf]
        %v3951 = vld [vmem:[%s826 + $0xf4] sm:$0xf]
        %v3952 = vld [vmem:[%s826 + $0xf8] sm:$0xf]
        %v3953 = vld [vmem:[%s826 + $0xfc] sm:$0xf]
        %v3956 = vunpack.c.l.b16 %v3888
        %v3957 = vunpack.c.h.b16 %v3888
        %v3958 = vunpack.c.l.b16 %v3889
        %v3959 = vunpack.c.h.b16 %v3889
        %v3960 = vpack.c.b16 %v3598, %v3956
        %v3961 = vpack.c.b16 %v3599, %v3957
        %v3962 = vpack.c.b16 %v3600, %v3958
        %v3963 = vpack.c.b16 %v3601, %v3959
        %v3964 = vrot.slane %v3960, 3
        %v3965 = vrot.slane %v3961, 3
        %v3966 = vrot.slane %v3962, 3
        %v3967 = vrot.slane %v3963, 3
        %v4036 = vunpack.c.l.b16 %v3890
        %v4037 = vunpack.c.l.b16 %v3891
        %v4038 = vunpack.c.l.b16 %v3892
        %v4039 = vunpack.c.l.b16 %v3893
        %v4040 = vunpack.c.l.b16 %v3894
        %v4041 = vunpack.c.l.b16 %v3895
        %v4042 = vunpack.c.l.b16 %v3896
        %v4043 = vunpack.c.l.b16 %v3897
        %v4044 = vunpack.c.l.b16 %v3898
        %v4045 = vunpack.c.l.b16 %v3899
        %v4046 = vunpack.c.l.b16 %v3900
        %v4047 = vunpack.c.l.b16 %v3901
        %v4048 = vunpack.c.l.b16 %v3902
        %v4049 = vunpack.c.l.b16 %v3903
        %v4050 = vunpack.c.l.b16 %v3904
        %v4051 = vunpack.c.l.b16 %v3905
        %v4052 = vunpack.c.l.b16 %v3906
        %v4053 = vunpack.c.l.b16 %v3907
        %v4054 = vunpack.c.l.b16 %v3908
        %v4055 = vunpack.c.l.b16 %v3909
        %v4056 = vunpack.c.l.b16 %v3910
        %v4057 = vunpack.c.l.b16 %v3911
        %v4058 = vunpack.c.l.b16 %v3912
        %v4059 = vunpack.c.l.b16 %v3913
        %v4060 = vunpack.c.l.b16 %v3914
        %v4061 = vunpack.c.l.b16 %v3915
        %v4062 = vunpack.c.l.b16 %v3916
        %v4063 = vunpack.c.l.b16 %v3917
        %v4064 = vunpack.c.l.b16 %v3918
        %v4065 = vunpack.c.l.b16 %v3919
        %v4066 = vunpack.c.l.b16 %v3920
        %v4067 = vunpack.c.l.b16 %v3921
        %v4068 = vunpack.c.l.b16 %v3922
        %v4069 = vunpack.c.l.b16 %v3923
        %v4070 = vunpack.c.l.b16 %v3924
        %v4071 = vunpack.c.l.b16 %v3925
        %v4072 = vunpack.c.l.b16 %v3926
        %v4073 = vunpack.c.l.b16 %v3927
        %v4074 = vunpack.c.l.b16 %v3928
        %v4075 = vunpack.c.l.b16 %v3929
        %v4076 = vunpack.c.l.b16 %v3930
        %v4077 = vunpack.c.l.b16 %v3931
        %v4078 = vunpack.c.l.b16 %v3932
        %v4079 = vunpack.c.l.b16 %v3933
        %v4080 = vunpack.c.l.b16 %v3934
        %v4081 = vunpack.c.l.b16 %v3935
        %v4082 = vunpack.c.l.b16 %v3936
        %v4083 = vunpack.c.l.b16 %v3937
        %v4084 = vunpack.c.l.b16 %v3938
        %v4085 = vunpack.c.l.b16 %v3939
        %v4086 = vunpack.c.l.b16 %v3940
        %v4087 = vunpack.c.l.b16 %v3941
        %v4088 = vunpack.c.l.b16 %v3942
        %v4089 = vunpack.c.l.b16 %v3943
        %v4090 = vunpack.c.l.b16 %v3944
        %v4091 = vunpack.c.l.b16 %v3945
        %v4092 = vunpack.c.l.b16 %v3946
        %v4093 = vunpack.c.l.b16 %v3947
        %v4094 = vunpack.c.l.b16 %v3948
        %v4095 = vunpack.c.l.b16 %v3949
        %v4096 = vunpack.c.l.b16 %v3950
        %v4097 = vunpack.c.l.b16 %v3951
        %v4098 = vunpack.c.l.b16 %v3952
        %v4099 = vunpack.c.l.b16 %v3953
        %v4100 = vpack.c.b16 %v4037, %v4036
        %v4101 = vpack.c.b16 %v4039, %v4038
        %v4102 = vpack.c.b16 %v4041, %v4040
        %v4103 = vpack.c.b16 %v4043, %v4042
        %v4104 = vpack.c.b16 %v4045, %v4044
        %v4105 = vpack.c.b16 %v4047, %v4046
        %v4106 = vpack.c.b16 %v4049, %v4048
        %v4107 = vpack.c.b16 %v4051, %v4050
        %v4108 = vpack.c.b16 %v4053, %v4052
        %v4109 = vpack.c.b16 %v4055, %v4054
        %v4110 = vpack.c.b16 %v4057, %v4056
        %v4111 = vpack.c.b16 %v4059, %v4058
        %v4112 = vpack.c.b16 %v4061, %v4060
        %v4113 = vpack.c.b16 %v4063, %v4062
        %v4114 = vpack.c.b16 %v4065, %v4064
        %v4115 = vpack.c.b16 %v4067, %v4066
        %v4116 = vpack.c.b16 %v4069, %v4068
        %v4117 = vpack.c.b16 %v4071, %v4070
        %v4118 = vpack.c.b16 %v4073, %v4072
        %v4119 = vpack.c.b16 %v4075, %v4074
        %v4120 = vpack.c.b16 %v4077, %v4076
        %v4121 = vpack.c.b16 %v4079, %v4078
        %v4122 = vpack.c.b16 %v4081, %v4080
        %v4123 = vpack.c.b16 %v4083, %v4082
        %v4124 = vpack.c.b16 %v4085, %v4084
        %v4125 = vpack.c.b16 %v4087, %v4086
        %v4126 = vpack.c.b16 %v4089, %v4088
        %v4127 = vpack.c.b16 %v4091, %v4090
        %v4128 = vpack.c.b16 %v4093, %v4092
        %v4129 = vpack.c.b16 %v4095, %v4094
        %v4130 = vpack.c.b16 %v4097, %v4096
        %v4131 = vpack.c.b16 %v4099, %v4098
        %4164 = vmatpush.bf16.msra.mxu0 %v4107
        %4165 = vmatpush.bf16.msra.mxu0 %v4106
        %4166 = vmatpush.bf16.msra.mxu0 %v4105
        %4167 = vmatpush.bf16.msra.mxu0 %v4104
        %4168 = vmatpush.bf16.msra.mxu0 %v4103
        %4169 = vmatpush.bf16.msra.mxu0 %v4102
        %4170 = vmatpush.bf16.msra.mxu0 %v4101
        %4171 = vmatpush.bf16.msra.mxu0 %v4100
        %4172 = vmatmul.bf16.gmra.mxu0 %v3964
        %v4173 = vpop.f32.mrf.mxu0
        %v4174 = vadd.f32 0.0, %v4173
        %v4175 = vpop.f32.mrf.mxu0
        %4176 = vdwg.mxu0
        %4177 = vmatpush.bf16.msra.mxu0 %v4115
        %4178 = vmatpush.bf16.msra.mxu0 %v4114
        %4179 = vmatpush.bf16.msra.mxu0 %v4113
        %4180 = vmatpush.bf16.msra.mxu0 %v4112
        %4181 = vmatpush.bf16.msra.mxu0 %v4111
        %4182 = vmatpush.bf16.msra.mxu0 %v4110
        %4183 = vmatpush.bf16.msra.mxu0 %v4109
        %4184 = vmatpush.bf16.msra.mxu0 %v4108
        %4185 = vmatmul.bf16.gmra.mxu0 %v3965
        %v4186 = vpop.f32.mrf.mxu0
        %v4187 = vadd.f32 %v4174, %v4186
        %v4188 = vpop.f32.mrf.mxu0
        %4189 = vdwg.mxu0
        %4190 = vmatpush.bf16.msra.mxu0 %v4123
        %4191 = vmatpush.bf16.msra.mxu0 %v4122
        %4192 = vmatpush.bf16.msra.mxu0 %v4121
        %4193 = vmatpush.bf16.msra.mxu0 %v4120
        %4194 = vmatpush.bf16.msra.mxu0 %v4119
        %4195 = vmatpush.bf16.msra.mxu0 %v4118
        %4196 = vmatpush.bf16.msra.mxu0 %v4117
        %4197 = vmatpush.bf16.msra.mxu0 %v4116
        %4198 = vmatmul.bf16.gmra.mxu0 %v3966
        %v4199 = vpop.f32.mrf.mxu0
        %v4200 = vadd.f32 %v4187, %v4199
        %v4201 = vpop.f32.mrf.mxu0
        %4202 = vdwg.mxu0
        %4203 = vmatpush.bf16.msra.mxu0 %v4131
        %4204 = vmatpush.bf16.msra.mxu0 %v4130
        %4205 = vmatpush.bf16.msra.mxu0 %v4129
        %4206 = vmatpush.bf16.msra.mxu0 %v4128
        %4207 = vmatpush.bf16.msra.mxu0 %v4127
        %4208 = vmatpush.bf16.msra.mxu0 %v4126
        %4209 = vmatpush.bf16.msra.mxu0 %v4125
        %4210 = vmatpush.bf16.msra.mxu0 %v4124
        %4211 = vmatmul.bf16.gmra.mxu0 %v3967
        %v4212 = vpop.f32.mrf.mxu0
        %v4213 = vadd.f32 %v4200, %v4212
        %v4214 = vpop.f32.mrf.mxu0
        %4215 = vdwg.mxu0
        %v4216 = vadd.f32 %v3887, %v4213
        %v4217 = vld [vmem:[%s3521 + $0x10] sm:$0x33]
        %v4218 = vld [vmem:[%s3521 + $0x18] sm:$0x33]
        %v4219 = vld [vmem:[%s1156] sm:$0xf]
        %v4220 = vld [vmem:[%s1156 + $0x4] sm:$0xf]
        %v4221 = vld [vmem:[%s1156 + $0x8] sm:$0xf]
        %v4222 = vld [vmem:[%s1156 + $0xc] sm:$0xf]
        %v4223 = vld [vmem:[%s1156 + $0x10] sm:$0xf]
        %v4224 = vld [vmem:[%s1156 + $0x14] sm:$0xf]
        %v4225 = vld [vmem:[%s1156 + $0x18] sm:$0xf]
        %v4226 = vld [vmem:[%s1156 + $0x1c] sm:$0xf]
        %v4227 = vld [vmem:[%s1156 + $0x20] sm:$0xf]
        %v4228 = vld [vmem:[%s1156 + $0x24] sm:$0xf]
        %v4229 = vld [vmem:[%s1156 + $0x28] sm:$0xf]
        %v4230 = vld [vmem:[%s1156 + $0x2c] sm:$0xf]
        %v4231 = vld [vmem:[%s1156 + $0x30] sm:$0xf]
        %v4232 = vld [vmem:[%s1156 + $0x34] sm:$0xf]
        %v4233 = vld [vmem:[%s1156 + $0x38] sm:$0xf]
        %v4234 = vld [vmem:[%s1156 + $0x3c] sm:$0xf]
        %v4235 = vld [vmem:[%s1156 + $0x40] sm:$0xf]
        %v4236 = vld [vmem:[%s1156 + $0x44] sm:$0xf]
        %v4237 = vld [vmem:[%s1156 + $0x48] sm:$0xf]
        %v4238 = vld [vmem:[%s1156 + $0x4c] sm:$0xf]
        %v4239 = vld [vmem:[%s1156 + $0x50] sm:$0xf]
        %v4240 = vld [vmem:[%s1156 + $0x54] sm:$0xf]
        %v4241 = vld [vmem:[%s1156 + $0x58] sm:$0xf]
        %v4242 = vld [vmem:[%s1156 + $0x5c] sm:$0xf]
        %v4243 = vld [vmem:[%s1156 + $0x60] sm:$0xf]
        %v4244 = vld [vmem:[%s1156 + $0x64] sm:$0xf]
        %v4245 = vld [vmem:[%s1156 + $0x68] sm:$0xf]
        %v4246 = vld [vmem:[%s1156 + $0x6c] sm:$0xf]
        %v4247 = vld [vmem:[%s1156 + $0x70] sm:$0xf]
        %v4248 = vld [vmem:[%s1156 + $0x74] sm:$0xf]
        %v4249 = vld [vmem:[%s1156 + $0x78] sm:$0xf]
        %v4250 = vld [vmem:[%s1156 + $0x7c] sm:$0xf]
        %v4251 = vld [vmem:[%s1156 + $0x80] sm:$0xf]
        %v4252 = vld [vmem:[%s1156 + $0x84] sm:$0xf]
        %v4253 = vld [vmem:[%s1156 + $0x88] sm:$0xf]
        %v4254 = vld [vmem:[%s1156 + $0x8c] sm:$0xf]
        %v4255 = vld [vmem:[%s1156 + $0x90] sm:$0xf]
        %v4256 = vld [vmem:[%s1156 + $0x94] sm:$0xf]
        %v4257 = vld [vmem:[%s1156 + $0x98] sm:$0xf]
        %v4258 = vld [vmem:[%s1156 + $0x9c] sm:$0xf]
        %v4259 = vld [vmem:[%s1156 + $0xa0] sm:$0xf]
        %v4260 = vld [vmem:[%s1156 + $0xa4] sm:$0xf]
        %v4261 = vld [vmem:[%s1156 + $0xa8] sm:$0xf]
        %v4262 = vld [vmem:[%s1156 + $0xac] sm:$0xf]
        %v4263 = vld [vmem:[%s1156 + $0xb0] sm:$0xf]
        %v4264 = vld [vmem:[%s1156 + $0xb4] sm:$0xf]
        %v4265 = vld [vmem:[%s1156 + $0xb8] sm:$0xf]
        %v4266 = vld [vmem:[%s1156 + $0xbc] sm:$0xf]
        %v4267 = vld [vmem:[%s1156 + $0xc0] sm:$0xf]
        %v4268 = vld [vmem:[%s1156 + $0xc4] sm:$0xf]
        %v4269 = vld [vmem:[%s1156 + $0xc8] sm:$0xf]
        %v4270 = vld [vmem:[%s1156 + $0xcc] sm:$0xf]
        %v4271 = vld [vmem:[%s1156 + $0xd0] sm:$0xf]
        %v4272 = vld [vmem:[%s1156 + $0xd4] sm:$0xf]
        %v4273 = vld [vmem:[%s1156 + $0xd8] sm:$0xf]
        %v4274 = vld [vmem:[%s1156 + $0xdc] sm:$0xf]
        %v4275 = vld [vmem:[%s1156 + $0xe0] sm:$0xf]
        %v4276 = vld [vmem:[%s1156 + $0xe4] sm:$0xf]
        %v4277 = vld [vmem:[%s1156 + $0xe8] sm:$0xf]
        %v4278 = vld [vmem:[%s1156 + $0xec] sm:$0xf]
        %v4279 = vld [vmem:[%s1156 + $0xf0] sm:$0xf]
        %v4280 = vld [vmem:[%s1156 + $0xf4] sm:$0xf]
        %v4281 = vld [vmem:[%s1156 + $0xf8] sm:$0xf]
        %v4282 = vld [vmem:[%s1156 + $0xfc] sm:$0xf]
        %v4285 = vunpack.c.l.b16 %v4217
        %v4286 = vunpack.c.h.b16 %v4217
        %v4287 = vunpack.c.l.b16 %v4218
        %v4288 = vunpack.c.h.b16 %v4218
        %v4289 = vpack.c.b16 %v4285, %v3956
        %v4290 = vpack.c.b16 %v4286, %v3957
        %v4291 = vpack.c.b16 %v4287, %v3958
        %v4292 = vpack.c.b16 %v4288, %v3959
        %v4294 = vshrl.u32 %v4289, 16
        %v4296 = vrot.slane %v4294, 3
        %v4297 = vshll.u32 %v4289, 16
        %v4299 = vrot.slane %v4297, 4
        %v4300 = vor.u32 %v4296, %v4299
        %v4302 = vshrl.u32 %v4290, 16
        %v4304 = vrot.slane %v4302, 3
        %v4305 = vshll.u32 %v4290, 16
        %v4307 = vrot.slane %v4305, 4
        %v4308 = vor.u32 %v4304, %v4307
        %v4310 = vshrl.u32 %v4291, 16
        %v4312 = vrot.slane %v4310, 3
        %v4313 = vshll.u32 %v4291, 16
        %v4315 = vrot.slane %v4313, 4
        %v4316 = vor.u32 %v4312, %v4315
        %v4318 = vshrl.u32 %v4292, 16
        %v4320 = vrot.slane %v4318, 3
        %v4321 = vshll.u32 %v4292, 16
        %v4323 = vrot.slane %v4321, 4
        %v4324 = vor.u32 %v4320, %v4323
        %v4393 = vunpack.c.l.b16 %v4219
        %v4394 = vunpack.c.l.b16 %v4220
        %v4395 = vunpack.c.l.b16 %v4221
        %v4396 = vunpack.c.l.b16 %v4222
        %v4397 = vunpack.c.l.b16 %v4223
        %v4398 = vunpack.c.l.b16 %v4224
        %v4399 = vunpack.c.l.b16 %v4225
        %v4400 = vunpack.c.l.b16 %v4226
        %v4401 = vunpack.c.l.b16 %v4227
        %v4402 = vunpack.c.l.b16 %v4228
        %v4403 = vunpack.c.l.b16 %v4229
        %v4404 = vunpack.c.l.b16 %v4230
        %v4405 = vunpack.c.l.b16 %v4231
        %v4406 = vunpack.c.l.b16 %v4232
        %v4407 = vunpack.c.l.b16 %v4233
        %v4408 = vunpack.c.l.b16 %v4234
        %v4409 = vunpack.c.l.b16 %v4235
        %v4410 = vunpack.c.l.b16 %v4236
        %v4411 = vunpack.c.l.b16 %v4237
        %v4412 = vunpack.c.l.b16 %v4238
        %v4413 = vunpack.c.l.b16 %v4239
        %v4414 = vunpack.c.l.b16 %v4240
        %v4415 = vunpack.c.l.b16 %v4241
        %v4416 = vunpack.c.l.b16 %v4242
        %v4417 = vunpack.c.l.b16 %v4243
        %v4418 = vunpack.c.l.b16 %v4244
        %v4419 = vunpack.c.l.b16 %v4245
        %v4420 = vunpack.c.l.b16 %v4246
        %v4421 = vunpack.c.l.b16 %v4247
        %v4422 = vunpack.c.l.b16 %v4248
        %v4423 = vunpack.c.l.b16 %v4249
        %v4424 = vunpack.c.l.b16 %v4250
        %v4425 = vunpack.c.l.b16 %v4251
        %v4426 = vunpack.c.l.b16 %v4252
        %v4427 = vunpack.c.l.b16 %v4253
        %v4428 = vunpack.c.l.b16 %v4254
        %v4429 = vunpack.c.l.b16 %v4255
        %v4430 = vunpack.c.l.b16 %v4256
        %v4431 = vunpack.c.l.b16 %v4257
        %v4432 = vunpack.c.l.b16 %v4258
        %v4433 = vunpack.c.l.b16 %v4259
        %v4434 = vunpack.c.l.b16 %v4260
        %v4435 = vunpack.c.l.b16 %v4261
        %v4436 = vunpack.c.l.b16 %v4262
        %v4437 = vunpack.c.l.b16 %v4263
        %v4438 = vunpack.c.l.b16 %v4264
        %v4439 = vunpack.c.l.b16 %v4265
        %v4440 = vunpack.c.l.b16 %v4266
        %v4441 = vunpack.c.l.b16 %v4267
        %v4442 = vunpack.c.l.b16 %v4268
        %v4443 = vunpack.c.l.b16 %v4269
        %v4444 = vunpack.c.l.b16 %v4270
        %v4445 = vunpack.c.l.b16 %v4271
        %v4446 = vunpack.c.l.b16 %v4272
        %v4447 = vunpack.c.l.b16 %v4273
        %v4448 = vunpack.c.l.b16 %v4274
        %v4449 = vunpack.c.l.b16 %v4275
        %v4450 = vunpack.c.l.b16 %v4276
        %v4451 = vunpack.c.l.b16 %v4277
        %v4452 = vunpack.c.l.b16 %v4278
        %v4453 = vunpack.c.l.b16 %v4279
        %v4454 = vunpack.c.l.b16 %v4280
        %v4455 = vunpack.c.l.b16 %v4281
        %v4456 = vunpack.c.l.b16 %v4282
        %v4457 = vpack.c.b16 %v4394, %v4393
        %v4458 = vpack.c.b16 %v4396, %v4395
        %v4459 = vpack.c.b16 %v4398, %v4397
        %v4460 = vpack.c.b16 %v4400, %v4399
        %v4461 = vpack.c.b16 %v4402, %v4401
        %v4462 = vpack.c.b16 %v4404, %v4403
        %v4463 = vpack.c.b16 %v4406, %v4405
        %v4464 = vpack.c.b16 %v4408, %v4407
        %v4465 = vpack.c.b16 %v4410, %v4409
        %v4466 = vpack.c.b16 %v4412, %v4411
        %v4467 = vpack.c.b16 %v4414, %v4413
        %v4468 = vpack.c.b16 %v4416, %v4415
        %v4469 = vpack.c.b16 %v4418, %v4417
        %v4470 = vpack.c.b16 %v4420, %v4419
        %v4471 = vpack.c.b16 %v4422, %v4421
        %v4472 = vpack.c.b16 %v4424, %v4423
        %v4473 = vpack.c.b16 %v4426, %v4425
        %v4474 = vpack.c.b16 %v4428, %v4427
        %v4475 = vpack.c.b16 %v4430, %v4429
        %v4476 = vpack.c.b16 %v4432, %v4431
        %v4477 = vpack.c.b16 %v4434, %v4433
        %v4478 = vpack.c.b16 %v4436, %v4435
        %v4479 = vpack.c.b16 %v4438, %v4437
        %v4480 = vpack.c.b16 %v4440, %v4439
        %v4481 = vpack.c.b16 %v4442, %v4441
        %v4482 = vpack.c.b16 %v4444, %v4443
        %v4483 = vpack.c.b16 %v4446, %v4445
        %v4484 = vpack.c.b16 %v4448, %v4447
        %v4485 = vpack.c.b16 %v4450, %v4449
        %v4486 = vpack.c.b16 %v4452, %v4451
        %v4487 = vpack.c.b16 %v4454, %v4453
        %v4488 = vpack.c.b16 %v4456, %v4455
        %4521 = vmatpush.bf16.msra.mxu0 %v4464
        %4522 = vmatpush.bf16.msra.mxu0 %v4463
        %4523 = vmatpush.bf16.msra.mxu0 %v4462
        %4524 = vmatpush.bf16.msra.mxu0 %v4461
        %4525 = vmatpush.bf16.msra.mxu0 %v4460
        %4526 = vmatpush.bf16.msra.mxu0 %v4459
        %4527 = vmatpush.bf16.msra.mxu0 %v4458
        %4528 = vmatpush.bf16.msra.mxu0 %v4457
        %4529 = vmatmul.bf16.gmra.mxu0 %v4300
        %v4530 = vpop.f32.mrf.mxu0
        %v4531 = vadd.f32 0.0, %v4530
        %v4532 = vpop.f32.mrf.mxu0
        %4533 = vdwg.mxu0
        %4534 = vmatpush.bf16.msra.mxu0 %v4472
        %4535 = vmatpush.bf16.msra.mxu0 %v4471
        %4536 = vmatpush.bf16.msra.mxu0 %v4470
        %4537 = vmatpush.bf16.msra.mxu0 %v4469
        %4538 = vmatpush.bf16.msra.mxu0 %v4468
        %4539 = vmatpush.bf16.msra.mxu0 %v4467
        %4540 = vmatpush.bf16.msra.mxu0 %v4466
        %4541 = vmatpush.bf16.msra.mxu0 %v4465
        %4542 = vmatmul.bf16.gmra.mxu0 %v4308
        %v4543 = vpop.f32.mrf.mxu0
        %v4544 = vadd.f32 %v4531, %v4543
        %v4545 = vpop.f32.mrf.mxu0
        %4546 = vdwg.mxu0
        %4547 = vmatpush.bf16.msra.mxu0 %v4480
        %4548 = vmatpush.bf16.msra.mxu0 %v4479
        %4549 = vmatpush.bf16.msra.mxu0 %v4478
        %4550 = vmatpush.bf16.msra.mxu0 %v4477
        %4551 = vmatpush.bf16.msra.mxu0 %v4476
        %4552 = vmatpush.bf16.msra.mxu0 %v4475
        %4553 = vmatpush.bf16.msra.mxu0 %v4474
        %4554 = vmatpush.bf16.msra.mxu0 %v4473
        %4555 = vmatmul.bf16.gmra.mxu0 %v4316
        %v4556 = vpop.f32.mrf.mxu0
        %v4557 = vadd.f32 %v4544, %v4556
        %v4558 = vpop.f32.mrf.mxu0
        %4559 = vdwg.mxu0
        %4560 = vmatpush.bf16.msra.mxu0 %v4488
        %4561 = vmatpush.bf16.msra.mxu0 %v4487
        %4562 = vmatpush.bf16.msra.mxu0 %v4486
        %4563 = vmatpush.bf16.msra.mxu0 %v4485
        %4564 = vmatpush.bf16.msra.mxu0 %v4484
        %4565 = vmatpush.bf16.msra.mxu0 %v4483
        %4566 = vmatpush.bf16.msra.mxu0 %v4482
        %4567 = vmatpush.bf16.msra.mxu0 %v4481
        %4568 = vmatmul.bf16.gmra.mxu0 %v4324
        %v4569 = vpop.f32.mrf.mxu0
        %v4570 = vadd.f32 %v4557, %v4569
        %v4571 = vpop.f32.mrf.mxu0
        %4572 = vdwg.mxu0
        %v4573 = vsel %vm1515, %v4570, 0.0
        %v4574 = vadd.f32 %v4216, %v4573
        %v4575 = vld [vmem:[%s1518] sm:$0xf]
        %v4576 = vld [vmem:[%s1518 + $0x4] sm:$0xf]
        %v4577 = vld [vmem:[%s1518 + $0x8] sm:$0xf]
        %v4578 = vld [vmem:[%s1518 + $0xc] sm:$0xf]
        %v4579 = vld [vmem:[%s1518 + $0x10] sm:$0xf]
        %v4580 = vld [vmem:[%s1518 + $0x14] sm:$0xf]
        %v4581 = vld [vmem:[%s1518 + $0x18] sm:$0xf]
        %v4582 = vld [vmem:[%s1518 + $0x1c] sm:$0xf]
        %v4583 = vld [vmem:[%s1518 + $0x20] sm:$0xf]
        %v4584 = vld [vmem:[%s1518 + $0x24] sm:$0xf]
        %v4585 = vld [vmem:[%s1518 + $0x28] sm:$0xf]
        %v4586 = vld [vmem:[%s1518 + $0x2c] sm:$0xf]
        %v4587 = vld [vmem:[%s1518 + $0x30] sm:$0xf]
        %v4588 = vld [vmem:[%s1518 + $0x34] sm:$0xf]
        %v4589 = vld [vmem:[%s1518 + $0x38] sm:$0xf]
        %v4590 = vld [vmem:[%s1518 + $0x3c] sm:$0xf]
        %v4591 = vld [vmem:[%s1518 + $0x40] sm:$0xf]
        %v4592 = vld [vmem:[%s1518 + $0x44] sm:$0xf]
        %v4593 = vld [vmem:[%s1518 + $0x48] sm:$0xf]
        %v4594 = vld [vmem:[%s1518 + $0x4c] sm:$0xf]
        %v4595 = vld [vmem:[%s1518 + $0x50] sm:$0xf]
        %v4596 = vld [vmem:[%s1518 + $0x54] sm:$0xf]
        %v4597 = vld [vmem:[%s1518 + $0x58] sm:$0xf]
        %v4598 = vld [vmem:[%s1518 + $0x5c] sm:$0xf]
        %v4599 = vld [vmem:[%s1518 + $0x60] sm:$0xf]
        %v4600 = vld [vmem:[%s1518 + $0x64] sm:$0xf]
        %v4601 = vld [vmem:[%s1518 + $0x68] sm:$0xf]
        %v4602 = vld [vmem:[%s1518 + $0x6c] sm:$0xf]
        %v4603 = vld [vmem:[%s1518 + $0x70] sm:$0xf]
        %v4604 = vld [vmem:[%s1518 + $0x74] sm:$0xf]
        %v4605 = vld [vmem:[%s1518 + $0x78] sm:$0xf]
        %v4606 = vld [vmem:[%s1518 + $0x7c] sm:$0xf]
        %v4607 = vld [vmem:[%s1518 + $0x80] sm:$0xf]
        %v4608 = vld [vmem:[%s1518 + $0x84] sm:$0xf]
        %v4609 = vld [vmem:[%s1518 + $0x88] sm:$0xf]
        %v4610 = vld [vmem:[%s1518 + $0x8c] sm:$0xf]
        %v4611 = vld [vmem:[%s1518 + $0x90] sm:$0xf]
        %v4612 = vld [vmem:[%s1518 + $0x94] sm:$0xf]
        %v4613 = vld [vmem:[%s1518 + $0x98] sm:$0xf]
        %v4614 = vld [vmem:[%s1518 + $0x9c] sm:$0xf]
        %v4615 = vld [vmem:[%s1518 + $0xa0] sm:$0xf]
        %v4616 = vld [vmem:[%s1518 + $0xa4] sm:$0xf]
        %v4617 = vld [vmem:[%s1518 + $0xa8] sm:$0xf]
        %v4618 = vld [vmem:[%s1518 + $0xac] sm:$0xf]
        %v4619 = vld [vmem:[%s1518 + $0xb0] sm:$0xf]
        %v4620 = vld [vmem:[%s1518 + $0xb4] sm:$0xf]
        %v4621 = vld [vmem:[%s1518 + $0xb8] sm:$0xf]
        %v4622 = vld [vmem:[%s1518 + $0xbc] sm:$0xf]
        %v4623 = vld [vmem:[%s1518 + $0xc0] sm:$0xf]
        %v4624 = vld [vmem:[%s1518 + $0xc4] sm:$0xf]
        %v4625 = vld [vmem:[%s1518 + $0xc8] sm:$0xf]
        %v4626 = vld [vmem:[%s1518 + $0xcc] sm:$0xf]
        %v4627 = vld [vmem:[%s1518 + $0xd0] sm:$0xf]
        %v4628 = vld [vmem:[%s1518 + $0xd4] sm:$0xf]
        %v4629 = vld [vmem:[%s1518 + $0xd8] sm:$0xf]
        %v4630 = vld [vmem:[%s1518 + $0xdc] sm:$0xf]
        %v4631 = vld [vmem:[%s1518 + $0xe0] sm:$0xf]
        %v4632 = vld [vmem:[%s1518 + $0xe4] sm:$0xf]
        %v4633 = vld [vmem:[%s1518 + $0xe8] sm:$0xf]
        %v4634 = vld [vmem:[%s1518 + $0xec] sm:$0xf]
        %v4635 = vld [vmem:[%s1518 + $0xf0] sm:$0xf]
        %v4636 = vld [vmem:[%s1518 + $0xf4] sm:$0xf]
        %v4637 = vld [vmem:[%s1518 + $0xf8] sm:$0xf]
        %v4638 = vld [vmem:[%s1518 + $0xfc] sm:$0xf]
        %v4703 = vunpack.c.l.b16 %v4575
        %v4704 = vunpack.c.l.b16 %v4576
        %v4705 = vunpack.c.l.b16 %v4577
        %v4706 = vunpack.c.l.b16 %v4578
        %v4707 = vunpack.c.l.b16 %v4579
        %v4708 = vunpack.c.l.b16 %v4580
        %v4709 = vunpack.c.l.b16 %v4581
        %v4710 = vunpack.c.l.b16 %v4582
        %v4711 = vunpack.c.l.b16 %v4583
        %v4712 = vunpack.c.l.b16 %v4584
        %v4713 = vunpack.c.l.b16 %v4585
        %v4714 = vunpack.c.l.b16 %v4586
        %v4715 = vunpack.c.l.b16 %v4587
        %v4716 = vunpack.c.l.b16 %v4588
        %v4717 = vunpack.c.l.b16 %v4589
        %v4718 = vunpack.c.l.b16 %v4590
        %v4719 = vunpack.c.l.b16 %v4591
        %v4720 = vunpack.c.l.b16 %v4592
        %v4721 = vunpack.c.l.b16 %v4593
        %v4722 = vunpack.c.l.b16 %v4594
        %v4723 = vunpack.c.l.b16 %v4595
        %v4724 = vunpack.c.l.b16 %v4596
        %v4725 = vunpack.c.l.b16 %v4597
        %v4726 = vunpack.c.l.b16 %v4598
        %v4727 = vunpack.c.l.b16 %v4599
        %v4728 = vunpack.c.l.b16 %v4600
        %v4729 = vunpack.c.l.b16 %v4601
        %v4730 = vunpack.c.l.b16 %v4602
        %v4731 = vunpack.c.l.b16 %v4603
        %v4732 = vunpack.c.l.b16 %v4604
        %v4733 = vunpack.c.l.b16 %v4605
        %v4734 = vunpack.c.l.b16 %v4606
        %v4735 = vunpack.c.l.b16 %v4607
        %v4736 = vunpack.c.l.b16 %v4608
        %v4737 = vunpack.c.l.b16 %v4609
        %v4738 = vunpack.c.l.b16 %v4610
        %v4739 = vunpack.c.l.b16 %v4611
        %v4740 = vunpack.c.l.b16 %v4612
        %v4741 = vunpack.c.l.b16 %v4613
        %v4742 = vunpack.c.l.b16 %v4614
        %v4743 = vunpack.c.l.b16 %v4615
        %v4744 = vunpack.c.l.b16 %v4616
        %v4745 = vunpack.c.l.b16 %v4617
        %v4746 = vunpack.c.l.b16 %v4618
        %v4747 = vunpack.c.l.b16 %v4619
        %v4748 = vunpack.c.l.b16 %v4620
        %v4749 = vunpack.c.l.b16 %v4621
        %v4750 = vunpack.c.l.b16 %v4622
        %v4751 = vunpack.c.l.b16 %v4623
        %v4752 = vunpack.c.l.b16 %v4624
        %v4753 = vunpack.c.l.b16 %v4625
        %v4754 = vunpack.c.l.b16 %v4626
        %v4755 = vunpack.c.l.b16 %v4627
        %v4756 = vunpack.c.l.b16 %v4628
        %v4757 = vunpack.c.l.b16 %v4629
        %v4758 = vunpack.c.l.b16 %v4630
        %v4759 = vunpack.c.l.b16 %v4631
        %v4760 = vunpack.c.l.b16 %v4632
        %v4761 = vunpack.c.l.b16 %v4633
        %v4762 = vunpack.c.l.b16 %v4634
        %v4763 = vunpack.c.l.b16 %v4635
        %v4764 = vunpack.c.l.b16 %v4636
        %v4765 = vunpack.c.l.b16 %v4637
        %v4766 = vunpack.c.l.b16 %v4638
        %v4767 = vpack.c.b16 %v4704, %v4703
        %v4768 = vpack.c.b16 %v4706, %v4705
        %v4769 = vpack.c.b16 %v4708, %v4707
        %v4770 = vpack.c.b16 %v4710, %v4709
        %v4771 = vpack.c.b16 %v4712, %v4711
        %v4772 = vpack.c.b16 %v4714, %v4713
        %v4773 = vpack.c.b16 %v4716, %v4715
        %v4774 = vpack.c.b16 %v4718, %v4717
        %v4775 = vpack.c.b16 %v4720, %v4719
        %v4776 = vpack.c.b16 %v4722, %v4721
        %v4777 = vpack.c.b16 %v4724, %v4723
        %v4778 = vpack.c.b16 %v4726, %v4725
        %v4779 = vpack.c.b16 %v4728, %v4727
        %v4780 = vpack.c.b16 %v4730, %v4729
        %v4781 = vpack.c.b16 %v4732, %v4731
        %v4782 = vpack.c.b16 %v4734, %v4733
        %v4783 = vpack.c.b16 %v4736, %v4735
        %v4784 = vpack.c.b16 %v4738, %v4737
        %v4785 = vpack.c.b16 %v4740, %v4739
        %v4786 = vpack.c.b16 %v4742, %v4741
        %v4787 = vpack.c.b16 %v4744, %v4743
        %v4788 = vpack.c.b16 %v4746, %v4745
        %v4789 = vpack.c.b16 %v4748, %v4747
        %v4790 = vpack.c.b16 %v4750, %v4749
        %v4791 = vpack.c.b16 %v4752, %v4751
        %v4792 = vpack.c.b16 %v4754, %v4753
        %v4793 = vpack.c.b16 %v4756, %v4755
        %v4794 = vpack.c.b16 %v4758, %v4757
        %v4795 = vpack.c.b16 %v4760, %v4759
        %v4796 = vpack.c.b16 %v4762, %v4761
        %v4797 = vpack.c.b16 %v4764, %v4763
        %v4798 = vpack.c.b16 %v4766, %v4765
        %4831 = vmatpush.bf16.msra.mxu0 %v4774
        %4832 = vmatpush.bf16.msra.mxu0 %v4773
        %4833 = vmatpush.bf16.msra.mxu0 %v4772
        %4834 = vmatpush.bf16.msra.mxu0 %v4771
        %4835 = vmatpush.bf16.msra.mxu0 %v4770
        %4836 = vmatpush.bf16.msra.mxu0 %v4769
        %4837 = vmatpush.bf16.msra.mxu0 %v4768
        %4838 = vmatpush.bf16.msra.mxu0 %v4767
        %4839 = vmatmul.bf16.gmra.mxu0 %v4300
        %v4840 = vpop.f32.mrf.mxu0
        %v4841 = vadd.f32 0.0, %v4840
        %v4842 = vpop.f32.mrf.mxu0
        %4843 = vdwg.mxu0
        %4844 = vmatpush.bf16.msra.mxu0 %v4782
        %4845 = vmatpush.bf16.msra.mxu0 %v4781
        %4846 = vmatpush.bf16.msra.mxu0 %v4780
        %4847 = vmatpush.bf16.msra.mxu0 %v4779
        %4848 = vmatpush.bf16.msra.mxu0 %v4778
        %4849 = vmatpush.bf16.msra.mxu0 %v4777
        %4850 = vmatpush.bf16.msra.mxu0 %v4776
        %4851 = vmatpush.bf16.msra.mxu0 %v4775
        %4852 = vmatmul.bf16.gmra.mxu0 %v4308
        %v4853 = vpop.f32.mrf.mxu0
        %v4854 = vadd.f32 %v4841, %v4853
        %v4855 = vpop.f32.mrf.mxu0
        %4856 = vdwg.mxu0
        %4857 = vmatpush.bf16.msra.mxu0 %v4790
        %4858 = vmatpush.bf16.msra.mxu0 %v4789
        %4859 = vmatpush.bf16.msra.mxu0 %v4788
        %4860 = vmatpush.bf16.msra.mxu0 %v4787
        %4861 = vmatpush.bf16.msra.mxu0 %v4786
        %4862 = vmatpush.bf16.msra.mxu0 %v4785
        %4863 = vmatpush.bf16.msra.mxu0 %v4784
        %4864 = vmatpush.bf16.msra.mxu0 %v4783
        %4865 = vmatmul.bf16.gmra.mxu0 %v4316
        %v4866 = vpop.f32.mrf.mxu0
        %v4867 = vadd.f32 %v4854, %v4866
        %v4868 = vpop.f32.mrf.mxu0
        %4869 = vdwg.mxu0
        %4870 = vmatpush.bf16.msra.mxu0 %v4798
        %4871 = vmatpush.bf16.msra.mxu0 %v4797
        %4872 = vmatpush.bf16.msra.mxu0 %v4796
        %4873 = vmatpush.bf16.msra.mxu0 %v4795
        %4874 = vmatpush.bf16.msra.mxu0 %v4794
        %4875 = vmatpush.bf16.msra.mxu0 %v4793
        %4876 = vmatpush.bf16.msra.mxu0 %v4792
        %4877 = vmatpush.bf16.msra.mxu0 %v4791
        %4878 = vmatmul.bf16.gmra.mxu0 %v4324
        %v4879 = vpop.f32.mrf.mxu0
        %v4880 = vadd.f32 %v4867, %v4879
        %v4881 = vpop.f32.mrf.mxu0
        %4882 = vdwg.mxu0
        %v4883 = vsel %vm821, %v4880, 0.0
        %v4884 = vadd.f32 %v4574, %v4883
        %v4885 = vld [vmem:[%s1829] sm:$0xf]
        %v4886 = vld [vmem:[%s1829 + $0x4] sm:$0xf]
        %v4887 = vld [vmem:[%s1829 + $0x8] sm:$0xf]
        %v4888 = vld [vmem:[%s1829 + $0xc] sm:$0xf]
        %v4889 = vld [vmem:[%s1829 + $0x10] sm:$0xf]
        %v4890 = vld [vmem:[%s1829 + $0x14] sm:$0xf]
        %v4891 = vld [vmem:[%s1829 + $0x18] sm:$0xf]
        %v4892 = vld [vmem:[%s1829 + $0x1c] sm:$0xf]
        %v4893 = vld [vmem:[%s1829 + $0x20] sm:$0xf]
        %v4894 = vld [vmem:[%s1829 + $0x24] sm:$0xf]
        %v4895 = vld [vmem:[%s1829 + $0x28] sm:$0xf]
        %v4896 = vld [vmem:[%s1829 + $0x2c] sm:$0xf]
        %v4897 = vld [vmem:[%s1829 + $0x30] sm:$0xf]
        %v4898 = vld [vmem:[%s1829 + $0x34] sm:$0xf]
        %v4899 = vld [vmem:[%s1829 + $0x38] sm:$0xf]
        %v4900 = vld [vmem:[%s1829 + $0x3c] sm:$0xf]
        %v4901 = vld [vmem:[%s1829 + $0x40] sm:$0xf]
        %v4902 = vld [vmem:[%s1829 + $0x44] sm:$0xf]
        %v4903 = vld [vmem:[%s1829 + $0x48] sm:$0xf]
        %v4904 = vld [vmem:[%s1829 + $0x4c] sm:$0xf]
        %v4905 = vld [vmem:[%s1829 + $0x50] sm:$0xf]
        %v4906 = vld [vmem:[%s1829 + $0x54] sm:$0xf]
        %v4907 = vld [vmem:[%s1829 + $0x58] sm:$0xf]
        %v4908 = vld [vmem:[%s1829 + $0x5c] sm:$0xf]
        %v4909 = vld [vmem:[%s1829 + $0x60] sm:$0xf]
        %v4910 = vld [vmem:[%s1829 + $0x64] sm:$0xf]
        %v4911 = vld [vmem:[%s1829 + $0x68] sm:$0xf]
        %v4912 = vld [vmem:[%s1829 + $0x6c] sm:$0xf]
        %v4913 = vld [vmem:[%s1829 + $0x70] sm:$0xf]
        %v4914 = vld [vmem:[%s1829 + $0x74] sm:$0xf]
        %v4915 = vld [vmem:[%s1829 + $0x78] sm:$0xf]
        %v4916 = vld [vmem:[%s1829 + $0x7c] sm:$0xf]
        %v4917 = vld [vmem:[%s1829 + $0x80] sm:$0xf]
        %v4918 = vld [vmem:[%s1829 + $0x84] sm:$0xf]
        %v4919 = vld [vmem:[%s1829 + $0x88] sm:$0xf]
        %v4920 = vld [vmem:[%s1829 + $0x8c] sm:$0xf]
        %v4921 = vld [vmem:[%s1829 + $0x90] sm:$0xf]
        %v4922 = vld [vmem:[%s1829 + $0x94] sm:$0xf]
        %v4923 = vld [vmem:[%s1829 + $0x98] sm:$0xf]
        %v4924 = vld [vmem:[%s1829 + $0x9c] sm:$0xf]
        %v4925 = vld [vmem:[%s1829 + $0xa0] sm:$0xf]
        %v4926 = vld [vmem:[%s1829 + $0xa4] sm:$0xf]
        %v4927 = vld [vmem:[%s1829 + $0xa8] sm:$0xf]
        %v4928 = vld [vmem:[%s1829 + $0xac] sm:$0xf]
        %v4929 = vld [vmem:[%s1829 + $0xb0] sm:$0xf]
        %v4930 = vld [vmem:[%s1829 + $0xb4] sm:$0xf]
        %v4931 = vld [vmem:[%s1829 + $0xb8] sm:$0xf]
        %v4932 = vld [vmem:[%s1829 + $0xbc] sm:$0xf]
        %v4933 = vld [vmem:[%s1829 + $0xc0] sm:$0xf]
        %v4934 = vld [vmem:[%s1829 + $0xc4] sm:$0xf]
        %v4935 = vld [vmem:[%s1829 + $0xc8] sm:$0xf]
        %v4936 = vld [vmem:[%s1829 + $0xcc] sm:$0xf]
        %v4937 = vld [vmem:[%s1829 + $0xd0] sm:$0xf]
        %v4938 = vld [vmem:[%s1829 + $0xd4] sm:$0xf]
        %v4939 = vld [vmem:[%s1829 + $0xd8] sm:$0xf]
        %v4940 = vld [vmem:[%s1829 + $0xdc] sm:$0xf]
        %v4941 = vld [vmem:[%s1829 + $0xe0] sm:$0xf]
        %v4942 = vld [vmem:[%s1829 + $0xe4] sm:$0xf]
        %v4943 = vld [vmem:[%s1829 + $0xe8] sm:$0xf]
        %v4944 = vld [vmem:[%s1829 + $0xec] sm:$0xf]
        %v4945 = vld [vmem:[%s1829 + $0xf0] sm:$0xf]
        %v4946 = vld [vmem:[%s1829 + $0xf4] sm:$0xf]
        %v4947 = vld [vmem:[%s1829 + $0xf8] sm:$0xf]
        %v4948 = vld [vmem:[%s1829 + $0xfc] sm:$0xf]
        %v4949 = vpack.c.b16 %v4285, %v4285
        %v4950 = vpack.c.b16 %v4286, %v4286
        %v4951 = vpack.c.b16 %v4287, %v4287
        %v4952 = vpack.c.b16 %v4288, %v4288
        %v5021 = vunpack.c.l.b16 %v4885
        %v5022 = vunpack.c.l.b16 %v4886
        %v5023 = vunpack.c.l.b16 %v4887
        %v5024 = vunpack.c.l.b16 %v4888
        %v5025 = vunpack.c.l.b16 %v4889
        %v5026 = vunpack.c.l.b16 %v4890
        %v5027 = vunpack.c.l.b16 %v4891
        %v5028 = vunpack.c.l.b16 %v4892
        %v5029 = vunpack.c.l.b16 %v4893
        %v5030 = vunpack.c.l.b16 %v4894
        %v5031 = vunpack.c.l.b16 %v4895
        %v5032 = vunpack.c.l.b16 %v4896
        %v5033 = vunpack.c.l.b16 %v4897
        %v5034 = vunpack.c.l.b16 %v4898
        %v5035 = vunpack.c.l.b16 %v4899
        %v5036 = vunpack.c.l.b16 %v4900
        %v5037 = vunpack.c.l.b16 %v4901
        %v5038 = vunpack.c.l.b16 %v4902
        %v5039 = vunpack.c.l.b16 %v4903
        %v5040 = vunpack.c.l.b16 %v4904
        %v5041 = vunpack.c.l.b16 %v4905
        %v5042 = vunpack.c.l.b16 %v4906
        %v5043 = vunpack.c.l.b16 %v4907
        %v5044 = vunpack.c.l.b16 %v4908
        %v5045 = vunpack.c.l.b16 %v4909
        %v5046 = vunpack.c.l.b16 %v4910
        %v5047 = vunpack.c.l.b16 %v4911
        %v5048 = vunpack.c.l.b16 %v4912
        %v5049 = vunpack.c.l.b16 %v4913
        %v5050 = vunpack.c.l.b16 %v4914
        %v5051 = vunpack.c.l.b16 %v4915
        %v5052 = vunpack.c.l.b16 %v4916
        %v5053 = vunpack.c.l.b16 %v4917
        %v5054 = vunpack.c.l.b16 %v4918
        %v5055 = vunpack.c.l.b16 %v4919
        %v5056 = vunpack.c.l.b16 %v4920
        %v5057 = vunpack.c.l.b16 %v4921
        %v5058 = vunpack.c.l.b16 %v4922
        %v5059 = vunpack.c.l.b16 %v4923
        %v5060 = vunpack.c.l.b16 %v4924
        %v5061 = vunpack.c.l.b16 %v4925
        %v5062 = vunpack.c.l.b16 %v4926
        %v5063 = vunpack.c.l.b16 %v4927
        %v5064 = vunpack.c.l.b16 %v4928
        %v5065 = vunpack.c.l.b16 %v4929
        %v5066 = vunpack.c.l.b16 %v4930
        %v5067 = vunpack.c.l.b16 %v4931
        %v5068 = vunpack.c.l.b16 %v4932
        %v5069 = vunpack.c.l.b16 %v4933
        %v5070 = vunpack.c.l.b16 %v4934
        %v5071 = vunpack.c.l.b16 %v4935
        %v5072 = vunpack.c.l.b16 %v4936
        %v5073 = vunpack.c.l.b16 %v4937
        %v5074 = vunpack.c.l.b16 %v4938
        %v5075 = vunpack.c.l.b16 %v4939
        %v5076 = vunpack.c.l.b16 %v4940
        %v5077 = vunpack.c.l.b16 %v4941
        %v5078 = vunpack.c.l.b16 %v4942
        %v5079 = vunpack.c.l.b16 %v4943
        %v5080 = vunpack.c.l.b16 %v4944
        %v5081 = vunpack.c.l.b16 %v4945
        %v5082 = vunpack.c.l.b16 %v4946
        %v5083 = vunpack.c.l.b16 %v4947
        %v5084 = vunpack.c.l.b16 %v4948
        %v5085 = vpack.c.b16 %v5022, %v5021
        %v5086 = vpack.c.b16 %v5024, %v5023
        %v5087 = vpack.c.b16 %v5026, %v5025
        %v5088 = vpack.c.b16 %v5028, %v5027
        %v5089 = vpack.c.b16 %v5030, %v5029
        %v5090 = vpack.c.b16 %v5032, %v5031
        %v5091 = vpack.c.b16 %v5034, %v5033
        %v5092 = vpack.c.b16 %v5036, %v5035
        %v5093 = vpack.c.b16 %v5038, %v5037
        %v5094 = vpack.c.b16 %v5040, %v5039
        %v5095 = vpack.c.b16 %v5042, %v5041
        %v5096 = vpack.c.b16 %v5044, %v5043
        %v5097 = vpack.c.b16 %v5046, %v5045
        %v5098 = vpack.c.b16 %v5048, %v5047
        %v5099 = vpack.c.b16 %v5050, %v5049
        %v5100 = vpack.c.b16 %v5052, %v5051
        %v5101 = vpack.c.b16 %v5054, %v5053
        %v5102 = vpack.c.b16 %v5056, %v5055
        %v5103 = vpack.c.b16 %v5058, %v5057
        %v5104 = vpack.c.b16 %v5060, %v5059
        %v5105 = vpack.c.b16 %v5062, %v5061
        %v5106 = vpack.c.b16 %v5064, %v5063
        %v5107 = vpack.c.b16 %v5066, %v5065
        %v5108 = vpack.c.b16 %v5068, %v5067
        %v5109 = vpack.c.b16 %v5070, %v5069
        %v5110 = vpack.c.b16 %v5072, %v5071
        %v5111 = vpack.c.b16 %v5074, %v5073
        %v5112 = vpack.c.b16 %v5076, %v5075
        %v5113 = vpack.c.b16 %v5078, %v5077
        %v5114 = vpack.c.b16 %v5080, %v5079
        %v5115 = vpack.c.b16 %v5082, %v5081
        %v5116 = vpack.c.b16 %v5084, %v5083
        %5149 = vmatpush.bf16.msra.mxu0 %v5092
        %5150 = vmatpush.bf16.msra.mxu0 %v5091
        %5151 = vmatpush.bf16.msra.mxu0 %v5090
        %5152 = vmatpush.bf16.msra.mxu0 %v5089
        %5153 = vmatpush.bf16.msra.mxu0 %v5088
        %5154 = vmatpush.bf16.msra.mxu0 %v5087
        %5155 = vmatpush.bf16.msra.mxu0 %v5086
        %5156 = vmatpush.bf16.msra.mxu0 %v5085
        %5157 = vmatmul.bf16.gmra.mxu0 %v4949
        %v5158 = vpop.f32.mrf.mxu0
        %v5159 = vadd.f32 0.0, %v5158
        %v5160 = vpop.f32.mrf.mxu0
        %5161 = vdwg.mxu0
        %5162 = vmatpush.bf16.msra.mxu0 %v5100
        %5163 = vmatpush.bf16.msra.mxu0 %v5099
        %5164 = vmatpush.bf16.msra.mxu0 %v5098
        %5165 = vmatpush.bf16.msra.mxu0 %v5097
        %5166 = vmatpush.bf16.msra.mxu0 %v5096
        %5167 = vmatpush.bf16.msra.mxu0 %v5095
        %5168 = vmatpush.bf16.msra.mxu0 %v5094
        %5169 = vmatpush.bf16.msra.mxu0 %v5093
        %5170 = vmatmul.bf16.gmra.mxu0 %v4950
        %v5171 = vpop.f32.mrf.mxu0
        %v5172 = vadd.f32 %v5159, %v5171
        %v5173 = vpop.f32.mrf.mxu0
        %5174 = vdwg.mxu0
        %5175 = vmatpush.bf16.msra.mxu0 %v5108
        %5176 = vmatpush.bf16.msra.mxu0 %v5107
        %5177 = vmatpush.bf16.msra.mxu0 %v5106
        %5178 = vmatpush.bf16.msra.mxu0 %v5105
        %5179 = vmatpush.bf16.msra.mxu0 %v5104
        %5180 = vmatpush.bf16.msra.mxu0 %v5103
        %5181 = vmatpush.bf16.msra.mxu0 %v5102
        %5182 = vmatpush.bf16.msra.mxu0 %v5101
        %5183 = vmatmul.bf16.gmra.mxu0 %v4951
        %v5184 = vpop.f32.mrf.mxu0
        %v5185 = vadd.f32 %v5172, %v5184
        %v5186 = vpop.f32.mrf.mxu0
        %5187 = vdwg.mxu0
        %5188 = vmatpush.bf16.msra.mxu0 %v5116
        %5189 = vmatpush.bf16.msra.mxu0 %v5115
        %5190 = vmatpush.bf16.msra.mxu0 %v5114
        %5191 = vmatpush.bf16.msra.mxu0 %v5113
        %5192 = vmatpush.bf16.msra.mxu0 %v5112
        %5193 = vmatpush.bf16.msra.mxu0 %v5111
        %5194 = vmatpush.bf16.msra.mxu0 %v5110
        %5195 = vmatpush.bf16.msra.mxu0 %v5109
        %5196 = vmatmul.bf16.gmra.mxu0 %v4952
        %v5197 = vpop.f32.mrf.mxu0
        %v5198 = vadd.f32 %v5185, %v5197
        %v5199 = vpop.f32.mrf.mxu0
        %5200 = vdwg.mxu0
        %v5201 = vadd.f32 %v4884, %v5198
        %v5202 = vld [vmem:[%s3521 + $0x10] sm:$0x77]
        %v5203 = vld [vmem:[%s3521 + $0x18] sm:$0x77]
        %v5204 = vld [vmem:[%s2149] sm:$0xf]
        %v5205 = vld [vmem:[%s2149 + $0x4] sm:$0xf]
        %v5206 = vld [vmem:[%s2149 + $0x8] sm:$0xf]
        %v5207 = vld [vmem:[%s2149 + $0xc] sm:$0xf]
        %v5208 = vld [vmem:[%s2149 + $0x10] sm:$0xf]
        %v5209 = vld [vmem:[%s2149 + $0x14] sm:$0xf]
        %v5210 = vld [vmem:[%s2149 + $0x18] sm:$0xf]
        %v5211 = vld [vmem:[%s2149 + $0x1c] sm:$0xf]
        %v5212 = vld [vmem:[%s2149 + $0x20] sm:$0xf]
        %v5213 = vld [vmem:[%s2149 + $0x24] sm:$0xf]
        %v5214 = vld [vmem:[%s2149 + $0x28] sm:$0xf]
        %v5215 = vld [vmem:[%s2149 + $0x2c] sm:$0xf]
        %v5216 = vld [vmem:[%s2149 + $0x30] sm:$0xf]
        %v5217 = vld [vmem:[%s2149 + $0x34] sm:$0xf]
        %v5218 = vld [vmem:[%s2149 + $0x38] sm:$0xf]
        %v5219 = vld [vmem:[%s2149 + $0x3c] sm:$0xf]
        %v5220 = vld [vmem:[%s2149 + $0x40] sm:$0xf]
        %v5221 = vld [vmem:[%s2149 + $0x44] sm:$0xf]
        %v5222 = vld [vmem:[%s2149 + $0x48] sm:$0xf]
        %v5223 = vld [vmem:[%s2149 + $0x4c] sm:$0xf]
        %v5224 = vld [vmem:[%s2149 + $0x50] sm:$0xf]
        %v5225 = vld [vmem:[%s2149 + $0x54] sm:$0xf]
        %v5226 = vld [vmem:[%s2149 + $0x58] sm:$0xf]
        %v5227 = vld [vmem:[%s2149 + $0x5c] sm:$0xf]
        %v5228 = vld [vmem:[%s2149 + $0x60] sm:$0xf]
        %v5229 = vld [vmem:[%s2149 + $0x64] sm:$0xf]
        %v5230 = vld [vmem:[%s2149 + $0x68] sm:$0xf]
        %v5231 = vld [vmem:[%s2149 + $0x6c] sm:$0xf]
        %v5232 = vld [vmem:[%s2149 + $0x70] sm:$0xf]
        %v5233 = vld [vmem:[%s2149 + $0x74] sm:$0xf]
        %v5234 = vld [vmem:[%s2149 + $0x78] sm:$0xf]
        %v5235 = vld [vmem:[%s2149 + $0x7c] sm:$0xf]
        %v5236 = vld [vmem:[%s2149 + $0x80] sm:$0xf]
        %v5237 = vld [vmem:[%s2149 + $0x84] sm:$0xf]
        %v5238 = vld [vmem:[%s2149 + $0x88] sm:$0xf]
        %v5239 = vld [vmem:[%s2149 + $0x8c] sm:$0xf]
        %v5240 = vld [vmem:[%s2149 + $0x90] sm:$0xf]
        %v5241 = vld [vmem:[%s2149 + $0x94] sm:$0xf]
        %v5242 = vld [vmem:[%s2149 + $0x98] sm:$0xf]
        %v5243 = vld [vmem:[%s2149 + $0x9c] sm:$0xf]
        %v5244 = vld [vmem:[%s2149 + $0xa0] sm:$0xf]
        %v5245 = vld [vmem:[%s2149 + $0xa4] sm:$0xf]
        %v5246 = vld [vmem:[%s2149 + $0xa8] sm:$0xf]
        %v5247 = vld [vmem:[%s2149 + $0xac] sm:$0xf]
        %v5248 = vld [vmem:[%s2149 + $0xb0] sm:$0xf]
        %v5249 = vld [vmem:[%s2149 + $0xb4] sm:$0xf]
        %v5250 = vld [vmem:[%s2149 + $0xb8] sm:$0xf]
        %v5251 = vld [vmem:[%s2149 + $0xbc] sm:$0xf]
        %v5252 = vld [vmem:[%s2149 + $0xc0] sm:$0xf]
        %v5253 = vld [vmem:[%s2149 + $0xc4] sm:$0xf]
        %v5254 = vld [vmem:[%s2149 + $0xc8] sm:$0xf]
        %v5255 = vld [vmem:[%s2149 + $0xcc] sm:$0xf]
        %v5256 = vld [vmem:[%s2149 + $0xd0] sm:$0xf]
        %v5257 = vld [vmem:[%s2149 + $0xd4] sm:$0xf]
        %v5258 = vld [vmem:[%s2149 + $0xd8] sm:$0xf]
        %v5259 = vld [vmem:[%s2149 + $0xdc] sm:$0xf]
        %v5260 = vld [vmem:[%s2149 + $0xe0] sm:$0xf]
        %v5261 = vld [vmem:[%s2149 + $0xe4] sm:$0xf]
        %v5262 = vld [vmem:[%s2149 + $0xe8] sm:$0xf]
        %v5263 = vld [vmem:[%s2149 + $0xec] sm:$0xf]
        %v5264 = vld [vmem:[%s2149 + $0xf0] sm:$0xf]
        %v5265 = vld [vmem:[%s2149 + $0xf4] sm:$0xf]
        %v5266 = vld [vmem:[%s2149 + $0xf8] sm:$0xf]
        %v5267 = vld [vmem:[%s2149 + $0xfc] sm:$0xf]
        %v5270 = vunpack.c.l.b16 %v5202
        %v5271 = vunpack.c.h.b16 %v5202
        %v5272 = vunpack.c.l.b16 %v5203
        %v5273 = vunpack.c.h.b16 %v5203
        %v5274 = vpack.c.b16 %v5270, %v5270
        %v5275 = vpack.c.b16 %v5271, %v5271
        %v5276 = vpack.c.b16 %v5272, %v5272
        %v5277 = vpack.c.b16 %v5273, %v5273
        %v5279 = vshrl.u32 %v5274, 16
        %v5281 = vshll.u32 %v5274, 16
        %v5283 = vrot.slane %v5281, 1
        %v5284 = vor.u32 %v5279, %v5283
        %v5286 = vshrl.u32 %v5275, 16
        %v5288 = vshll.u32 %v5275, 16
        %v5290 = vrot.slane %v5288, 1
        %v5291 = vor.u32 %v5286, %v5290
        %v5293 = vshrl.u32 %v5276, 16
        %v5295 = vshll.u32 %v5276, 16
        %v5297 = vrot.slane %v5295, 1
        %v5298 = vor.u32 %v5293, %v5297
        %v5300 = vshrl.u32 %v5277, 16
        %v5302 = vshll.u32 %v5277, 16
        %v5304 = vrot.slane %v5302, 1
        %v5305 = vor.u32 %v5300, %v5304
        %v5374 = vunpack.c.l.b16 %v5204
        %v5375 = vunpack.c.l.b16 %v5205
        %v5376 = vunpack.c.l.b16 %v5206
        %v5377 = vunpack.c.l.b16 %v5207
        %v5378 = vunpack.c.l.b16 %v5208
        %v5379 = vunpack.c.l.b16 %v5209
        %v5380 = vunpack.c.l.b16 %v5210
        %v5381 = vunpack.c.l.b16 %v5211
        %v5382 = vunpack.c.l.b16 %v5212
        %v5383 = vunpack.c.l.b16 %v5213
        %v5384 = vunpack.c.l.b16 %v5214
        %v5385 = vunpack.c.l.b16 %v5215
        %v5386 = vunpack.c.l.b16 %v5216
        %v5387 = vunpack.c.l.b16 %v5217
        %v5388 = vunpack.c.l.b16 %v5218
        %v5389 = vunpack.c.l.b16 %v5219
        %v5390 = vunpack.c.l.b16 %v5220
        %v5391 = vunpack.c.l.b16 %v5221
        %v5392 = vunpack.c.l.b16 %v5222
        %v5393 = vunpack.c.l.b16 %v5223
        %v5394 = vunpack.c.l.b16 %v5224
        %v5395 = vunpack.c.l.b16 %v5225
        %v5396 = vunpack.c.l.b16 %v5226
        %v5397 = vunpack.c.l.b16 %v5227
        %v5398 = vunpack.c.l.b16 %v5228
        %v5399 = vunpack.c.l.b16 %v5229
        %v5400 = vunpack.c.l.b16 %v5230
        %v5401 = vunpack.c.l.b16 %v5231
        %v5402 = vunpack.c.l.b16 %v5232
        %v5403 = vunpack.c.l.b16 %v5233
        %v5404 = vunpack.c.l.b16 %v5234
        %v5405 = vunpack.c.l.b16 %v5235
        %v5406 = vunpack.c.l.b16 %v5236
        %v5407 = vunpack.c.l.b16 %v5237
        %v5408 = vunpack.c.l.b16 %v5238
        %v5409 = vunpack.c.l.b16 %v5239
        %v5410 = vunpack.c.l.b16 %v5240
        %v5411 = vunpack.c.l.b16 %v5241
        %v5412 = vunpack.c.l.b16 %v5242
        %v5413 = vunpack.c.l.b16 %v5243
        %v5414 = vunpack.c.l.b16 %v5244
        %v5415 = vunpack.c.l.b16 %v5245
        %v5416 = vunpack.c.l.b16 %v5246
        %v5417 = vunpack.c.l.b16 %v5247
        %v5418 = vunpack.c.l.b16 %v5248
        %v5419 = vunpack.c.l.b16 %v5249
        %v5420 = vunpack.c.l.b16 %v5250
        %v5421 = vunpack.c.l.b16 %v5251
        %v5422 = vunpack.c.l.b16 %v5252
        %v5423 = vunpack.c.l.b16 %v5253
        %v5424 = vunpack.c.l.b16 %v5254
        %v5425 = vunpack.c.l.b16 %v5255
        %v5426 = vunpack.c.l.b16 %v5256
        %v5427 = vunpack.c.l.b16 %v5257
        %v5428 = vunpack.c.l.b16 %v5258
        %v5429 = vunpack.c.l.b16 %v5259
        %v5430 = vunpack.c.l.b16 %v5260
        %v5431 = vunpack.c.l.b16 %v5261
        %v5432 = vunpack.c.l.b16 %v5262
        %v5433 = vunpack.c.l.b16 %v5263
        %v5434 = vunpack.c.l.b16 %v5264
        %v5435 = vunpack.c.l.b16 %v5265
        %v5436 = vunpack.c.l.b16 %v5266
        %v5437 = vunpack.c.l.b16 %v5267
        %v5438 = vpack.c.b16 %v5375, %v5374
        %v5439 = vpack.c.b16 %v5377, %v5376
        %v5440 = vpack.c.b16 %v5379, %v5378
        %v5441 = vpack.c.b16 %v5381, %v5380
        %v5442 = vpack.c.b16 %v5383, %v5382
        %v5443 = vpack.c.b16 %v5385, %v5384
        %v5444 = vpack.c.b16 %v5387, %v5386
        %v5445 = vpack.c.b16 %v5389, %v5388
        %v5446 = vpack.c.b16 %v5391, %v5390
        %v5447 = vpack.c.b16 %v5393, %v5392
        %v5448 = vpack.c.b16 %v5395, %v5394
        %v5449 = vpack.c.b16 %v5397, %v5396
        %v5450 = vpack.c.b16 %v5399, %v5398
        %v5451 = vpack.c.b16 %v5401, %v5400
        %v5452 = vpack.c.b16 %v5403, %v5402
        %v5453 = vpack.c.b16 %v5405, %v5404
        %v5454 = vpack.c.b16 %v5407, %v5406
        %v5455 = vpack.c.b16 %v5409, %v5408
        %v5456 = vpack.c.b16 %v5411, %v5410
        %v5457 = vpack.c.b16 %v5413, %v5412
        %v5458 = vpack.c.b16 %v5415, %v5414
        %v5459 = vpack.c.b16 %v5417, %v5416
        %v5460 = vpack.c.b16 %v5419, %v5418
        %v5461 = vpack.c.b16 %v5421, %v5420
        %v5462 = vpack.c.b16 %v5423, %v5422
        %v5463 = vpack.c.b16 %v5425, %v5424
        %v5464 = vpack.c.b16 %v5427, %v5426
        %v5465 = vpack.c.b16 %v5429, %v5428
        %v5466 = vpack.c.b16 %v5431, %v5430
        %v5467 = vpack.c.b16 %v5433, %v5432
        %v5468 = vpack.c.b16 %v5435, %v5434
        %v5469 = vpack.c.b16 %v5437, %v5436
        %5502 = vmatpush.bf16.msra.mxu0 %v5445
        %5503 = vmatpush.bf16.msra.mxu0 %v5444
        %5504 = vmatpush.bf16.msra.mxu0 %v5443
        %5505 = vmatpush.bf16.msra.mxu0 %v5442
        %5506 = vmatpush.bf16.msra.mxu0 %v5441
        %5507 = vmatpush.bf16.msra.mxu0 %v5440
        %5508 = vmatpush.bf16.msra.mxu0 %v5439
        %5509 = vmatpush.bf16.msra.mxu0 %v5438
        %5510 = vmatmul.bf16.gmra.mxu0 %v5284
        %v5511 = vpop.f32.mrf.mxu0
        %v5512 = vadd.f32 0.0, %v5511
        %v5513 = vpop.f32.mrf.mxu0
        %5514 = vdwg.mxu0
        %5515 = vmatpush.bf16.msra.mxu0 %v5453
        %5516 = vmatpush.bf16.msra.mxu0 %v5452
        %5517 = vmatpush.bf16.msra.mxu0 %v5451
        %5518 = vmatpush.bf16.msra.mxu0 %v5450
        %5519 = vmatpush.bf16.msra.mxu0 %v5449
        %5520 = vmatpush.bf16.msra.mxu0 %v5448
        %5521 = vmatpush.bf16.msra.mxu0 %v5447
        %5522 = vmatpush.bf16.msra.mxu0 %v5446
        %5523 = vmatmul.bf16.gmra.mxu0 %v5291
        %v5524 = vpop.f32.mrf.mxu0
        %v5525 = vadd.f32 %v5512, %v5524
        %v5526 = vpop.f32.mrf.mxu0
        %5527 = vdwg.mxu0
        %5528 = vmatpush.bf16.msra.mxu0 %v5461
        %5529 = vmatpush.bf16.msra.mxu0 %v5460
        %5530 = vmatpush.bf16.msra.mxu0 %v5459
        %5531 = vmatpush.bf16.msra.mxu0 %v5458
        %5532 = vmatpush.bf16.msra.mxu0 %v5457
        %5533 = vmatpush.bf16.msra.mxu0 %v5456
        %5534 = vmatpush.bf16.msra.mxu0 %v5455
        %5535 = vmatpush.bf16.msra.mxu0 %v5454
        %5536 = vmatmul.bf16.gmra.mxu0 %v5298
        %v5537 = vpop.f32.mrf.mxu0
        %v5538 = vadd.f32 %v5525, %v5537
        %v5539 = vpop.f32.mrf.mxu0
        %5540 = vdwg.mxu0
        %5541 = vmatpush.bf16.msra.mxu0 %v5469
        %5542 = vmatpush.bf16.msra.mxu0 %v5468
        %5543 = vmatpush.bf16.msra.mxu0 %v5467
        %5544 = vmatpush.bf16.msra.mxu0 %v5466
        %5545 = vmatpush.bf16.msra.mxu0 %v5465
        %5546 = vmatpush.bf16.msra.mxu0 %v5464
        %5547 = vmatpush.bf16.msra.mxu0 %v5463
        %5548 = vmatpush.bf16.msra.mxu0 %v5462
        %5549 = vmatmul.bf16.gmra.mxu0 %v5305
        %v5550 = vpop.f32.mrf.mxu0
        %v5551 = vadd.f32 %v5538, %v5550
        %v5552 = vpop.f32.mrf.mxu0
        %5553 = vdwg.mxu0
        %v5554 = vsel %vm1515, %v5551, 0.0
        %v5555 = vadd.f32 %v5201, %v5554
        %v5556 = vld [vmem:[%s2502] sm:$0xf]
        %v5557 = vld [vmem:[%s2502 + $0x4] sm:$0xf]
        %v5558 = vld [vmem:[%s2502 + $0x8] sm:$0xf]
        %v5559 = vld [vmem:[%s2502 + $0xc] sm:$0xf]
        %v5560 = vld [vmem:[%s2502 + $0x10] sm:$0xf]
        %v5561 = vld [vmem:[%s2502 + $0x14] sm:$0xf]
        %v5562 = vld [vmem:[%s2502 + $0x18] sm:$0xf]
        %v5563 = vld [vmem:[%s2502 + $0x1c] sm:$0xf]
        %v5564 = vld [vmem:[%s2502 + $0x20] sm:$0xf]
        %v5565 = vld [vmem:[%s2502 + $0x24] sm:$0xf]
        %v5566 = vld [vmem:[%s2502 + $0x28] sm:$0xf]
        %v5567 = vld [vmem:[%s2502 + $0x2c] sm:$0xf]
        %v5568 = vld [vmem:[%s2502 + $0x30] sm:$0xf]
        %v5569 = vld [vmem:[%s2502 + $0x34] sm:$0xf]
        %v5570 = vld [vmem:[%s2502 + $0x38] sm:$0xf]
        %v5571 = vld [vmem:[%s2502 + $0x3c] sm:$0xf]
        %v5572 = vld [vmem:[%s2502 + $0x40] sm:$0xf]
        %v5573 = vld [vmem:[%s2502 + $0x44] sm:$0xf]
        %v5574 = vld [vmem:[%s2502 + $0x48] sm:$0xf]
        %v5575 = vld [vmem:[%s2502 + $0x4c] sm:$0xf]
        %v5576 = vld [vmem:[%s2502 + $0x50] sm:$0xf]
        %v5577 = vld [vmem:[%s2502 + $0x54] sm:$0xf]
        %v5578 = vld [vmem:[%s2502 + $0x58] sm:$0xf]
        %v5579 = vld [vmem:[%s2502 + $0x5c] sm:$0xf]
        %v5580 = vld [vmem:[%s2502 + $0x60] sm:$0xf]
        %v5581 = vld [vmem:[%s2502 + $0x64] sm:$0xf]
        %v5582 = vld [vmem:[%s2502 + $0x68] sm:$0xf]
        %v5583 = vld [vmem:[%s2502 + $0x6c] sm:$0xf]
        %v5584 = vld [vmem:[%s2502 + $0x70] sm:$0xf]
        %v5585 = vld [vmem:[%s2502 + $0x74] sm:$0xf]
        %v5586 = vld [vmem:[%s2502 + $0x78] sm:$0xf]
        %v5587 = vld [vmem:[%s2502 + $0x7c] sm:$0xf]
        %v5588 = vld [vmem:[%s2502 + $0x80] sm:$0xf]
        %v5589 = vld [vmem:[%s2502 + $0x84] sm:$0xf]
        %v5590 = vld [vmem:[%s2502 + $0x88] sm:$0xf]
        %v5591 = vld [vmem:[%s2502 + $0x8c] sm:$0xf]
        %v5592 = vld [vmem:[%s2502 + $0x90] sm:$0xf]
        %v5593 = vld [vmem:[%s2502 + $0x94] sm:$0xf]
        %v5594 = vld [vmem:[%s2502 + $0x98] sm:$0xf]
        %v5595 = vld [vmem:[%s2502 + $0x9c] sm:$0xf]
        %v5596 = vld [vmem:[%s2502 + $0xa0] sm:$0xf]
        %v5597 = vld [vmem:[%s2502 + $0xa4] sm:$0xf]
        %v5598 = vld [vmem:[%s2502 + $0xa8] sm:$0xf]
        %v5599 = vld [vmem:[%s2502 + $0xac] sm:$0xf]
        %v5600 = vld [vmem:[%s2502 + $0xb0] sm:$0xf]
        %v5601 = vld [vmem:[%s2502 + $0xb4] sm:$0xf]
        %v5602 = vld [vmem:[%s2502 + $0xb8] sm:$0xf]
        %v5603 = vld [vmem:[%s2502 + $0xbc] sm:$0xf]
        %v5604 = vld [vmem:[%s2502 + $0xc0] sm:$0xf]
        %v5605 = vld [vmem:[%s2502 + $0xc4] sm:$0xf]
        %v5606 = vld [vmem:[%s2502 + $0xc8] sm:$0xf]
        %v5607 = vld [vmem:[%s2502 + $0xcc] sm:$0xf]
        %v5608 = vld [vmem:[%s2502 + $0xd0] sm:$0xf]
        %v5609 = vld [vmem:[%s2502 + $0xd4] sm:$0xf]
        %v5610 = vld [vmem:[%s2502 + $0xd8] sm:$0xf]
        %v5611 = vld [vmem:[%s2502 + $0xdc] sm:$0xf]
        %v5612 = vld [vmem:[%s2502 + $0xe0] sm:$0xf]
        %v5613 = vld [vmem:[%s2502 + $0xe4] sm:$0xf]
        %v5614 = vld [vmem:[%s2502 + $0xe8] sm:$0xf]
        %v5615 = vld [vmem:[%s2502 + $0xec] sm:$0xf]
        %v5616 = vld [vmem:[%s2502 + $0xf0] sm:$0xf]
        %v5617 = vld [vmem:[%s2502 + $0xf4] sm:$0xf]
        %v5618 = vld [vmem:[%s2502 + $0xf8] sm:$0xf]
        %v5619 = vld [vmem:[%s2502 + $0xfc] sm:$0xf]
        %v5684 = vunpack.c.l.b16 %v5556
        %v5685 = vunpack.c.l.b16 %v5557
        %v5686 = vunpack.c.l.b16 %v5558
        %v5687 = vunpack.c.l.b16 %v5559
        %v5688 = vunpack.c.l.b16 %v5560
        %v5689 = vunpack.c.l.b16 %v5561
        %v5690 = vunpack.c.l.b16 %v5562
        %v5691 = vunpack.c.l.b16 %v5563
        %v5692 = vunpack.c.l.b16 %v5564
        %v5693 = vunpack.c.l.b16 %v5565
        %v5694 = vunpack.c.l.b16 %v5566
        %v5695 = vunpack.c.l.b16 %v5567
        %v5696 = vunpack.c.l.b16 %v5568
        %v5697 = vunpack.c.l.b16 %v5569
        %v5698 = vunpack.c.l.b16 %v5570
        %v5699 = vunpack.c.l.b16 %v5571
        %v5700 = vunpack.c.l.b16 %v5572
        %v5701 = vunpack.c.l.b16 %v5573
        %v5702 = vunpack.c.l.b16 %v5574
        %v5703 = vunpack.c.l.b16 %v5575
        %v5704 = vunpack.c.l.b16 %v5576
        %v5705 = vunpack.c.l.b16 %v5577
        %v5706 = vunpack.c.l.b16 %v5578
        %v5707 = vunpack.c.l.b16 %v5579
        %v5708 = vunpack.c.l.b16 %v5580
        %v5709 = vunpack.c.l.b16 %v5581
        %v5710 = vunpack.c.l.b16 %v5582
        %v5711 = vunpack.c.l.b16 %v5583
        %v5712 = vunpack.c.l.b16 %v5584
        %v5713 = vunpack.c.l.b16 %v5585
        %v5714 = vunpack.c.l.b16 %v5586
        %v5715 = vunpack.c.l.b16 %v5587
        %v5716 = vunpack.c.l.b16 %v5588
        %v5717 = vunpack.c.l.b16 %v5589
        %v5718 = vunpack.c.l.b16 %v5590
        %v5719 = vunpack.c.l.b16 %v5591
        %v5720 = vunpack.c.l.b16 %v5592
        %v5721 = vunpack.c.l.b16 %v5593
        %v5722 = vunpack.c.l.b16 %v5594
        %v5723 = vunpack.c.l.b16 %v5595
        %v5724 = vunpack.c.l.b16 %v5596
        %v5725 = vunpack.c.l.b16 %v5597
        %v5726 = vunpack.c.l.b16 %v5598
        %v5727 = vunpack.c.l.b16 %v5599
        %v5728 = vunpack.c.l.b16 %v5600
        %v5729 = vunpack.c.l.b16 %v5601
        %v5730 = vunpack.c.l.b16 %v5602
        %v5731 = vunpack.c.l.b16 %v5603
        %v5732 = vunpack.c.l.b16 %v5604
        %v5733 = vunpack.c.l.b16 %v5605
        %v5734 = vunpack.c.l.b16 %v5606
        %v5735 = vunpack.c.l.b16 %v5607
        %v5736 = vunpack.c.l.b16 %v5608
        %v5737 = vunpack.c.l.b16 %v5609
        %v5738 = vunpack.c.l.b16 %v5610
        %v5739 = vunpack.c.l.b16 %v5611
        %v5740 = vunpack.c.l.b16 %v5612
        %v5741 = vunpack.c.l.b16 %v5613
        %v5742 = vunpack.c.l.b16 %v5614
        %v5743 = vunpack.c.l.b16 %v5615
        %v5744 = vunpack.c.l.b16 %v5616
        %v5745 = vunpack.c.l.b16 %v5617
        %v5746 = vunpack.c.l.b16 %v5618
        %v5747 = vunpack.c.l.b16 %v5619
        %v5748 = vpack.c.b16 %v5685, %v5684
        %v5749 = vpack.c.b16 %v5687, %v5686
        %v5750 = vpack.c.b16 %v5689, %v5688
        %v5751 = vpack.c.b16 %v5691, %v5690
        %v5752 = vpack.c.b16 %v5693, %v5692
        %v5753 = vpack.c.b16 %v5695, %v5694
        %v5754 = vpack.c.b16 %v5697, %v5696
        %v5755 = vpack.c.b16 %v5699, %v5698
        %v5756 = vpack.c.b16 %v5701, %v5700
        %v5757 = vpack.c.b16 %v5703, %v5702
        %v5758 = vpack.c.b16 %v5705, %v5704
        %v5759 = vpack.c.b16 %v5707, %v5706
        %v5760 = vpack.c.b16 %v5709, %v5708
        %v5761 = vpack.c.b16 %v5711, %v5710
        %v5762 = vpack.c.b16 %v5713, %v5712
        %v5763 = vpack.c.b16 %v5715, %v5714
        %v5764 = vpack.c.b16 %v5717, %v5716
        %v5765 = vpack.c.b16 %v5719, %v5718
        %v5766 = vpack.c.b16 %v5721, %v5720
        %v5767 = vpack.c.b16 %v5723, %v5722
        %v5768 = vpack.c.b16 %v5725, %v5724
        %v5769 = vpack.c.b16 %v5727, %v5726
        %v5770 = vpack.c.b16 %v5729, %v5728
        %v5771 = vpack.c.b16 %v5731, %v5730
        %v5772 = vpack.c.b16 %v5733, %v5732
        %v5773 = vpack.c.b16 %v5735, %v5734
        %v5774 = vpack.c.b16 %v5737, %v5736
        %v5775 = vpack.c.b16 %v5739, %v5738
        %v5776 = vpack.c.b16 %v5741, %v5740
        %v5777 = vpack.c.b16 %v5743, %v5742
        %v5778 = vpack.c.b16 %v5745, %v5744
        %v5779 = vpack.c.b16 %v5747, %v5746
        %5812 = vmatpush.bf16.msra.mxu0 %v5755
        %5813 = vmatpush.bf16.msra.mxu0 %v5754
        %5814 = vmatpush.bf16.msra.mxu0 %v5753
        %5815 = vmatpush.bf16.msra.mxu0 %v5752
        %5816 = vmatpush.bf16.msra.mxu0 %v5751
        %5817 = vmatpush.bf16.msra.mxu0 %v5750
        %5818 = vmatpush.bf16.msra.mxu0 %v5749
        %5819 = vmatpush.bf16.msra.mxu0 %v5748
        %5820 = vmatmul.bf16.gmra.mxu0 %v5284
        %v5821 = vpop.f32.mrf.mxu0
        %v5822 = vadd.f32 0.0, %v5821
        %v5823 = vpop.f32.mrf.mxu0
        %5824 = vdwg.mxu0
        %5825 = vmatpush.bf16.msra.mxu0 %v5763
        %5826 = vmatpush.bf16.msra.mxu0 %v5762
        %5827 = vmatpush.bf16.msra.mxu0 %v5761
        %5828 = vmatpush.bf16.msra.mxu0 %v5760
        %5829 = vmatpush.bf16.msra.mxu0 %v5759
        %5830 = vmatpush.bf16.msra.mxu0 %v5758
        %5831 = vmatpush.bf16.msra.mxu0 %v5757
        %5832 = vmatpush.bf16.msra.mxu0 %v5756
        %5833 = vmatmul.bf16.gmra.mxu0 %v5291
        %v5834 = vpop.f32.mrf.mxu0
        %v5835 = vadd.f32 %v5822, %v5834
        %v5836 = vpop.f32.mrf.mxu0
        %5837 = vdwg.mxu0
        %5838 = vmatpush.bf16.msra.mxu0 %v5771
        %5839 = vmatpush.bf16.msra.mxu0 %v5770
        %5840 = vmatpush.bf16.msra.mxu0 %v5769
        %5841 = vmatpush.bf16.msra.mxu0 %v5768
        %5842 = vmatpush.bf16.msra.mxu0 %v5767
        %5843 = vmatpush.bf16.msra.mxu0 %v5766
        %5844 = vmatpush.bf16.msra.mxu0 %v5765
        %5845 = vmatpush.bf16.msra.mxu0 %v5764
        %5846 = vmatmul.bf16.gmra.mxu0 %v5298
        %v5847 = vpop.f32.mrf.mxu0
        %v5848 = vadd.f32 %v5835, %v5847
        %v5849 = vpop.f32.mrf.mxu0
        %5850 = vdwg.mxu0
        %5851 = vmatpush.bf16.msra.mxu0 %v5779
        %5852 = vmatpush.bf16.msra.mxu0 %v5778
        %5853 = vmatpush.bf16.msra.mxu0 %v5777
        %5854 = vmatpush.bf16.msra.mxu0 %v5776
        %5855 = vmatpush.bf16.msra.mxu0 %v5775
        %5856 = vmatpush.bf16.msra.mxu0 %v5774
        %5857 = vmatpush.bf16.msra.mxu0 %v5773
        %5858 = vmatpush.bf16.msra.mxu0 %v5772
        %5859 = vmatmul.bf16.gmra.mxu0 %v5305
        %v5860 = vpop.f32.mrf.mxu0
        %v5861 = vadd.f32 %v5848, %v5860
        %v5862 = vpop.f32.mrf.mxu0
        %5863 = vdwg.mxu0
        %v5864 = vsel %vm821, %v5861, 0.0
        %v5865 = vadd.f32 %v5555, %v5864
        %v5866 = vld [vmem:[%s3521 + $0x10] sm:$0x66]
        %v5867 = vld [vmem:[%s3521 + $0x18] sm:$0x66]
        %v5868 = vld [vmem:[%s2815] sm:$0xf]
        %v5869 = vld [vmem:[%s2815 + $0x4] sm:$0xf]
        %v5870 = vld [vmem:[%s2815 + $0x8] sm:$0xf]
        %v5871 = vld [vmem:[%s2815 + $0xc] sm:$0xf]
        %v5872 = vld [vmem:[%s2815 + $0x10] sm:$0xf]
        %v5873 = vld [vmem:[%s2815 + $0x14] sm:$0xf]
        %v5874 = vld [vmem:[%s2815 + $0x18] sm:$0xf]
        %v5875 = vld [vmem:[%s2815 + $0x1c] sm:$0xf]
        %v5876 = vld [vmem:[%s2815 + $0x20] sm:$0xf]
        %v5877 = vld [vmem:[%s2815 + $0x24] sm:$0xf]
        %v5878 = vld [vmem:[%s2815 + $0x28] sm:$0xf]
        %v5879 = vld [vmem:[%s2815 + $0x2c] sm:$0xf]
        %v5880 = vld [vmem:[%s2815 + $0x30] sm:$0xf]
        %v5881 = vld [vmem:[%s2815 + $0x34] sm:$0xf]
        %v5882 = vld [vmem:[%s2815 + $0x38] sm:$0xf]
        %v5883 = vld [vmem:[%s2815 + $0x3c] sm:$0xf]
        %v5884 = vld [vmem:[%s2815 + $0x40] sm:$0xf]
        %v5885 = vld [vmem:[%s2815 + $0x44] sm:$0xf]
        %v5886 = vld [vmem:[%s2815 + $0x48] sm:$0xf]
        %v5887 = vld [vmem:[%s2815 + $0x4c] sm:$0xf]
        %v5888 = vld [vmem:[%s2815 + $0x50] sm:$0xf]
        %v5889 = vld [vmem:[%s2815 + $0x54] sm:$0xf]
        %v5890 = vld [vmem:[%s2815 + $0x58] sm:$0xf]
        %v5891 = vld [vmem:[%s2815 + $0x5c] sm:$0xf]
        %v5892 = vld [vmem:[%s2815 + $0x60] sm:$0xf]
        %v5893 = vld [vmem:[%s2815 + $0x64] sm:$0xf]
        %v5894 = vld [vmem:[%s2815 + $0x68] sm:$0xf]
        %v5895 = vld [vmem:[%s2815 + $0x6c] sm:$0xf]
        %v5896 = vld [vmem:[%s2815 + $0x70] sm:$0xf]
        %v5897 = vld [vmem:[%s2815 + $0x74] sm:$0xf]
        %v5898 = vld [vmem:[%s2815 + $0x78] sm:$0xf]
        %v5899 = vld [vmem:[%s2815 + $0x7c] sm:$0xf]
        %v5900 = vld [vmem:[%s2815 + $0x80] sm:$0xf]
        %v5901 = vld [vmem:[%s2815 + $0x84] sm:$0xf]
        %v5902 = vld [vmem:[%s2815 + $0x88] sm:$0xf]
        %v5903 = vld [vmem:[%s2815 + $0x8c] sm:$0xf]
        %v5904 = vld [vmem:[%s2815 + $0x90] sm:$0xf]
        %v5905 = vld [vmem:[%s2815 + $0x94] sm:$0xf]
        %v5906 = vld [vmem:[%s2815 + $0x98] sm:$0xf]
        %v5907 = vld [vmem:[%s2815 + $0x9c] sm:$0xf]
        %v5908 = vld [vmem:[%s2815 + $0xa0] sm:$0xf]
        %v5909 = vld [vmem:[%s2815 + $0xa4] sm:$0xf]
        %v5910 = vld [vmem:[%s2815 + $0xa8] sm:$0xf]
        %v5911 = vld [vmem:[%s2815 + $0xac] sm:$0xf]
        %v5912 = vld [vmem:[%s2815 + $0xb0] sm:$0xf]
        %v5913 = vld [vmem:[%s2815 + $0xb4] sm:$0xf]
        %v5914 = vld [vmem:[%s2815 + $0xb8] sm:$0xf]
        %v5915 = vld [vmem:[%s2815 + $0xbc] sm:$0xf]
        %v5916 = vld [vmem:[%s2815 + $0xc0] sm:$0xf]
        %v5917 = vld [vmem:[%s2815 + $0xc4] sm:$0xf]
        %v5918 = vld [vmem:[%s2815 + $0xc8] sm:$0xf]
        %v5919 = vld [vmem:[%s2815 + $0xcc] sm:$0xf]
        %v5920 = vld [vmem:[%s2815 + $0xd0] sm:$0xf]
        %v5921 = vld [vmem:[%s2815 + $0xd4] sm:$0xf]
        %v5922 = vld [vmem:[%s2815 + $0xd8] sm:$0xf]
        %v5923 = vld [vmem:[%s2815 + $0xdc] sm:$0xf]
        %v5924 = vld [vmem:[%s2815 + $0xe0] sm:$0xf]
        %v5925 = vld [vmem:[%s2815 + $0xe4] sm:$0xf]
        %v5926 = vld [vmem:[%s2815 + $0xe8] sm:$0xf]
        %v5927 = vld [vmem:[%s2815 + $0xec] sm:$0xf]
        %v5928 = vld [vmem:[%s2815 + $0xf0] sm:$0xf]
        %v5929 = vld [vmem:[%s2815 + $0xf4] sm:$0xf]
        %v5930 = vld [vmem:[%s2815 + $0xf8] sm:$0xf]
        %v5931 = vld [vmem:[%s2815 + $0xfc] sm:$0xf]
        %v5934 = vunpack.c.l.b16 %v5866
        %v5935 = vunpack.c.h.b16 %v5866
        %v5936 = vunpack.c.l.b16 %v5867
        %v5937 = vunpack.c.h.b16 %v5867
        %v5938 = vpack.c.b16 %v5934, %v5934
        %v5939 = vpack.c.b16 %v5935, %v5935
        %v5940 = vpack.c.b16 %v5936, %v5936
        %v5941 = vpack.c.b16 %v5937, %v5937
        %v5942 = vrot.slane %v5938, 1
        %v5943 = vrot.slane %v5939, 1
        %v5944 = vrot.slane %v5940, 1
        %v5945 = vrot.slane %v5941, 1
        %v6014 = vunpack.c.l.b16 %v5868
        %v6015 = vunpack.c.l.b16 %v5869
        %v6016 = vunpack.c.l.b16 %v5870
        %v6017 = vunpack.c.l.b16 %v5871
        %v6018 = vunpack.c.l.b16 %v5872
        %v6019 = vunpack.c.l.b16 %v5873
        %v6020 = vunpack.c.l.b16 %v5874
        %v6021 = vunpack.c.l.b16 %v5875
        %v6022 = vunpack.c.l.b16 %v5876
        %v6023 = vunpack.c.l.b16 %v5877
        %v6024 = vunpack.c.l.b16 %v5878
        %v6025 = vunpack.c.l.b16 %v5879
        %v6026 = vunpack.c.l.b16 %v5880
        %v6027 = vunpack.c.l.b16 %v5881
        %v6028 = vunpack.c.l.b16 %v5882
        %v6029 = vunpack.c.l.b16 %v5883
        %v6030 = vunpack.c.l.b16 %v5884
        %v6031 = vunpack.c.l.b16 %v5885
        %v6032 = vunpack.c.l.b16 %v5886
        %v6033 = vunpack.c.l.b16 %v5887
        %v6034 = vunpack.c.l.b16 %v5888
        %v6035 = vunpack.c.l.b16 %v5889
        %v6036 = vunpack.c.l.b16 %v5890
        %v6037 = vunpack.c.l.b16 %v5891
        %v6038 = vunpack.c.l.b16 %v5892
        %v6039 = vunpack.c.l.b16 %v5893
        %v6040 = vunpack.c.l.b16 %v5894
        %v6041 = vunpack.c.l.b16 %v5895
        %v6042 = vunpack.c.l.b16 %v5896
        %v6043 = vunpack.c.l.b16 %v5897
        %v6044 = vunpack.c.l.b16 %v5898
        %v6045 = vunpack.c.l.b16 %v5899
        %v6046 = vunpack.c.l.b16 %v5900
        %v6047 = vunpack.c.l.b16 %v5901
        %v6048 = vunpack.c.l.b16 %v5902
        %v6049 = vunpack.c.l.b16 %v5903
        %v6050 = vunpack.c.l.b16 %v5904
        %v6051 = vunpack.c.l.b16 %v5905
        %v6052 = vunpack.c.l.b16 %v5906
        %v6053 = vunpack.c.l.b16 %v5907
        %v6054 = vunpack.c.l.b16 %v5908
        %v6055 = vunpack.c.l.b16 %v5909
        %v6056 = vunpack.c.l.b16 %v5910
        %v6057 = vunpack.c.l.b16 %v5911
        %v6058 = vunpack.c.l.b16 %v5912
        %v6059 = vunpack.c.l.b16 %v5913
        %v6060 = vunpack.c.l.b16 %v5914
        %v6061 = vunpack.c.l.b16 %v5915
        %v6062 = vunpack.c.l.b16 %v5916
        %v6063 = vunpack.c.l.b16 %v5917
        %v6064 = vunpack.c.l.b16 %v5918
        %v6065 = vunpack.c.l.b16 %v5919
        %v6066 = vunpack.c.l.b16 %v5920
        %v6067 = vunpack.c.l.b16 %v5921
        %v6068 = vunpack.c.l.b16 %v5922
        %v6069 = vunpack.c.l.b16 %v5923
        %v6070 = vunpack.c.l.b16 %v5924
        %v6071 = vunpack.c.l.b16 %v5925
        %v6072 = vunpack.c.l.b16 %v5926
        %v6073 = vunpack.c.l.b16 %v5927
        %v6074 = vunpack.c.l.b16 %v5928
        %v6075 = vunpack.c.l.b16 %v5929
        %v6076 = vunpack.c.l.b16 %v5930
        %v6077 = vunpack.c.l.b16 %v5931
        %v6078 = vpack.c.b16 %v6015, %v6014
        %v6079 = vpack.c.b16 %v6017, %v6016
        %v6080 = vpack.c.b16 %v6019, %v6018
        %v6081 = vpack.c.b16 %v6021, %v6020
        %v6082 = vpack.c.b16 %v6023, %v6022
        %v6083 = vpack.c.b16 %v6025, %v6024
        %v6084 = vpack.c.b16 %v6027, %v6026
        %v6085 = vpack.c.b16 %v6029, %v6028
        %v6086 = vpack.c.b16 %v6031, %v6030
        %v6087 = vpack.c.b16 %v6033, %v6032
        %v6088 = vpack.c.b16 %v6035, %v6034
        %v6089 = vpack.c.b16 %v6037, %v6036
        %v6090 = vpack.c.b16 %v6039, %v6038
        %v6091 = vpack.c.b16 %v6041, %v6040
        %v6092 = vpack.c.b16 %v6043, %v6042
        %v6093 = vpack.c.b16 %v6045, %v6044
        %v6094 = vpack.c.b16 %v6047, %v6046
        %v6095 = vpack.c.b16 %v6049, %v6048
        %v6096 = vpack.c.b16 %v6051, %v6050
        %v6097 = vpack.c.b16 %v6053, %v6052
        %v6098 = vpack.c.b16 %v6055, %v6054
        %v6099 = vpack.c.b16 %v6057, %v6056
        %v6100 = vpack.c.b16 %v6059, %v6058
        %v6101 = vpack.c.b16 %v6061, %v6060
        %v6102 = vpack.c.b16 %v6063, %v6062
        %v6103 = vpack.c.b16 %v6065, %v6064
        %v6104 = vpack.c.b16 %v6067, %v6066
        %v6105 = vpack.c.b16 %v6069, %v6068
        %v6106 = vpack.c.b16 %v6071, %v6070
        %v6107 = vpack.c.b16 %v6073, %v6072
        %v6108 = vpack.c.b16 %v6075, %v6074
        %v6109 = vpack.c.b16 %v6077, %v6076
        %6142 = vmatpush.bf16.msra.mxu0 %v6085
        %6143 = vmatpush.bf16.msra.mxu0 %v6084
        %6144 = vmatpush.bf16.msra.mxu0 %v6083
        %6145 = vmatpush.bf16.msra.mxu0 %v6082
        %6146 = vmatpush.bf16.msra.mxu0 %v6081
        %6147 = vmatpush.bf16.msra.mxu0 %v6080
        %6148 = vmatpush.bf16.msra.mxu0 %v6079
        %6149 = vmatpush.bf16.msra.mxu0 %v6078
        %6150 = vmatmul.bf16.gmra.mxu0 %v5942
        %v6151 = vpop.f32.mrf.mxu0
        %v6152 = vadd.f32 0.0, %v6151
        %v6153 = vpop.f32.mrf.mxu0
        %6154 = vdwg.mxu0
        %6155 = vmatpush.bf16.msra.mxu0 %v6093
        %6156 = vmatpush.bf16.msra.mxu0 %v6092
        %6157 = vmatpush.bf16.msra.mxu0 %v6091
        %6158 = vmatpush.bf16.msra.mxu0 %v6090
        %6159 = vmatpush.bf16.msra.mxu0 %v6089
        %6160 = vmatpush.bf16.msra.mxu0 %v6088
        %6161 = vmatpush.bf16.msra.mxu0 %v6087
        %6162 = vmatpush.bf16.msra.mxu0 %v6086
        %6163 = vmatmul.bf16.gmra.mxu0 %v5943
        %v6164 = vpop.f32.mrf.mxu0
        %v6165 = vadd.f32 %v6152, %v6164
        %v6166 = vpop.f32.mrf.mxu0
        %6167 = vdwg.mxu0
        %6168 = vmatpush.bf16.msra.mxu0 %v6101
        %6169 = vmatpush.bf16.msra.mxu0 %v6100
        %6170 = vmatpush.bf16.msra.mxu0 %v6099
        %6171 = vmatpush.bf16.msra.mxu0 %v6098
        %6172 = vmatpush.bf16.msra.mxu0 %v6097
        %6173 = vmatpush.bf16.msra.mxu0 %v6096
        %6174 = vmatpush.bf16.msra.mxu0 %v6095
        %6175 = vmatpush.bf16.msra.mxu0 %v6094
        %6176 = vmatmul.bf16.gmra.mxu0 %v5944
        %v6177 = vpop.f32.mrf.mxu0
        %v6178 = vadd.f32 %v6165, %v6177
        %v6179 = vpop.f32.mrf.mxu0
        %6180 = vdwg.mxu0
        %6181 = vmatpush.bf16.msra.mxu0 %v6109
        %6182 = vmatpush.bf16.msra.mxu0 %v6108
        %6183 = vmatpush.bf16.msra.mxu0 %v6107
        %6184 = vmatpush.bf16.msra.mxu0 %v6106
        %6185 = vmatpush.bf16.msra.mxu0 %v6105
        %6186 = vmatpush.bf16.msra.mxu0 %v6104
        %6187 = vmatpush.bf16.msra.mxu0 %v6103
        %6188 = vmatpush.bf16.msra.mxu0 %v6102
        %6189 = vmatmul.bf16.gmra.mxu0 %v5945
        %v6190 = vpop.f32.mrf.mxu0
        %v6191 = vadd.f32 %v6178, %v6190
        %v6192 = vpop.f32.mrf.mxu0
        %6193 = vdwg.mxu0
        %v6194 = vadd.f32 %v5865, %v6191
        %v6195 = vld [vmem:[%s3521 + $0x10] sm:$0xee]
        %v6196 = vld [vmem:[%s3521 + $0x18] sm:$0xee]
        %v6197 = vld [vmem:[%s3145] sm:$0xf]
        %v6198 = vld [vmem:[%s3145 + $0x4] sm:$0xf]
        %v6199 = vld [vmem:[%s3145 + $0x8] sm:$0xf]
        %v6200 = vld [vmem:[%s3145 + $0xc] sm:$0xf]
        %v6201 = vld [vmem:[%s3145 + $0x10] sm:$0xf]
        %v6202 = vld [vmem:[%s3145 + $0x14] sm:$0xf]
        %v6203 = vld [vmem:[%s3145 + $0x18] sm:$0xf]
        %v6204 = vld [vmem:[%s3145 + $0x1c] sm:$0xf]
        %v6205 = vld [vmem:[%s3145 + $0x20] sm:$0xf]
        %v6206 = vld [vmem:[%s3145 + $0x24] sm:$0xf]
        %v6207 = vld [vmem:[%s3145 + $0x28] sm:$0xf]
        %v6208 = vld [vmem:[%s3145 + $0x2c] sm:$0xf]
        %v6209 = vld [vmem:[%s3145 + $0x30] sm:$0xf]
        %v6210 = vld [vmem:[%s3145 + $0x34] sm:$0xf]
        %v6211 = vld [vmem:[%s3145 + $0x38] sm:$0xf]
        %v6212 = vld [vmem:[%s3145 + $0x3c] sm:$0xf]
        %v6213 = vld [vmem:[%s3145 + $0x40] sm:$0xf]
        %v6214 = vld [vmem:[%s3145 + $0x44] sm:$0xf]
        %v6215 = vld [vmem:[%s3145 + $0x48] sm:$0xf]
        %v6216 = vld [vmem:[%s3145 + $0x4c] sm:$0xf]
        %v6217 = vld [vmem:[%s3145 + $0x50] sm:$0xf]
        %v6218 = vld [vmem:[%s3145 + $0x54] sm:$0xf]
        %v6219 = vld [vmem:[%s3145 + $0x58] sm:$0xf]
        %v6220 = vld [vmem:[%s3145 + $0x5c] sm:$0xf]
        %v6221 = vld [vmem:[%s3145 + $0x60] sm:$0xf]
        %v6222 = vld [vmem:[%s3145 + $0x64] sm:$0xf]
        %v6223 = vld [vmem:[%s3145 + $0x68] sm:$0xf]
        %v6224 = vld [vmem:[%s3145 + $0x6c] sm:$0xf]
        %v6225 = vld [vmem:[%s3145 + $0x70] sm:$0xf]
        %v6226 = vld [vmem:[%s3145 + $0x74] sm:$0xf]
        %v6227 = vld [vmem:[%s3145 + $0x78] sm:$0xf]
        %v6228 = vld [vmem:[%s3145 + $0x7c] sm:$0xf]
        %v6229 = vld [vmem:[%s3145 + $0x80] sm:$0xf]
        %v6230 = vld [vmem:[%s3145 + $0x84] sm:$0xf]
        %v6231 = vld [vmem:[%s3145 + $0x88] sm:$0xf]
        %v6232 = vld [vmem:[%s3145 + $0x8c] sm:$0xf]
        %v6233 = vld [vmem:[%s3145 + $0x90] sm:$0xf]
        %v6234 = vld [vmem:[%s3145 + $0x94] sm:$0xf]
        %v6235 = vld [vmem:[%s3145 + $0x98] sm:$0xf]
        %v6236 = vld [vmem:[%s3145 + $0x9c] sm:$0xf]
        %v6237 = vld [vmem:[%s3145 + $0xa0] sm:$0xf]
        %v6238 = vld [vmem:[%s3145 + $0xa4] sm:$0xf]
        %v6239 = vld [vmem:[%s3145 + $0xa8] sm:$0xf]
        %v6240 = vld [vmem:[%s3145 + $0xac] sm:$0xf]
        %v6241 = vld [vmem:[%s3145 + $0xb0] sm:$0xf]
        %v6242 = vld [vmem:[%s3145 + $0xb4] sm:$0xf]
        %v6243 = vld [vmem:[%s3145 + $0xb8] sm:$0xf]
        %v6244 = vld [vmem:[%s3145 + $0xbc] sm:$0xf]
        %v6245 = vld [vmem:[%s3145 + $0xc0] sm:$0xf]
        %v6246 = vld [vmem:[%s3145 + $0xc4] sm:$0xf]
        %v6247 = vld [vmem:[%s3145 + $0xc8] sm:$0xf]
        %v6248 = vld [vmem:[%s3145 + $0xcc] sm:$0xf]
        %v6249 = vld [vmem:[%s3145 + $0xd0] sm:$0xf]
        %v6250 = vld [vmem:[%s3145 + $0xd4] sm:$0xf]
        %v6251 = vld [vmem:[%s3145 + $0xd8] sm:$0xf]
        %v6252 = vld [vmem:[%s3145 + $0xdc] sm:$0xf]
        %v6253 = vld [vmem:[%s3145 + $0xe0] sm:$0xf]
        %v6254 = vld [vmem:[%s3145 + $0xe4] sm:$0xf]
        %v6255 = vld [vmem:[%s3145 + $0xe8] sm:$0xf]
        %v6256 = vld [vmem:[%s3145 + $0xec] sm:$0xf]
        %v6257 = vld [vmem:[%s3145 + $0xf0] sm:$0xf]
        %v6258 = vld [vmem:[%s3145 + $0xf4] sm:$0xf]
        %v6259 = vld [vmem:[%s3145 + $0xf8] sm:$0xf]
        %v6260 = vld [vmem:[%s3145 + $0xfc] sm:$0xf]
        %v6263 = vunpack.c.l.b16 %v6195
        %v6264 = vunpack.c.h.b16 %v6195
        %v6265 = vunpack.c.l.b16 %v6196
        %v6266 = vunpack.c.h.b16 %v6196
        %v6267 = vpack.c.b16 %v6263, %v6263
        %v6268 = vpack.c.b16 %v6264, %v6264
        %v6269 = vpack.c.b16 %v6265, %v6265
        %v6270 = vpack.c.b16 %v6266, %v6266
        %v6272 = vshrl.u32 %v6267, 16
        %v6274 = vrot.slane %v6272, 1
        %v6275 = vshll.u32 %v6267, 16
        %v6277 = vrot.slane %v6275, 2
        %v6278 = vor.u32 %v6274, %v6277
        %v6280 = vshrl.u32 %v6268, 16
        %v6282 = vrot.slane %v6280, 1
        %v6283 = vshll.u32 %v6268, 16
        %v6285 = vrot.slane %v6283, 2
        %v6286 = vor.u32 %v6282, %v6285
        %v6288 = vshrl.u32 %v6269, 16
        %v6290 = vrot.slane %v6288, 1
        %v6291 = vshll.u32 %v6269, 16
        %v6293 = vrot.slane %v6291, 2
        %v6294 = vor.u32 %v6290, %v6293
        %v6296 = vshrl.u32 %v6270, 16
        %v6298 = vrot.slane %v6296, 1
        %v6299 = vshll.u32 %v6270, 16
        %v6301 = vrot.slane %v6299, 2
        %v6302 = vor.u32 %v6298, %v6301
        %v6371 = vunpack.c.l.b16 %v6197
        %v6372 = vunpack.c.l.b16 %v6198
        %v6373 = vunpack.c.l.b16 %v6199
        %v6374 = vunpack.c.l.b16 %v6200
        %v6375 = vunpack.c.l.b16 %v6201
        %v6376 = vunpack.c.l.b16 %v6202
        %v6377 = vunpack.c.l.b16 %v6203
        %v6378 = vunpack.c.l.b16 %v6204
        %v6379 = vunpack.c.l.b16 %v6205
        %v6380 = vunpack.c.l.b16 %v6206
        %v6381 = vunpack.c.l.b16 %v6207
        %v6382 = vunpack.c.l.b16 %v6208
        %v6383 = vunpack.c.l.b16 %v6209
        %v6384 = vunpack.c.l.b16 %v6210
        %v6385 = vunpack.c.l.b16 %v6211
        %v6386 = vunpack.c.l.b16 %v6212
        %v6387 = vunpack.c.l.b16 %v6213
        %v6388 = vunpack.c.l.b16 %v6214
        %v6389 = vunpack.c.l.b16 %v6215
        %v6390 = vunpack.c.l.b16 %v6216
        %v6391 = vunpack.c.l.b16 %v6217
        %v6392 = vunpack.c.l.b16 %v6218
        %v6393 = vunpack.c.l.b16 %v6219
        %v6394 = vunpack.c.l.b16 %v6220
        %v6395 = vunpack.c.l.b16 %v6221
        %v6396 = vunpack.c.l.b16 %v6222
        %v6397 = vunpack.c.l.b16 %v6223
        %v6398 = vunpack.c.l.b16 %v6224
        %v6399 = vunpack.c.l.b16 %v6225
        %v6400 = vunpack.c.l.b16 %v6226
        %v6401 = vunpack.c.l.b16 %v6227
        %v6402 = vunpack.c.l.b16 %v6228
        %v6403 = vunpack.c.l.b16 %v6229
        %v6404 = vunpack.c.l.b16 %v6230
        %v6405 = vunpack.c.l.b16 %v6231
        %v6406 = vunpack.c.l.b16 %v6232
        %v6407 = vunpack.c.l.b16 %v6233
        %v6408 = vunpack.c.l.b16 %v6234
        %v6409 = vunpack.c.l.b16 %v6235
        %v6410 = vunpack.c.l.b16 %v6236
        %v6411 = vunpack.c.l.b16 %v6237
        %v6412 = vunpack.c.l.b16 %v6238
        %v6413 = vunpack.c.l.b16 %v6239
        %v6414 = vunpack.c.l.b16 %v6240
        %v6415 = vunpack.c.l.b16 %v6241
        %v6416 = vunpack.c.l.b16 %v6242
        %v6417 = vunpack.c.l.b16 %v6243
        %v6418 = vunpack.c.l.b16 %v6244
        %v6419 = vunpack.c.l.b16 %v6245
        %v6420 = vunpack.c.l.b16 %v6246
        %v6421 = vunpack.c.l.b16 %v6247
        %v6422 = vunpack.c.l.b16 %v6248
        %v6423 = vunpack.c.l.b16 %v6249
        %v6424 = vunpack.c.l.b16 %v6250
        %v6425 = vunpack.c.l.b16 %v6251
        %v6426 = vunpack.c.l.b16 %v6252
        %v6427 = vunpack.c.l.b16 %v6253
        %v6428 = vunpack.c.l.b16 %v6254
        %v6429 = vunpack.c.l.b16 %v6255
        %v6430 = vunpack.c.l.b16 %v6256
        %v6431 = vunpack.c.l.b16 %v6257
        %v6432 = vunpack.c.l.b16 %v6258
        %v6433 = vunpack.c.l.b16 %v6259
        %v6434 = vunpack.c.l.b16 %v6260
        %v6435 = vpack.c.b16 %v6372, %v6371
        %v6436 = vpack.c.b16 %v6374, %v6373
        %v6437 = vpack.c.b16 %v6376, %v6375
        %v6438 = vpack.c.b16 %v6378, %v6377
        %v6439 = vpack.c.b16 %v6380, %v6379
        %v6440 = vpack.c.b16 %v6382, %v6381
        %v6441 = vpack.c.b16 %v6384, %v6383
        %v6442 = vpack.c.b16 %v6386, %v6385
        %v6443 = vpack.c.b16 %v6388, %v6387
        %v6444 = vpack.c.b16 %v6390, %v6389
        %v6445 = vpack.c.b16 %v6392, %v6391
        %v6446 = vpack.c.b16 %v6394, %v6393
        %v6447 = vpack.c.b16 %v6396, %v6395
        %v6448 = vpack.c.b16 %v6398, %v6397
        %v6449 = vpack.c.b16 %v6400, %v6399
        %v6450 = vpack.c.b16 %v6402, %v6401
        %v6451 = vpack.c.b16 %v6404, %v6403
        %v6452 = vpack.c.b16 %v6406, %v6405
        %v6453 = vpack.c.b16 %v6408, %v6407
        %v6454 = vpack.c.b16 %v6410, %v6409
        %v6455 = vpack.c.b16 %v6412, %v6411
        %v6456 = vpack.c.b16 %v6414, %v6413
        %v6457 = vpack.c.b16 %v6416, %v6415
        %v6458 = vpack.c.b16 %v6418, %v6417
        %v6459 = vpack.c.b16 %v6420, %v6419
        %v6460 = vpack.c.b16 %v6422, %v6421
        %v6461 = vpack.c.b16 %v6424, %v6423
        %v6462 = vpack.c.b16 %v6426, %v6425
        %v6463 = vpack.c.b16 %v6428, %v6427
        %v6464 = vpack.c.b16 %v6430, %v6429
        %v6465 = vpack.c.b16 %v6432, %v6431
        %v6466 = vpack.c.b16 %v6434, %v6433
        %6499 = vmatpush.bf16.msra.mxu0 %v6442
        %6500 = vmatpush.bf16.msra.mxu0 %v6441
        %6501 = vmatpush.bf16.msra.mxu0 %v6440
        %6502 = vmatpush.bf16.msra.mxu0 %v6439
        %6503 = vmatpush.bf16.msra.mxu0 %v6438
        %6504 = vmatpush.bf16.msra.mxu0 %v6437
        %6505 = vmatpush.bf16.msra.mxu0 %v6436
        %6506 = vmatpush.bf16.msra.mxu0 %v6435
        %6507 = vmatmul.bf16.gmra.mxu0 %v6278
        %v6508 = vpop.f32.mrf.mxu0
        %v6509 = vadd.f32 0.0, %v6508
        %v6510 = vpop.f32.mrf.mxu0
        %6511 = vdwg.mxu0
        %6512 = vmatpush.bf16.msra.mxu0 %v6450
        %6513 = vmatpush.bf16.msra.mxu0 %v6449
        %6514 = vmatpush.bf16.msra.mxu0 %v6448
        %6515 = vmatpush.bf16.msra.mxu0 %v6447
        %6516 = vmatpush.bf16.msra.mxu0 %v6446
        %6517 = vmatpush.bf16.msra.mxu0 %v6445
        %6518 = vmatpush.bf16.msra.mxu0 %v6444
        %6519 = vmatpush.bf16.msra.mxu0 %v6443
        %6520 = vmatmul.bf16.gmra.mxu0 %v6286
        %v6521 = vpop.f32.mrf.mxu0
        %v6522 = vadd.f32 %v6509, %v6521
        %v6523 = vpop.f32.mrf.mxu0
        %6524 = vdwg.mxu0
        %6525 = vmatpush.bf16.msra.mxu0 %v6458
        %6526 = vmatpush.bf16.msra.mxu0 %v6457
        %6527 = vmatpush.bf16.msra.mxu0 %v6456
        %6528 = vmatpush.bf16.msra.mxu0 %v6455
        %6529 = vmatpush.bf16.msra.mxu0 %v6454
        %6530 = vmatpush.bf16.msra.mxu0 %v6453
        %6531 = vmatpush.bf16.msra.mxu0 %v6452
        %6532 = vmatpush.bf16.msra.mxu0 %v6451
        %6533 = vmatmul.bf16.gmra.mxu0 %v6294
        %v6534 = vpop.f32.mrf.mxu0
        %v6535 = vadd.f32 %v6522, %v6534
        %v6536 = vpop.f32.mrf.mxu0
        %6537 = vdwg.mxu0
        %6538 = vmatpush.bf16.msra.mxu0 %v6466
        %6539 = vmatpush.bf16.msra.mxu0 %v6465
        %6540 = vmatpush.bf16.msra.mxu0 %v6464
        %6541 = vmatpush.bf16.msra.mxu0 %v6463
        %6542 = vmatpush.bf16.msra.mxu0 %v6462
        %6543 = vmatpush.bf16.msra.mxu0 %v6461
        %6544 = vmatpush.bf16.msra.mxu0 %v6460
        %6545 = vmatpush.bf16.msra.mxu0 %v6459
        %6546 = vmatmul.bf16.gmra.mxu0 %v6302
        %v6547 = vpop.f32.mrf.mxu0
        %v6548 = vadd.f32 %v6535, %v6547
        %v6549 = vpop.f32.mrf.mxu0
        %6550 = vdwg.mxu0
        %v6551 = vsel %vm1515, %v6548, 0.0
        %v6552 = vadd.f32 %v6194, %v6551
        %s6553 = scalar_lea.vmem %s386, 4 [#allocation12]
        %6554 = vst [vmem:[%s6553] sm:$0xf] %v6552
        %v6555 = vsel %vm3503, %v6552, 0.0
        %v6556 = vrot.slane %v6555, 4
        %v6557 = vadd.f32 %v6555, %v6556
        %v6558 = vrot.slane %v6557, 2
        %v6559 = vadd.f32 %v6557, %v6558
        %v6560 = vrot.slane %v6559, 1
        %v6561 = vadd.f32 %v6559, %v6560
        %v6562 = vadd.f32 %v3511, %v6561
        %v6563 = vmul.f32 %v6552, %v6552
        %v6564 = vsel %vm3503, %v6563, 0.0
        %v6565 = vrot.slane %v6564, 4
        %v6566 = vadd.f32 %v6564, %v6565
        %v6567 = vrot.slane %v6566, 2
        %v6568 = vadd.f32 %v6566, %v6567
        %v6569 = vrot.slane %v6568, 1
        %v6570 = vadd.f32 %v6568, %v6569
        %v6571 = vadd.f32 %v3520, %v6570
        %v6572 = vrcp.pop 8.0
        %v6573 = vmul.f32 8.0, %v6572
        %v6574 = vsub.f32 1.0, %v6573
        %v6575 = vmul.f32 %v6572, %v6574
        %v6576 = vadd.f32 %v6572, %v6575
        %vm6577 = vweird.f32 %v6572
        %v6578 = vsel %vm6577, %v6572, %v6576
        %v6579 = vmul.f32 %v6562, %v6578
        %v6580 = vmul.f32 %v6571, %v6578
        %v6581 = vmul.f32 %v6579, %v6579
        %v6582 = vsub.f32 %v6580, %v6581
        %v6583 = vmax.f32 %v6582, 0.0
        %v6584 = vld [vmem:[%s336] sm:$0x1]
        %v6585 = vadd.f32 %v6583, 1e-05
        %v6586 = vrsqrt.pop %v6585
        %v6587 = vmul.f32 %v6586, %v6585
        %v6588 = vmul.f32 %v6587, %v6586
        %v6589 = vmul.f32 0.5, %v6588
        %v6590 = vsub.f32 1.5, %v6589
        %v6591 = vmul.f32 %v6586, %v6590
        %vm6592 = vweird.f32 %v6585
        %vm6593 = vweird.f32 %v6586
        %vm6594 = vmor %vm6592, %vm6593
        %v6595 = vsel %vm6594, %v6586, %v6591
        %v6596 = vmul.f32 %v6584, %v6595
        %v6597 = vld [vmem:[%s345] sm:$0x1]
        %v6598 = vmul.f32 %v6579, %v6596
        %v6599 = vsub.f32 %v6597, %v6598
        %v6600 = vld [vmem:[%s386] sm:$0xf]
        %v6601 = vld [vmem:[%s386 + $0x4] sm:$0xf]
        %v6603 = vperm.slane %v6596, 0
        %v6605 = vmul.f32 %v6600, %v6603
        %v6606 = vmul.f32 %v6601, %v6603
        %v6608 = vperm.slane %v6599, 0
        %v6610 = vadd.f32 %v6605, %v6608
        %v6611 = vadd.f32 %v6606, %v6608
        %v6612 = vmax.f32 %v6610, 0.0
        %v6613 = vmax.f32 %v6611, 0.0
        %6614 = vst [vmem:[%s386] sm:$0xf] %v6612
        %6615 = vst [vmem:[%s386 + $0x4] sm:$0xf] %v6613
        %s6616 = sand.u32 %s181, 1
        %s6617 = scalar_lea.sflag [#allocation5], %s6616
        %s6618 = sand.u32 %s181, 1
        %s6619 = smul.addr %s6618, 8
        %s6620 = scalar_lea.vmem [#allocation12], %s6619
        // Predicated region
        $region65: #{tpu_custom_call.1} parent=43 // pred_check
          %p6621 = pneg %p191
        $region66: #{tpu_custom_call.1} parent=43 // pred_check_branch
          %6623 = sbr.rel (%p6621) target = $region68
        $region67: #{tpu_custom_call.1} parent=43 // pred_region
          %6625 = vsyncadd %s6617, 0
          %s6626 = smul.addr %s27, 4
          %s6627 = scalar_lea.hbm %s6, %s6626
          %s6628 = sshll.u32 %s6620, 4
          %s6629 = int_to_ptr.vmem [resolvable:$true] %s6628
          %s6630 = sshll.u32 %s6627, 4
          %s6631 = int_to_ptr.hbm [resolvable:$true] %s6630
          %6636 = dma.vmem_to_hbm [thread:$0]  %s6629, 128, %s6631, %s6617, 64, 256, 4
        $region68: #{tpu_custom_call.1} parent=43 // pred_fallthru
          _
      $region44: #{tpu_custom_call.1} parent=5 // pred_fallthru
        _
      %p6637 = scmp.le.s32.totalorder 2, %s22
      // Predicated region
      $region69: #{tpu_custom_call.1} parent=5 // pred_check
        %p6638 = pneg %p6637
      $region70: #{tpu_custom_call.1} parent=5 // pred_check_branch
        %6640 = sbr.rel (%p6638) target = $region72
      $region71: #{tpu_custom_call.1} parent=5 // pred_region
        %s6641 = ssub.s32 %s22, 2
        // Predicated region
        $region73: #{tpu_custom_call.1} parent=71 // pred_check
          %p6642 = pneg %p197
        $region74: #{tpu_custom_call.1} parent=71 // pred_check_branch
          %6644 = sbr.rel (%p6642) target = $region76
        $region75: #{tpu_custom_call.1} parent=71 // pred_region
          %s6645 = sand.u32 %s182, 1
          %s6646 = scalar_lea.sflag [#allocation5], %s6645
          %s6647 = sand.u32 %s182, 1
          %s6648 = smul.addr %s6647, 8
          %s6649 = scalar_lea.vmem [#allocation12], %s6648
          %6651 = dma.done %s6646, 128
        $region76: #{tpu_custom_call.1} parent=71 // pred_fallthru
          _
      $region72: #{tpu_custom_call.1} parent=5 // pred_fallthru
        _
    $region6: #{tpu_custom_call.1} parent=1 // loop_footer
      %s26 = sadd.s32 1, %s22
    $region7: #{tpu_custom_call.1} parent=1 // loop_footer_branch
      %21 = sbr.rel target = $region3
    $region8: #{tpu_custom_call.1} parent=1 // loop_exit
      _
    %6652 = vsyncpa [#allocation4], 1
    %s6653 = scalar_lea.sflag [#allocation4], 1
    %6654 = vsyncpa %s6653, 1
    %6655 = vsyncpa [#allocation7], 1
    %s6656 = scalar_lea.sflag [#allocation7], 1
    %6657 = vsyncpa %s6656, 1
    %6658 = vsyncpa [#allocation10], 1
    %s6659 = scalar_lea.sflag [#allocation10], 1
    %6660 = vsyncpa %s6659, 1
    %6661 = vsyncpa [#allocation5], 1
    %s6662 = scalar_lea.sflag [#allocation5], 1
    %6663 = vsyncpa %s6662, 1

</llo_original>
